<compile_context>
chip_gen: v7x
topology: tpu7x:2x2x1
jax: 0.10.0
libtpu: 0.0.40
codegen_flags: <defaults>
</compile_context>

<pallas_src>
import jax
import jax.numpy as jnp
from jax.experimental import pallas as pl
from jax.experimental.pallas import tpu as pltpu

# ----------------------------- configuration --------------------------------
B = 2                      # batch
C = 3                      # image channels
IMG = 16                   # image height / width
P = 8                      # patch size
NPATCH = (IMG // P) ** 2   # 4 patches
S = NPATCH + 1             # 5 real tokens (CLS + patches)
S_PAD = 8                  # padded to one sublane tile
CPP = C * P * P            # 192
H = 32                     # hidden size
NH = 4                     # attention heads
HD = H // NH               # head dim = 8
FF = 64                    # FFN filter size
NL = 2                     # encoder layers
NCLS = 10                  # num_classes
EPS = 1e-5                 # layer_norm_epsilon
SCALE = 1.0 / float(HD) ** 0.5
NEG = -1e30                # key-padding mask bias

VEC32_ROWS = 8 * (NL + 2)  # 32 rows: [cls/pos block][per-layer LN blocks][final LN block]
VWIDE_ROWS = 8             # bqkv (NL rows) + b1 (NL rows) + b_cls (1 row) + padding


# ------------------------------ kernel helpers -------------------------------
def _layer_norm(h, g, b):
    mu = jnp.mean(h, axis=-1, keepdims=True)
    var = jnp.mean(jnp.square(h - mu), axis=-1, keepdims=True)
    return (h - mu) * jax.lax.rsqrt(var + EPS) * g + b


# ------------------------------ fused ViT kernel ------------------------------
def _vit_kernel(lab_ref, patch_ref, we_ref, wqkv_ref, wo_ref, w1_ref, w2_ref,
                wcls_ref, vec32_ref, vwide_ref, out_ref):
    f32 = jnp.float32
    bidx = pl.program_id(0)

    # ---- patch embedding (conv-as-matmul) + CLS / learned-pos / conv-bias slab ----
    # patch_ref rows: [0]=zeros (CLS slot), [1:5]=patches, [5:8]=pad zeros.  The vec32
    # cls/pos block adds cls_token+pos[0] to row 0 and pos[i]+conv_bias to rows 1..4.
    x = jnp.dot(patch_ref[...], we_ref[...], preferred_element_type=f32)
    x = x + vec32_ref[0:S_PAD, :]                                   # (S_PAD, H)

    # key-padding bias (columns >= S masked), shared by every softmax
    kcol = jax.lax.broadcasted_iota(jnp.int32, (1, S_PAD), 1)
    key_bias = jnp.where(kcol < S, 0.0, NEG).astype(f32)            # (1, S_PAD)

    # ---- pre-LN transformer encoder layers (norm_first=True, dropout=0) -----------
    for l in range(NL):
        lnb = vec32_ref[8 * (1 + l):8 * (2 + l), :]                 # (8, H) layer slab
        g1, b1n = lnb[0:1, :], lnb[1:2, :]
        g2, b2n = lnb[2:3, :], lnb[3:4, :]
        bo, b2f = lnb[4:5, :], lnb[5:6, :]

        # attention: fused QKV matmul (1/sqrt(HD) pre-folded into W_q / b_q)
        n1 = _layer_norm(x, g1, b1n)
        qkv = (jnp.dot(n1, wqkv_ref[l], preferred_element_type=f32)
               + vwide_ref[l:l + 1, :])                              # (S_PAD, 3H)
        kT = qkv[:, H:2 * H].T                                       # ONE K transpose / layer

        ctx = []
        for h in range(NH):                                          # static head loop
            sl = slice(h * HD, (h + 1) * HD)
            s = jnp.dot(qkv[:, sl], kT[sl, :],
                        preferred_element_type=f32) + key_bias       # (S_PAD, S_PAD)
            s = s - jnp.max(s, axis=-1, keepdims=True)                # fp32 softmax
            p = jnp.exp(s)
            p = p * pl.reciprocal(jnp.sum(p, axis=-1, keepdims=True), approx=True)
            ctx.append(jnp.dot(p, qkv[:, 2 * H + h * HD:2 * H + (h + 1) * HD],
                               preferred_element_type=f32))           # (S_PAD, HD)
        ctx = jnp.concatenate(ctx, axis=-1)                            # lane concat (S_PAD, H)
        x = x + jnp.dot(ctx, wo_ref[l], preferred_element_type=f32) + bo

        # GELU FFN
        n2 = _layer_norm(x, g2, b2n)
        f = (jnp.dot(n2, w1_ref[l], preferred_element_type=f32)
             + vwide_ref[NL + l:NL + l + 1, 0:FF])
        # TODO(synk): PyTorch nn.GELU default is the exact erf form; tanh approximation
        #             is used because erf lowering is not guaranteed in Mosaic.
        f = jax.nn.gelu(f, approximate=True)
        x = x + jnp.dot(f, w2_ref[l], preferred_element_type=f32) + b2f

    # ---- final LN on the CLS row + classifier head ---------------------------------
    fin = vec32_ref[8 * (NL + 1):8 * (NL + 2), :]
    cls_n = _layer_norm(x[0:1, :], fin[0:1, :], fin[1:2, :])
    logits = (jnp.dot(cls_n, wcls_ref[...], preferred_element_type=f32)
              + vwide_ref[2 * NL:2 * NL + 1, 0:NCLS])                # (1, NCLS)

    # ---- per-sample CrossEntropy NLL packed into the same output row ---------------
    z = logits - jnp.max(logits, axis=-1, keepdims=True)
    lse = jnp.log(jnp.sum(jnp.exp(z), axis=-1, keepdims=True))
    col = jax.lax.broadcasted_iota(jnp.int32, (1, NCLS), 1)
    z_lab = jnp.sum(jnp.where(col == lab_ref[bidx], z, 0.0), axis=-1, keepdims=True)
    out_ref[0] = jnp.concatenate([logits, lse - z_lab], axis=-1)      # (1, NCLS + 1)


# ------------------------------ pallas wrapper --------------------------------
_fused_vit = pl.pallas_call(
    _vit_kernel,
    out_shape=jax.ShapeDtypeStruct((B, 1, NCLS + 1), jnp.float32),
    grid_spec=pltpu.PrefetchScalarGridSpec(
        num_scalar_prefetch=1,                                        # labels -> SMEM
        grid=(B,),
        in_specs=[
            pl.BlockSpec((S_PAD, CPP), lambda b, lab: (b, 0)),        # per-image patches
            pl.BlockSpec((CPP, H), lambda b, lab: (0, 0)),            # w_embed   (resident)
            pl.BlockSpec((NL, H, 3 * H), lambda b, lab: (0, 0, 0)),   # wqkv      (resident)
            pl.BlockSpec((NL, H, H), lambda b, lab: (0, 0, 0)),       # wo        (resident)
            pl.BlockSpec((NL, H, FF), lambda b, lab: (0, 0, 0)),      # w1        (resident)
            pl.BlockSpec((NL, FF, H), lambda b, lab: (0, 0, 0)),      # w2        (resident)
            pl.BlockSpec((H, NCLS), lambda b, lab: (0, 0)),           # w_cls     (resident)
            pl.BlockSpec((VEC32_ROWS, H), lambda b, lab: (0, 0)),     # packed narrow vectors
            pl.BlockSpec((VWIDE_ROWS, 3 * H), lambda b, lab: (0, 0)), # packed wide vectors
        ],
        out_specs=pl.BlockSpec((1, 1, NCLS + 1), lambda b, lab: (b, 0, 0)),
    ),
    compiler_params=pltpu.CompilerParams(dimension_semantics=("parallel",)),
)


@jax.jit
def vit_forward_loss(images, labels, params):
    # NCHW -> per-image (S_PAD, C*P*P) patch rows; row 0 (CLS slot) and the 3 pad rows
    # are zero.  This stays as jit-fused XLA glue feeding the kernel directly.
    x = images.reshape(B, C, IMG // P, P, IMG // P, P)
    x = x.transpose(0, 2, 4, 1, 3, 5).reshape(B, NPATCH, CPP)
    patches = jnp.zeros((B, S_PAD, CPP), jnp.float32).at[:, 1:1 + NPATCH, :].set(x)
    patches = patches.reshape(B * S_PAD, CPP)

    out = _fused_vit(labels.astype(jnp.int32), patches,
                     params['w_embed'], params['wqkv'], params['wo'],
                     params['w1'], params['w2'], params['w_cls'],
                     params['vec32'], params['vwide'])
    out = out.reshape(B, NCLS + 1)
    logits = out[:, :NCLS]
    loss = jnp.mean(out[:, NCLS])                 # CrossEntropyLoss(reduction='mean')
    # TODO(synk): eval AccuracyMetric bookkeeping is host-side state; not a kernel op.
    return loss, logits


# ---------------------------- deterministic params ----------------------------
def init_params(key):
    ks = jax.random.split(key, 4 + NL)

    def nrm(k, shape):
        return (0.02 * jax.random.normal(k, shape)).astype(jnp.float32)

    wqkv, wo, w1, w2 = [], [], [], []
    for l in range(NL):
        lk = jax.random.split(ks[4 + l], 6)
        wq, wk, wv = nrm(lk[0], (H, H)), nrm(lk[1], (H, H)), nrm(lk[2], (H, H))
        # fold 1/sqrt(head_dim) softmax scale into the Q projection (and its bias below)
        wqkv.append(jnp.concatenate([wq * SCALE, wk, wv], axis=1))    # (H, 3H)
        wo.append(nrm(lk[3], (H, H)))
        w1.append(nrm(lk[4], (H, FF)))
        w2.append(nrm(lk[5], (FF, H)))

    w_embed = nrm(ks[0], (CPP, H))     # conv patch-embed weight flattened + transposed
    b_embed = jnp.zeros((H,), jnp.float32)
    cls_tok = nrm(ks[1], (1, H))
    pos_emb = nrm(ks[2], (S, H))

    # ---- packed (VEC32_ROWS, H) slab of all width-H vectors --------------------
    cls_pos = jnp.zeros((8, H), jnp.float32)
    cls_pos = cls_pos.at[0, :].set(cls_tok[0] + pos_emb[0])                 # CLS row
    cls_pos = cls_pos.at[1:1 + NPATCH, :].set(pos_emb[1:] + b_embed[None])  # patch rows
    blocks = [cls_pos]
    for _ in range(NL):
        blk = jnp.zeros((8, H), jnp.float32)
        blk = blk.at[0, :].set(1.0)    # ln1 gamma (row1 = ln1 beta)
        blk = blk.at[2, :].set(1.0)    # ln2 gamma (row3 = ln2 beta)
        # row4 = attention out-proj bias, row5 = FFN out bias (zeros), rows 6-7 pad
        blocks.append(blk)
    fin = jnp.zeros((8, H), jnp.float32).at[0, :].set(1.0)   # final LN gamma / beta
    blocks.append(fin)
    vec32 = jnp.concatenate(blocks, axis=0)                  # (8*(NL+2), H)

    # ---- packed (VWIDE_ROWS, 3H) slab: bqkv per layer, b1 per layer, b_cls -------
    # rows 0..NL-1  : fused QKV bias (Q slice pre-scaled by SCALE)  -> zeros here
    # rows NL..2NL-1: FFN hidden bias (first FF lanes)              -> zeros here
    # row 2NL       : classifier bias (first NCLS lanes)            -> zeros here
    vwide = jnp.zeros((VWIDE_ROWS, 3 * H), jnp.float32)

    return {
        'w_embed': w_embed,
        'wqkv': jnp.stack(wqkv),       # (NL, H, 3H)
        'wo': jnp.stack(wo),           # (NL, H, H)
        'w1': jnp.stack(w1),           # (NL, H, FF)
        'w2': jnp.stack(w2),           # (NL, FF, H)
        'w_cls': nrm(ks[3], (H, NCLS)),
        'vec32': vec32,
        'vwide': vwide,
    }


# ----------------------------------- main --------------------------------------
if __name__ == "__main__":
    key = jax.random.PRNGKey(0)
    k_img, k_lab = jax.random.split(key, 2)
    images = jax.random.normal(k_img, (B, C, IMG, IMG), dtype=jnp.float32)
    labels = jax.random.randint(k_lab, (B,), 0, NCLS)
    params = init_params(jax.random.PRNGKey(42))

    loss, logits = vit_forward_loss(images, labels, params)
    jax.block_until_ready((loss, logits))
    assert logits.shape == (B, NCLS) and loss.shape == ()
    print("KERNEL_OK")
</pallas_src>

<mosaic_0001>
module attributes {stable_mosaic.version = 11 : i64} {
  func.func @_vit_kernel(%arg0: i32, %arg1: memref<2xi32, #tpu.memory_space<smem>>, %arg2: memref<8x192xf32, #tpu.memory_space<vmem>>, %arg3: memref<192x32xf32, #tpu.memory_space<vmem>>, %arg4: memref<2x32x96xf32, #tpu.memory_space<vmem>>, %arg5: memref<2x32x32xf32, #tpu.memory_space<vmem>>, %arg6: memref<2x32x64xf32, #tpu.memory_space<vmem>>, %arg7: memref<2x64x32xf32, #tpu.memory_space<vmem>>, %arg8: memref<32x10xf32, #tpu.memory_space<vmem>>, %arg9: memref<32x32xf32, #tpu.memory_space<vmem>>, %arg10: memref<8x96xf32, #tpu.memory_space<vmem>>, %arg11: memref<1x1x11xf32, #tpu.memory_space<vmem>>) attributes {dimension_semantics = [#tpu.dimension_semantics<parallel>], iteration_bounds = array<i64: 2>, scalar_prefetch = 1 : i64, scratch_operands = 0 : i64, tpu.core_type = #tpu.core_type<tc>, window_params = [{transform_indices = @transform_0, window_bounds = array<i64: 8, 192>}, {pipeline_mode = #tpu.pipeline_mode<synchronous>, transform_indices = @transform_1, window_bounds = array<i64: 192, 32>}, {pipeline_mode = #tpu.pipeline_mode<synchronous>, transform_indices = @transform_2, window_bounds = array<i64: 2, 32, 96>}, {pipeline_mode = #tpu.pipeline_mode<synchronous>, transform_indices = @transform_3, window_bounds = array<i64: 2, 32, 32>}, {pipeline_mode = #tpu.pipeline_mode<synchronous>, transform_indices = @transform_4, window_bounds = array<i64: 2, 32, 64>}, {pipeline_mode = #tpu.pipeline_mode<synchronous>, transform_indices = @transform_5, window_bounds = array<i64: 2, 64, 32>}, {pipeline_mode = #tpu.pipeline_mode<synchronous>, transform_indices = @transform_6, window_bounds = array<i64: 32, 10>}, {pipeline_mode = #tpu.pipeline_mode<synchronous>, transform_indices = @transform_7, window_bounds = array<i64: 32, 32>}, {pipeline_mode = #tpu.pipeline_mode<synchronous>, transform_indices = @transform_8, window_bounds = array<i64: 8, 96>}, {transform_indices = @transform_9, window_bounds = array<i64: 1, 1, 11>}]} {
    %c0 = arith.constant 0 : index
    %c0_0 = arith.constant 0 : index
    %0 = vector.load %arg2[%c0, %c0_0] : memref<8x192xf32, #tpu.memory_space<vmem>>, vector<8x192xf32>
    %c0_1 = arith.constant 0 : index
    %c0_2 = arith.constant 0 : index
    %1 = vector.load %arg3[%c0_1, %c0_2] : memref<192x32xf32, #tpu.memory_space<vmem>>, vector<192x32xf32>
    %cst = arith.constant dense<0.000000e+00> : vector<8x32xf32>
    %2 = tpu.matmul %0, %1, %cst {dimension_numbers = #tpu.dot_dimension_numbers<[1], [0], [0], [1], [0, 0, 1, 1], [], []>} : vector<8x192xf32>, vector<192x32xf32>, vector<8x32xf32> -> vector<8x32xf32>
    %c0_3 = arith.constant 0 : index
    %c0_4 = arith.constant 0 : index
    %3 = vector.load %arg9[%c0_3, %c0_4] : memref<32x32xf32, #tpu.memory_space<vmem>>, vector<8x32xf32>
    %4 = arith.addf %2, %3 : vector<8x32xf32>
    %5 = tpu.iota {dimensions = array<i32: 1>} : vector<1x8xi32>
    %c5_i32 = arith.constant 5 : i32
    %6 = vector.broadcast %c5_i32 : i32 to vector<1x8xi32>
    %7 = arith.cmpi slt, %5, %6 : vector<1x8xi32>
    %cst_5 = arith.constant 0.000000e+00 : f32
    %cst_6 = arith.constant -1.000000e+30 : f32
    %8 = vector.broadcast %cst_5 : f32 to vector<1x8xf32>
    %9 = vector.broadcast %cst_6 : f32 to vector<1x8xf32>
    %10 = arith.select %7, %8, %9 : vector<1x8xi1>, vector<1x8xf32>
    %c8 = arith.constant 8 : index
    %c0_7 = arith.constant 0 : index
    %11 = vector.load %arg9[%c8, %c0_7] : memref<32x32xf32, #tpu.memory_space<vmem>>, vector<8x32xf32>
    %12 = vector.extract_strided_slice %11 {offsets = [0, 0], sizes = [1, 32], strides = [1, 1]} : vector<8x32xf32> to vector<1x32xf32>
    %13 = vector.extract_strided_slice %11 {offsets = [1, 0], sizes = [1, 32], strides = [1, 1]} : vector<8x32xf32> to vector<1x32xf32>
    %14 = vector.extract_strided_slice %11 {offsets = [2, 0], sizes = [1, 32], strides = [1, 1]} : vector<8x32xf32> to vector<1x32xf32>
    %15 = vector.extract_strided_slice %11 {offsets = [3, 0], sizes = [1, 32], strides = [1, 1]} : vector<8x32xf32> to vector<1x32xf32>
    %16 = vector.extract_strided_slice %11 {offsets = [4, 0], sizes = [1, 32], strides = [1, 1]} : vector<8x32xf32> to vector<1x32xf32>
    %17 = vector.extract_strided_slice %11 {offsets = [5, 0], sizes = [1, 32], strides = [1, 1]} : vector<8x32xf32> to vector<1x32xf32>
    %cst_8 = arith.constant dense<0.000000e+00> : vector<8xf32>
    %18 = vector.multi_reduction <add>, %4, %cst_8 [1] : vector<8x32xf32> to vector<8xf32>
    %19 = vector.shape_cast %18 : vector<8xf32> to vector<8x1xf32>
    %cst_9 = arith.constant 3.200000e+01 : f32
    %20 = vector.broadcast %cst_9 : f32 to vector<8x1xf32>
    %21 = arith.divf %19, %20 : vector<8x1xf32>
    %22 = vector.broadcast %21 : vector<8x1xf32> to vector<8x32xf32>
    %23 = arith.subf %4, %22 : vector<8x32xf32>
    %24 = arith.mulf %23, %23 : vector<8x32xf32>
    %cst_10 = arith.constant dense<0.000000e+00> : vector<8xf32>
    %25 = vector.multi_reduction <add>, %24, %cst_10 [1] : vector<8x32xf32> to vector<8xf32>
    %26 = vector.shape_cast %25 : vector<8xf32> to vector<8x1xf32>
    %cst_11 = arith.constant 3.200000e+01 : f32
    %27 = vector.broadcast %cst_11 : f32 to vector<8x1xf32>
    %28 = arith.divf %26, %27 : vector<8x1xf32>
    %29 = vector.broadcast %21 : vector<8x1xf32> to vector<8x32xf32>
    %30 = arith.subf %4, %29 : vector<8x32xf32>
    %cst_12 = arith.constant 9.99999974E-6 : f32
    %31 = vector.broadcast %cst_12 : f32 to vector<8x1xf32>
    %32 = arith.addf %28, %31 : vector<8x1xf32>
    %33 = math.rsqrt %32 : vector<8x1xf32>
    %34 = vector.broadcast %33 : vector<8x1xf32> to vector<8x32xf32>
    %35 = arith.mulf %30, %34 : vector<8x32xf32>
    %36 = vector.broadcast %12 : vector<1x32xf32> to vector<8x32xf32>
    %37 = arith.mulf %35, %36 : vector<8x32xf32>
    %38 = vector.broadcast %13 : vector<1x32xf32> to vector<8x32xf32>
    %39 = arith.addf %37, %38 : vector<8x32xf32>
    %c0_13 = arith.constant 0 : index
    %c0_14 = arith.constant 0 : index
    %c0_15 = arith.constant 0 : index
    %40 = vector.load %arg4[%c0_13, %c0_14, %c0_15] : memref<2x32x96xf32, #tpu.memory_space<vmem>>, vector<1x32x96xf32>
    %41 = vector.shape_cast %40 : vector<1x32x96xf32> to vector<32x96xf32>
    %cst_16 = arith.constant dense<0.000000e+00> : vector<8x96xf32>
    %42 = tpu.matmul %39, %41, %cst_16 {dimension_numbers = #tpu.dot_dimension_numbers<[1], [0], [0], [1], [0, 0, 1, 1], [], []>} : vector<8x32xf32>, vector<32x96xf32>, vector<8x96xf32> -> vector<8x96xf32>
    %c0_17 = arith.constant 0 : index
    %c0_18 = arith.constant 0 : index
    %43 = vector.load %arg10[%c0_17, %c0_18] : memref<8x96xf32, #tpu.memory_space<vmem>>, vector<1x96xf32>
    %44 = vector.broadcast %43 : vector<1x96xf32> to vector<8x96xf32>
    %45 = arith.addf %42, %44 : vector<8x96xf32>
    %46 = vector.extract_strided_slice %45 {offsets = [0, 32], sizes = [8, 32], strides = [1, 1]} : vector<8x96xf32> to vector<8x32xf32>
    %47 = tpu.transpose %46, [1, 0] : vector<8x32xf32> -> vector<32x8xf32>
    %48 = vector.extract_strided_slice %45 {offsets = [0, 0], sizes = [8, 8], strides = [1, 1]} : vector<8x96xf32> to vector<8x8xf32>
    %49 = vector.extract_strided_slice %47 {offsets = [0, 0], sizes = [8, 8], strides = [1, 1]} : vector<32x8xf32> to vector<8x8xf32>
    %cst_19 = arith.constant dense<0.000000e+00> : vector<8x8xf32>
    %50 = tpu.matmul %48, %49, %cst_19 {dimension_numbers = #tpu.dot_dimension_numbers<[1], [0], [0], [1], [0, 0, 1, 1], [], []>} : vector<8x8xf32>, vector<8x8xf32>, vector<8x8xf32> -> vector<8x8xf32>
    %51 = vector.broadcast %10 : vector<1x8xf32> to vector<8x8xf32>
    %52 = arith.addf %50, %51 : vector<8x8xf32>
    %cst_20 = arith.constant dense<0xFF800000> : vector<8xf32>
    %53 = vector.multi_reduction <maximumf>, %52, %cst_20 [1] : vector<8x8xf32> to vector<8xf32>
    %54 = vector.shape_cast %53 : vector<8xf32> to vector<8x1xf32>
    %55 = vector.broadcast %54 : vector<8x1xf32> to vector<8x8xf32>
    %56 = arith.subf %52, %55 : vector<8x8xf32>
    %57 = math.exp %56 : vector<8x8xf32>
    %cst_21 = arith.constant dense<0.000000e+00> : vector<8xf32>
    %58 = vector.multi_reduction <add>, %57, %cst_21 [1] : vector<8x8xf32> to vector<8xf32>
    %59 = vector.shape_cast %58 : vector<8xf32> to vector<8x1xf32>
    %60 = tpu.reciprocal %59 {approx = true} : vector<8x1xf32> -> vector<8x1xf32>
    %61 = vector.broadcast %60 : vector<8x1xf32> to vector<8x8xf32>
    %62 = arith.mulf %57, %61 : vector<8x8xf32>
    %63 = vector.extract_strided_slice %45 {offsets = [0, 64], sizes = [8, 8], strides = [1, 1]} : vector<8x96xf32> to vector<8x8xf32>
    %cst_22 = arith.constant dense<0.000000e+00> : vector<8x8xf32>
    %64 = tpu.matmul %62, %63, %cst_22 {dimension_numbers = #tpu.dot_dimension_numbers<[1], [0], [0], [1], [0, 0, 1, 1], [], []>} : vector<8x8xf32>, vector<8x8xf32>, vector<8x8xf32> -> vector<8x8xf32>
    %65 = vector.extract_strided_slice %45 {offsets = [0, 8], sizes = [8, 8], strides = [1, 1]} : vector<8x96xf32> to vector<8x8xf32>
    %66 = vector.extract_strided_slice %47 {offsets = [8, 0], sizes = [8, 8], strides = [1, 1]} : vector<32x8xf32> to vector<8x8xf32>
    %cst_23 = arith.constant dense<0.000000e+00> : vector<8x8xf32>
    %67 = tpu.matmul %65, %66, %cst_23 {dimension_numbers = #tpu.dot_dimension_numbers<[1], [0], [0], [1], [0, 0, 1, 1], [], []>} : vector<8x8xf32>, vector<8x8xf32>, vector<8x8xf32> -> vector<8x8xf32>
    %68 = vector.broadcast %10 : vector<1x8xf32> to vector<8x8xf32>
    %69 = arith.addf %67, %68 : vector<8x8xf32>
    %cst_24 = arith.constant dense<0xFF800000> : vector<8xf32>
    %70 = vector.multi_reduction <maximumf>, %69, %cst_24 [1] : vector<8x8xf32> to vector<8xf32>
    %71 = vector.shape_cast %70 : vector<8xf32> to vector<8x1xf32>
    %72 = vector.broadcast %71 : vector<8x1xf32> to vector<8x8xf32>
    %73 = arith.subf %69, %72 : vector<8x8xf32>
    %74 = math.exp %73 : vector<8x8xf32>
    %cst_25 = arith.constant dense<0.000000e+00> : vector<8xf32>
    %75 = vector.multi_reduction <add>, %74, %cst_25 [1] : vector<8x8xf32> to vector<8xf32>
    %76 = vector.shape_cast %75 : vector<8xf32> to vector<8x1xf32>
    %77 = tpu.reciprocal %76 {approx = true} : vector<8x1xf32> -> vector<8x1xf32>
    %78 = vector.broadcast %77 : vector<8x1xf32> to vector<8x8xf32>
    %79 = arith.mulf %74, %78 : vector<8x8xf32>
    %80 = vector.extract_strided_slice %45 {offsets = [0, 72], sizes = [8, 8], strides = [1, 1]} : vector<8x96xf32> to vector<8x8xf32>
    %cst_26 = arith.constant dense<0.000000e+00> : vector<8x8xf32>
    %81 = tpu.matmul %79, %80, %cst_26 {dimension_numbers = #tpu.dot_dimension_numbers<[1], [0], [0], [1], [0, 0, 1, 1], [], []>} : vector<8x8xf32>, vector<8x8xf32>, vector<8x8xf32> -> vector<8x8xf32>
    %82 = vector.extract_strided_slice %45 {offsets = [0, 16], sizes = [8, 8], strides = [1, 1]} : vector<8x96xf32> to vector<8x8xf32>
    %83 = vector.extract_strided_slice %47 {offsets = [16, 0], sizes = [8, 8], strides = [1, 1]} : vector<32x8xf32> to vector<8x8xf32>
    %cst_27 = arith.constant dense<0.000000e+00> : vector<8x8xf32>
    %84 = tpu.matmul %82, %83, %cst_27 {dimension_numbers = #tpu.dot_dimension_numbers<[1], [0], [0], [1], [0, 0, 1, 1], [], []>} : vector<8x8xf32>, vector<8x8xf32>, vector<8x8xf32> -> vector<8x8xf32>
    %85 = vector.broadcast %10 : vector<1x8xf32> to vector<8x8xf32>
    %86 = arith.addf %84, %85 : vector<8x8xf32>
    %cst_28 = arith.constant dense<0xFF800000> : vector<8xf32>
    %87 = vector.multi_reduction <maximumf>, %86, %cst_28 [1] : vector<8x8xf32> to vector<8xf32>
    %88 = vector.shape_cast %87 : vector<8xf32> to vector<8x1xf32>
    %89 = vector.broadcast %88 : vector<8x1xf32> to vector<8x8xf32>
    %90 = arith.subf %86, %89 : vector<8x8xf32>
    %91 = math.exp %90 : vector<8x8xf32>
    %cst_29 = arith.constant dense<0.000000e+00> : vector<8xf32>
    %92 = vector.multi_reduction <add>, %91, %cst_29 [1] : vector<8x8xf32> to vector<8xf32>
    %93 = vector.shape_cast %92 : vector<8xf32> to vector<8x1xf32>
    %94 = tpu.reciprocal %93 {approx = true} : vector<8x1xf32> -> vector<8x1xf32>
    %95 = vector.broadcast %94 : vector<8x1xf32> to vector<8x8xf32>
    %96 = arith.mulf %91, %95 : vector<8x8xf32>
    %97 = vector.extract_strided_slice %45 {offsets = [0, 80], sizes = [8, 8], strides = [1, 1]} : vector<8x96xf32> to vector<8x8xf32>
    %cst_30 = arith.constant dense<0.000000e+00> : vector<8x8xf32>
    %98 = tpu.matmul %96, %97, %cst_30 {dimension_numbers = #tpu.dot_dimension_numbers<[1], [0], [0], [1], [0, 0, 1, 1], [], []>} : vector<8x8xf32>, vector<8x8xf32>, vector<8x8xf32> -> vector<8x8xf32>
    %99 = vector.extract_strided_slice %45 {offsets = [0, 24], sizes = [8, 8], strides = [1, 1]} : vector<8x96xf32> to vector<8x8xf32>
    %100 = vector.extract_strided_slice %47 {offsets = [24, 0], sizes = [8, 8], strides = [1, 1]} : vector<32x8xf32> to vector<8x8xf32>
    %cst_31 = arith.constant dense<0.000000e+00> : vector<8x8xf32>
    %101 = tpu.matmul %99, %100, %cst_31 {dimension_numbers = #tpu.dot_dimension_numbers<[1], [0], [0], [1], [0, 0, 1, 1], [], []>} : vector<8x8xf32>, vector<8x8xf32>, vector<8x8xf32> -> vector<8x8xf32>
    %102 = vector.broadcast %10 : vector<1x8xf32> to vector<8x8xf32>
    %103 = arith.addf %101, %102 : vector<8x8xf32>
    %cst_32 = arith.constant dense<0xFF800000> : vector<8xf32>
    %104 = vector.multi_reduction <maximumf>, %103, %cst_32 [1] : vector<8x8xf32> to vector<8xf32>
    %105 = vector.shape_cast %104 : vector<8xf32> to vector<8x1xf32>
    %106 = vector.broadcast %105 : vector<8x1xf32> to vector<8x8xf32>
    %107 = arith.subf %103, %106 : vector<8x8xf32>
    %108 = math.exp %107 : vector<8x8xf32>
    %cst_33 = arith.constant dense<0.000000e+00> : vector<8xf32>
    %109 = vector.multi_reduction <add>, %108, %cst_33 [1] : vector<8x8xf32> to vector<8xf32>
    %110 = vector.shape_cast %109 : vector<8xf32> to vector<8x1xf32>
    %111 = tpu.reciprocal %110 {approx = true} : vector<8x1xf32> -> vector<8x1xf32>
    %112 = vector.broadcast %111 : vector<8x1xf32> to vector<8x8xf32>
    %113 = arith.mulf %108, %112 : vector<8x8xf32>
    %114 = vector.extract_strided_slice %45 {offsets = [0, 88], sizes = [8, 8], strides = [1, 1]} : vector<8x96xf32> to vector<8x8xf32>
    %cst_34 = arith.constant dense<0.000000e+00> : vector<8x8xf32>
    %115 = tpu.matmul %113, %114, %cst_34 {dimension_numbers = #tpu.dot_dimension_numbers<[1], [0], [0], [1], [0, 0, 1, 1], [], []>} : vector<8x8xf32>, vector<8x8xf32>, vector<8x8xf32> -> vector<8x8xf32>
    %116 = tpu.concatenate %64, %81, %98, %115 in 1 : vector<8x8xf32>, vector<8x8xf32>, vector<8x8xf32>, vector<8x8xf32> -> vector<8x32xf32>
    %c0_35 = arith.constant 0 : index
    %c0_36 = arith.constant 0 : index
    %c0_37 = arith.constant 0 : index
    %117 = vector.load %arg5[%c0_35, %c0_36, %c0_37] : memref<2x32x32xf32, #tpu.memory_space<vmem>>, vector<1x32x32xf32>
    %118 = vector.shape_cast %117 : vector<1x32x32xf32> to vector<32x32xf32>
    %cst_38 = arith.constant dense<0.000000e+00> : vector<8x32xf32>
    %119 = tpu.matmul %116, %118, %cst_38 {dimension_numbers = #tpu.dot_dimension_numbers<[1], [0], [0], [1], [0, 0, 1, 1], [], []>} : vector<8x32xf32>, vector<32x32xf32>, vector<8x32xf32> -> vector<8x32xf32>
    %120 = arith.addf %4, %119 : vector<8x32xf32>
    %121 = vector.broadcast %16 : vector<1x32xf32> to vector<8x32xf32>
    %122 = arith.addf %120, %121 : vector<8x32xf32>
    %cst_39 = arith.constant dense<0.000000e+00> : vector<8xf32>
    %123 = vector.multi_reduction <add>, %122, %cst_39 [1] : vector<8x32xf32> to vector<8xf32>
    %124 = vector.shape_cast %123 : vector<8xf32> to vector<8x1xf32>
    %cst_40 = arith.constant 3.200000e+01 : f32
    %125 = vector.broadcast %cst_40 : f32 to vector<8x1xf32>
    %126 = arith.divf %124, %125 : vector<8x1xf32>
    %127 = vector.broadcast %126 : vector<8x1xf32> to vector<8x32xf32>
    %128 = arith.subf %122, %127 : vector<8x32xf32>
    %129 = arith.mulf %128, %128 : vector<8x32xf32>
    %cst_41 = arith.constant dense<0.000000e+00> : vector<8xf32>
    %130 = vector.multi_reduction <add>, %129, %cst_41 [1] : vector<8x32xf32> to vector<8xf32>
    %131 = vector.shape_cast %130 : vector<8xf32> to vector<8x1xf32>
    %cst_42 = arith.constant 3.200000e+01 : f32
    %132 = vector.broadcast %cst_42 : f32 to vector<8x1xf32>
    %133 = arith.divf %131, %132 : vector<8x1xf32>
    %134 = vector.broadcast %126 : vector<8x1xf32> to vector<8x32xf32>
    %135 = arith.subf %122, %134 : vector<8x32xf32>
    %cst_43 = arith.constant 9.99999974E-6 : f32
    %136 = vector.broadcast %cst_43 : f32 to vector<8x1xf32>
    %137 = arith.addf %133, %136 : vector<8x1xf32>
    %138 = math.rsqrt %137 : vector<8x1xf32>
    %139 = vector.broadcast %138 : vector<8x1xf32> to vector<8x32xf32>
    %140 = arith.mulf %135, %139 : vector<8x32xf32>
    %141 = vector.broadcast %14 : vector<1x32xf32> to vector<8x32xf32>
    %142 = arith.mulf %140, %141 : vector<8x32xf32>
    %143 = vector.broadcast %15 : vector<1x32xf32> to vector<8x32xf32>
    %144 = arith.addf %142, %143 : vector<8x32xf32>
    %c0_44 = arith.constant 0 : index
    %c0_45 = arith.constant 0 : index
    %c0_46 = arith.constant 0 : index
    %145 = vector.load %arg6[%c0_44, %c0_45, %c0_46] : memref<2x32x64xf32, #tpu.memory_space<vmem>>, vector<1x32x64xf32>
    %146 = vector.shape_cast %145 : vector<1x32x64xf32> to vector<32x64xf32>
    %cst_47 = arith.constant dense<0.000000e+00> : vector<8x64xf32>
    %147 = tpu.matmul %144, %146, %cst_47 {dimension_numbers = #tpu.dot_dimension_numbers<[1], [0], [0], [1], [0, 0, 1, 1], [], []>} : vector<8x32xf32>, vector<32x64xf32>, vector<8x64xf32> -> vector<8x64xf32>
    %c2 = arith.constant 2 : index
    %c0_48 = arith.constant 0 : index
    %148 = vector.load %arg10[%c2, %c0_48] : memref<8x96xf32, #tpu.memory_space<vmem>>, vector<1x64xf32>
    %149 = vector.broadcast %148 : vector<1x64xf32> to vector<8x64xf32>
    %150 = arith.addf %147, %149 : vector<8x64xf32>
    %151 = arith.mulf %150, %150 : vector<8x64xf32>
    %152 = arith.mulf %150, %151 : vector<8x64xf32>
    %cst_49 = arith.constant 4.471500e-02 : f32
    %153 = vector.broadcast %cst_49 : f32 to vector<8x64xf32>
    %154 = arith.mulf %153, %152 : vector<8x64xf32>
    %155 = arith.addf %150, %154 : vector<8x64xf32>
    %cst_50 = arith.constant 0.797884583 : f32
    %156 = vector.broadcast %cst_50 : f32 to vector<8x64xf32>
    %157 = arith.mulf %156, %155 : vector<8x64xf32>
    %158 = math.tanh %157 : vector<8x64xf32>
    %cst_51 = arith.constant 1.000000e+00 : f32
    %159 = vector.broadcast %cst_51 : f32 to vector<8x64xf32>
    %160 = arith.addf %159, %158 : vector<8x64xf32>
    %cst_52 = arith.constant 5.000000e-01 : f32
    %161 = vector.broadcast %cst_52 : f32 to vector<8x64xf32>
    %162 = arith.mulf %161, %160 : vector<8x64xf32>
    %163 = arith.mulf %150, %162 : vector<8x64xf32>
    %c0_53 = arith.constant 0 : index
    %c0_54 = arith.constant 0 : index
    %c0_55 = arith.constant 0 : index
    %164 = vector.load %arg7[%c0_53, %c0_54, %c0_55] : memref<2x64x32xf32, #tpu.memory_space<vmem>>, vector<1x64x32xf32>
    %165 = vector.shape_cast %164 : vector<1x64x32xf32> to vector<64x32xf32>
    %cst_56 = arith.constant dense<0.000000e+00> : vector<8x32xf32>
    %166 = tpu.matmul %163, %165, %cst_56 {dimension_numbers = #tpu.dot_dimension_numbers<[1], [0], [0], [1], [0, 0, 1, 1], [], []>} : vector<8x64xf32>, vector<64x32xf32>, vector<8x32xf32> -> vector<8x32xf32>
    %167 = arith.addf %122, %166 : vector<8x32xf32>
    %168 = vector.broadcast %17 : vector<1x32xf32> to vector<8x32xf32>
    %169 = arith.addf %167, %168 : vector<8x32xf32>
    %c16 = arith.constant 16 : index
    %c0_57 = arith.constant 0 : index
    %170 = vector.load %arg9[%c16, %c0_57] : memref<32x32xf32, #tpu.memory_space<vmem>>, vector<8x32xf32>
    %171 = vector.extract_strided_slice %170 {offsets = [0, 0], sizes = [1, 32], strides = [1, 1]} : vector<8x32xf32> to vector<1x32xf32>
    %172 = vector.extract_strided_slice %170 {offsets = [1, 0], sizes = [1, 32], strides = [1, 1]} : vector<8x32xf32> to vector<1x32xf32>
    %173 = vector.extract_strided_slice %170 {offsets = [2, 0], sizes = [1, 32], strides = [1, 1]} : vector<8x32xf32> to vector<1x32xf32>
    %174 = vector.extract_strided_slice %170 {offsets = [3, 0], sizes = [1, 32], strides = [1, 1]} : vector<8x32xf32> to vector<1x32xf32>
    %175 = vector.extract_strided_slice %170 {offsets = [4, 0], sizes = [1, 32], strides = [1, 1]} : vector<8x32xf32> to vector<1x32xf32>
    %176 = vector.extract_strided_slice %170 {offsets = [5, 0], sizes = [1, 32], strides = [1, 1]} : vector<8x32xf32> to vector<1x32xf32>
    %cst_58 = arith.constant dense<0.000000e+00> : vector<8xf32>
    %177 = vector.multi_reduction <add>, %169, %cst_58 [1] : vector<8x32xf32> to vector<8xf32>
    %178 = vector.shape_cast %177 : vector<8xf32> to vector<8x1xf32>
    %cst_59 = arith.constant 3.200000e+01 : f32
    %179 = vector.broadcast %cst_59 : f32 to vector<8x1xf32>
    %180 = arith.divf %178, %179 : vector<8x1xf32>
    %181 = vector.broadcast %180 : vector<8x1xf32> to vector<8x32xf32>
    %182 = arith.subf %169, %181 : vector<8x32xf32>
    %183 = arith.mulf %182, %182 : vector<8x32xf32>
    %cst_60 = arith.constant dense<0.000000e+00> : vector<8xf32>
    %184 = vector.multi_reduction <add>, %183, %cst_60 [1] : vector<8x32xf32> to vector<8xf32>
    %185 = vector.shape_cast %184 : vector<8xf32> to vector<8x1xf32>
    %cst_61 = arith.constant 3.200000e+01 : f32
    %186 = vector.broadcast %cst_61 : f32 to vector<8x1xf32>
    %187 = arith.divf %185, %186 : vector<8x1xf32>
    %188 = vector.broadcast %180 : vector<8x1xf32> to vector<8x32xf32>
    %189 = arith.subf %169, %188 : vector<8x32xf32>
    %cst_62 = arith.constant 9.99999974E-6 : f32
    %190 = vector.broadcast %cst_62 : f32 to vector<8x1xf32>
    %191 = arith.addf %187, %190 : vector<8x1xf32>
    %192 = math.rsqrt %191 : vector<8x1xf32>
    %193 = vector.broadcast %192 : vector<8x1xf32> to vector<8x32xf32>
    %194 = arith.mulf %189, %193 : vector<8x32xf32>
    %195 = vector.broadcast %171 : vector<1x32xf32> to vector<8x32xf32>
    %196 = arith.mulf %194, %195 : vector<8x32xf32>
    %197 = vector.broadcast %172 : vector<1x32xf32> to vector<8x32xf32>
    %198 = arith.addf %196, %197 : vector<8x32xf32>
    %c1 = arith.constant 1 : index
    %c0_63 = arith.constant 0 : index
    %c0_64 = arith.constant 0 : index
    %199 = vector.load %arg4[%c1, %c0_63, %c0_64] : memref<2x32x96xf32, #tpu.memory_space<vmem>>, vector<1x32x96xf32>
    %200 = vector.shape_cast %199 : vector<1x32x96xf32> to vector<32x96xf32>
    %cst_65 = arith.constant dense<0.000000e+00> : vector<8x96xf32>
    %201 = tpu.matmul %198, %200, %cst_65 {dimension_numbers = #tpu.dot_dimension_numbers<[1], [0], [0], [1], [0, 0, 1, 1], [], []>} : vector<8x32xf32>, vector<32x96xf32>, vector<8x96xf32> -> vector<8x96xf32>
    %c1_66 = arith.constant 1 : index
    %c0_67 = arith.constant 0 : index
    %202 = vector.load %arg10[%c1_66, %c0_67] : memref<8x96xf32, #tpu.memory_space<vmem>>, vector<1x96xf32>
    %203 = vector.broadcast %202 : vector<1x96xf32> to vector<8x96xf32>
    %204 = arith.addf %201, %203 : vector<8x96xf32>
    %205 = vector.extract_strided_slice %204 {offsets = [0, 32], sizes = [8, 32], strides = [1, 1]} : vector<8x96xf32> to vector<8x32xf32>
    %206 = tpu.transpose %205, [1, 0] : vector<8x32xf32> -> vector<32x8xf32>
    %207 = vector.extract_strided_slice %204 {offsets = [0, 0], sizes = [8, 8], strides = [1, 1]} : vector<8x96xf32> to vector<8x8xf32>
    %208 = vector.extract_strided_slice %206 {offsets = [0, 0], sizes = [8, 8], strides = [1, 1]} : vector<32x8xf32> to vector<8x8xf32>
    %cst_68 = arith.constant dense<0.000000e+00> : vector<8x8xf32>
    %209 = tpu.matmul %207, %208, %cst_68 {dimension_numbers = #tpu.dot_dimension_numbers<[1], [0], [0], [1], [0, 0, 1, 1], [], []>} : vector<8x8xf32>, vector<8x8xf32>, vector<8x8xf32> -> vector<8x8xf32>
    %210 = vector.broadcast %10 : vector<1x8xf32> to vector<8x8xf32>
    %211 = arith.addf %209, %210 : vector<8x8xf32>
    %cst_69 = arith.constant dense<0xFF800000> : vector<8xf32>
    %212 = vector.multi_reduction <maximumf>, %211, %cst_69 [1] : vector<8x8xf32> to vector<8xf32>
    %213 = vector.shape_cast %212 : vector<8xf32> to vector<8x1xf32>
    %214 = vector.broadcast %213 : vector<8x1xf32> to vector<8x8xf32>
    %215 = arith.subf %211, %214 : vector<8x8xf32>
    %216 = math.exp %215 : vector<8x8xf32>
    %cst_70 = arith.constant dense<0.000000e+00> : vector<8xf32>
    %217 = vector.multi_reduction <add>, %216, %cst_70 [1] : vector<8x8xf32> to vector<8xf32>
    %218 = vector.shape_cast %217 : vector<8xf32> to vector<8x1xf32>
    %219 = tpu.reciprocal %218 {approx = true} : vector<8x1xf32> -> vector<8x1xf32>
    %220 = vector.broadcast %219 : vector<8x1xf32> to vector<8x8xf32>
    %221 = arith.mulf %216, %220 : vector<8x8xf32>
    %222 = vector.extract_strided_slice %204 {offsets = [0, 64], sizes = [8, 8], strides = [1, 1]} : vector<8x96xf32> to vector<8x8xf32>
    %cst_71 = arith.constant dense<0.000000e+00> : vector<8x8xf32>
    %223 = tpu.matmul %221, %222, %cst_71 {dimension_numbers = #tpu.dot_dimension_numbers<[1], [0], [0], [1], [0, 0, 1, 1], [], []>} : vector<8x8xf32>, vector<8x8xf32>, vector<8x8xf32> -> vector<8x8xf32>
    %224 = vector.extract_strided_slice %204 {offsets = [0, 8], sizes = [8, 8], strides = [1, 1]} : vector<8x96xf32> to vector<8x8xf32>
    %225 = vector.extract_strided_slice %206 {offsets = [8, 0], sizes = [8, 8], strides = [1, 1]} : vector<32x8xf32> to vector<8x8xf32>
    %cst_72 = arith.constant dense<0.000000e+00> : vector<8x8xf32>
    %226 = tpu.matmul %224, %225, %cst_72 {dimension_numbers = #tpu.dot_dimension_numbers<[1], [0], [0], [1], [0, 0, 1, 1], [], []>} : vector<8x8xf32>, vector<8x8xf32>, vector<8x8xf32> -> vector<8x8xf32>
    %227 = vector.broadcast %10 : vector<1x8xf32> to vector<8x8xf32>
    %228 = arith.addf %226, %227 : vector<8x8xf32>
    %cst_73 = arith.constant dense<0xFF800000> : vector<8xf32>
    %229 = vector.multi_reduction <maximumf>, %228, %cst_73 [1] : vector<8x8xf32> to vector<8xf32>
    %230 = vector.shape_cast %229 : vector<8xf32> to vector<8x1xf32>
    %231 = vector.broadcast %230 : vector<8x1xf32> to vector<8x8xf32>
    %232 = arith.subf %228, %231 : vector<8x8xf32>
    %233 = math.exp %232 : vector<8x8xf32>
    %cst_74 = arith.constant dense<0.000000e+00> : vector<8xf32>
    %234 = vector.multi_reduction <add>, %233, %cst_74 [1] : vector<8x8xf32> to vector<8xf32>
    %235 = vector.shape_cast %234 : vector<8xf32> to vector<8x1xf32>
    %236 = tpu.reciprocal %235 {approx = true} : vector<8x1xf32> -> vector<8x1xf32>
    %237 = vector.broadcast %236 : vector<8x1xf32> to vector<8x8xf32>
    %238 = arith.mulf %233, %237 : vector<8x8xf32>
    %239 = vector.extract_strided_slice %204 {offsets = [0, 72], sizes = [8, 8], strides = [1, 1]} : vector<8x96xf32> to vector<8x8xf32>
    %cst_75 = arith.constant dense<0.000000e+00> : vector<8x8xf32>
    %240 = tpu.matmul %238, %239, %cst_75 {dimension_numbers = #tpu.dot_dimension_numbers<[1], [0], [0], [1], [0, 0, 1, 1], [], []>} : vector<8x8xf32>, vector<8x8xf32>, vector<8x8xf32> -> vector<8x8xf32>
    %241 = vector.extract_strided_slice %204 {offsets = [0, 16], sizes = [8, 8], strides = [1, 1]} : vector<8x96xf32> to vector<8x8xf32>
    %242 = vector.extract_strided_slice %206 {offsets = [16, 0], sizes = [8, 8], strides = [1, 1]} : vector<32x8xf32> to vector<8x8xf32>
    %cst_76 = arith.constant dense<0.000000e+00> : vector<8x8xf32>
    %243 = tpu.matmul %241, %242, %cst_76 {dimension_numbers = #tpu.dot_dimension_numbers<[1], [0], [0], [1], [0, 0, 1, 1], [], []>} : vector<8x8xf32>, vector<8x8xf32>, vector<8x8xf32> -> vector<8x8xf32>
    %244 = vector.broadcast %10 : vector<1x8xf32> to vector<8x8xf32>
    %245 = arith.addf %243, %244 : vector<8x8xf32>
    %cst_77 = arith.constant dense<0xFF800000> : vector<8xf32>
    %246 = vector.multi_reduction <maximumf>, %245, %cst_77 [1] : vector<8x8xf32> to vector<8xf32>
    %247 = vector.shape_cast %246 : vector<8xf32> to vector<8x1xf32>
    %248 = vector.broadcast %247 : vector<8x1xf32> to vector<8x8xf32>
    %249 = arith.subf %245, %248 : vector<8x8xf32>
    %250 = math.exp %249 : vector<8x8xf32>
    %cst_78 = arith.constant dense<0.000000e+00> : vector<8xf32>
    %251 = vector.multi_reduction <add>, %250, %cst_78 [1] : vector<8x8xf32> to vector<8xf32>
    %252 = vector.shape_cast %251 : vector<8xf32> to vector<8x1xf32>
    %253 = tpu.reciprocal %252 {approx = true} : vector<8x1xf32> -> vector<8x1xf32>
    %254 = vector.broadcast %253 : vector<8x1xf32> to vector<8x8xf32>
    %255 = arith.mulf %250, %254 : vector<8x8xf32>
    %256 = vector.extract_strided_slice %204 {offsets = [0, 80], sizes = [8, 8], strides = [1, 1]} : vector<8x96xf32> to vector<8x8xf32>
    %cst_79 = arith.constant dense<0.000000e+00> : vector<8x8xf32>
    %257 = tpu.matmul %255, %256, %cst_79 {dimension_numbers = #tpu.dot_dimension_numbers<[1], [0], [0], [1], [0, 0, 1, 1], [], []>} : vector<8x8xf32>, vector<8x8xf32>, vector<8x8xf32> -> vector<8x8xf32>
    %258 = vector.extract_strided_slice %204 {offsets = [0, 24], sizes = [8, 8], strides = [1, 1]} : vector<8x96xf32> to vector<8x8xf32>
    %259 = vector.extract_strided_slice %206 {offsets = [24, 0], sizes = [8, 8], strides = [1, 1]} : vector<32x8xf32> to vector<8x8xf32>
    %cst_80 = arith.constant dense<0.000000e+00> : vector<8x8xf32>
    %260 = tpu.matmul %258, %259, %cst_80 {dimension_numbers = #tpu.dot_dimension_numbers<[1], [0], [0], [1], [0, 0, 1, 1], [], []>} : vector<8x8xf32>, vector<8x8xf32>, vector<8x8xf32> -> vector<8x8xf32>
    %261 = vector.broadcast %10 : vector<1x8xf32> to vector<8x8xf32>
    %262 = arith.addf %260, %261 : vector<8x8xf32>
    %cst_81 = arith.constant dense<0xFF800000> : vector<8xf32>
    %263 = vector.multi_reduction <maximumf>, %262, %cst_81 [1] : vector<8x8xf32> to vector<8xf32>
    %264 = vector.shape_cast %263 : vector<8xf32> to vector<8x1xf32>
    %265 = vector.broadcast %264 : vector<8x1xf32> to vector<8x8xf32>
    %266 = arith.subf %262, %265 : vector<8x8xf32>
    %267 = math.exp %266 : vector<8x8xf32>
    %cst_82 = arith.constant dense<0.000000e+00> : vector<8xf32>
    %268 = vector.multi_reduction <add>, %267, %cst_82 [1] : vector<8x8xf32> to vector<8xf32>
    %269 = vector.shape_cast %268 : vector<8xf32> to vector<8x1xf32>
    %270 = tpu.reciprocal %269 {approx = true} : vector<8x1xf32> -> vector<8x1xf32>
    %271 = vector.broadcast %270 : vector<8x1xf32> to vector<8x8xf32>
    %272 = arith.mulf %267, %271 : vector<8x8xf32>
    %273 = vector.extract_strided_slice %204 {offsets = [0, 88], sizes = [8, 8], strides = [1, 1]} : vector<8x96xf32> to vector<8x8xf32>
    %cst_83 = arith.constant dense<0.000000e+00> : vector<8x8xf32>
    %274 = tpu.matmul %272, %273, %cst_83 {dimension_numbers = #tpu.dot_dimension_numbers<[1], [0], [0], [1], [0, 0, 1, 1], [], []>} : vector<8x8xf32>, vector<8x8xf32>, vector<8x8xf32> -> vector<8x8xf32>
    %275 = tpu.concatenate %223, %240, %257, %274 in 1 : vector<8x8xf32>, vector<8x8xf32>, vector<8x8xf32>, vector<8x8xf32> -> vector<8x32xf32>
    %c1_84 = arith.constant 1 : index
    %c0_85 = arith.constant 0 : index
    %c0_86 = arith.constant 0 : index
    %276 = vector.load %arg5[%c1_84, %c0_85, %c0_86] : memref<2x32x32xf32, #tpu.memory_space<vmem>>, vector<1x32x32xf32>
    %277 = vector.shape_cast %276 : vector<1x32x32xf32> to vector<32x32xf32>
    %cst_87 = arith.constant dense<0.000000e+00> : vector<8x32xf32>
    %278 = tpu.matmul %275, %277, %cst_87 {dimension_numbers = #tpu.dot_dimension_numbers<[1], [0], [0], [1], [0, 0, 1, 1], [], []>} : vector<8x32xf32>, vector<32x32xf32>, vector<8x32xf32> -> vector<8x32xf32>
    %279 = arith.addf %169, %278 : vector<8x32xf32>
    %280 = vector.broadcast %175 : vector<1x32xf32> to vector<8x32xf32>
    %281 = arith.addf %279, %280 : vector<8x32xf32>
    %cst_88 = arith.constant dense<0.000000e+00> : vector<8xf32>
    %282 = vector.multi_reduction <add>, %281, %cst_88 [1] : vector<8x32xf32> to vector<8xf32>
    %283 = vector.shape_cast %282 : vector<8xf32> to vector<8x1xf32>
    %cst_89 = arith.constant 3.200000e+01 : f32
    %284 = vector.broadcast %cst_89 : f32 to vector<8x1xf32>
    %285 = arith.divf %283, %284 : vector<8x1xf32>
    %286 = vector.broadcast %285 : vector<8x1xf32> to vector<8x32xf32>
    %287 = arith.subf %281, %286 : vector<8x32xf32>
    %288 = arith.mulf %287, %287 : vector<8x32xf32>
    %cst_90 = arith.constant dense<0.000000e+00> : vector<8xf32>
    %289 = vector.multi_reduction <add>, %288, %cst_90 [1] : vector<8x32xf32> to vector<8xf32>
    %290 = vector.shape_cast %289 : vector<8xf32> to vector<8x1xf32>
    %cst_91 = arith.constant 3.200000e+01 : f32
    %291 = vector.broadcast %cst_91 : f32 to vector<8x1xf32>
    %292 = arith.divf %290, %291 : vector<8x1xf32>
    %293 = vector.broadcast %285 : vector<8x1xf32> to vector<8x32xf32>
    %294 = arith.subf %281, %293 : vector<8x32xf32>
    %cst_92 = arith.constant 9.99999974E-6 : f32
    %295 = vector.broadcast %cst_92 : f32 to vector<8x1xf32>
    %296 = arith.addf %292, %295 : vector<8x1xf32>
    %297 = math.rsqrt %296 : vector<8x1xf32>
    %298 = vector.broadcast %297 : vector<8x1xf32> to vector<8x32xf32>
    %299 = arith.mulf %294, %298 : vector<8x32xf32>
    %300 = vector.broadcast %173 : vector<1x32xf32> to vector<8x32xf32>
    %301 = arith.mulf %299, %300 : vector<8x32xf32>
    %302 = vector.broadcast %174 : vector<1x32xf32> to vector<8x32xf32>
    %303 = arith.addf %301, %302 : vector<8x32xf32>
    %c1_93 = arith.constant 1 : index
    %c0_94 = arith.constant 0 : index
    %c0_95 = arith.constant 0 : index
    %304 = vector.load %arg6[%c1_93, %c0_94, %c0_95] : memref<2x32x64xf32, #tpu.memory_space<vmem>>, vector<1x32x64xf32>
    %305 = vector.shape_cast %304 : vector<1x32x64xf32> to vector<32x64xf32>
    %cst_96 = arith.constant dense<0.000000e+00> : vector<8x64xf32>
    %306 = tpu.matmul %303, %305, %cst_96 {dimension_numbers = #tpu.dot_dimension_numbers<[1], [0], [0], [1], [0, 0, 1, 1], [], []>} : vector<8x32xf32>, vector<32x64xf32>, vector<8x64xf32> -> vector<8x64xf32>
    %c3 = arith.constant 3 : index
    %c0_97 = arith.constant 0 : index
    %307 = vector.load %arg10[%c3, %c0_97] : memref<8x96xf32, #tpu.memory_space<vmem>>, vector<1x64xf32>
    %308 = vector.broadcast %307 : vector<1x64xf32> to vector<8x64xf32>
    %309 = arith.addf %306, %308 : vector<8x64xf32>
    %310 = arith.mulf %309, %309 : vector<8x64xf32>
    %311 = arith.mulf %309, %310 : vector<8x64xf32>
    %cst_98 = arith.constant 4.471500e-02 : f32
    %312 = vector.broadcast %cst_98 : f32 to vector<8x64xf32>
    %313 = arith.mulf %312, %311 : vector<8x64xf32>
    %314 = arith.addf %309, %313 : vector<8x64xf32>
    %cst_99 = arith.constant 0.797884583 : f32
    %315 = vector.broadcast %cst_99 : f32 to vector<8x64xf32>
    %316 = arith.mulf %315, %314 : vector<8x64xf32>
    %317 = math.tanh %316 : vector<8x64xf32>
    %cst_100 = arith.constant 1.000000e+00 : f32
    %318 = vector.broadcast %cst_100 : f32 to vector<8x64xf32>
    %319 = arith.addf %318, %317 : vector<8x64xf32>
    %cst_101 = arith.constant 5.000000e-01 : f32
    %320 = vector.broadcast %cst_101 : f32 to vector<8x64xf32>
    %321 = arith.mulf %320, %319 : vector<8x64xf32>
    %322 = arith.mulf %309, %321 : vector<8x64xf32>
    %c1_102 = arith.constant 1 : index
    %c0_103 = arith.constant 0 : index
    %c0_104 = arith.constant 0 : index
    %323 = vector.load %arg7[%c1_102, %c0_103, %c0_104] : memref<2x64x32xf32, #tpu.memory_space<vmem>>, vector<1x64x32xf32>
    %324 = vector.shape_cast %323 : vector<1x64x32xf32> to vector<64x32xf32>
    %cst_105 = arith.constant dense<0.000000e+00> : vector<8x32xf32>
    %325 = tpu.matmul %322, %324, %cst_105 {dimension_numbers = #tpu.dot_dimension_numbers<[1], [0], [0], [1], [0, 0, 1, 1], [], []>} : vector<8x64xf32>, vector<64x32xf32>, vector<8x32xf32> -> vector<8x32xf32>
    %326 = arith.addf %281, %325 : vector<8x32xf32>
    %327 = vector.broadcast %176 : vector<1x32xf32> to vector<8x32xf32>
    %328 = arith.addf %326, %327 : vector<8x32xf32>
    %c24 = arith.constant 24 : index
    %c0_106 = arith.constant 0 : index
    %329 = vector.load %arg9[%c24, %c0_106] : memref<32x32xf32, #tpu.memory_space<vmem>>, vector<8x32xf32>
    %330 = vector.extract_strided_slice %328 {offsets = [0, 0], sizes = [1, 32], strides = [1, 1]} : vector<8x32xf32> to vector<1x32xf32>
    %331 = vector.extract_strided_slice %329 {offsets = [0, 0], sizes = [1, 32], strides = [1, 1]} : vector<8x32xf32> to vector<1x32xf32>
    %332 = vector.extract_strided_slice %329 {offsets = [1, 0], sizes = [1, 32], strides = [1, 1]} : vector<8x32xf32> to vector<1x32xf32>
    %cst_107 = arith.constant dense<0.000000e+00> : vector<1xf32>
    %333 = vector.multi_reduction <add>, %330, %cst_107 [1] : vector<1x32xf32> to vector<1xf32>
    %334 = vector.shape_cast %333 : vector<1xf32> to vector<1x1xf32>
    %cst_108 = arith.constant 3.200000e+01 : f32
    %335 = vector.broadcast %cst_108 : f32 to vector<1x1xf32>
    %336 = arith.divf %334, %335 : vector<1x1xf32>
    %337 = vector.broadcast %336 : vector<1x1xf32> to vector<1x32xf32>
    %338 = arith.subf %330, %337 : vector<1x32xf32>
    %339 = arith.mulf %338, %338 : vector<1x32xf32>
    %cst_109 = arith.constant dense<0.000000e+00> : vector<1xf32>
    %340 = vector.multi_reduction <add>, %339, %cst_109 [1] : vector<1x32xf32> to vector<1xf32>
    %341 = vector.shape_cast %340 : vector<1xf32> to vector<1x1xf32>
    %cst_110 = arith.constant 3.200000e+01 : f32
    %342 = vector.broadcast %cst_110 : f32 to vector<1x1xf32>
    %343 = arith.divf %341, %342 : vector<1x1xf32>
    %344 = vector.broadcast %336 : vector<1x1xf32> to vector<1x32xf32>
    %345 = arith.subf %330, %344 : vector<1x32xf32>
    %cst_111 = arith.constant 9.99999974E-6 : f32
    %346 = vector.broadcast %cst_111 : f32 to vector<1x1xf32>
    %347 = arith.addf %343, %346 : vector<1x1xf32>
    %348 = math.rsqrt %347 : vector<1x1xf32>
    %349 = vector.broadcast %348 : vector<1x1xf32> to vector<1x32xf32>
    %350 = arith.mulf %345, %349 : vector<1x32xf32>
    %351 = arith.mulf %350, %331 : vector<1x32xf32>
    %352 = arith.addf %351, %332 : vector<1x32xf32>
    %c0_112 = arith.constant 0 : index
    %c0_113 = arith.constant 0 : index
    %353 = vector.load %arg8[%c0_112, %c0_113] : memref<32x10xf32, #tpu.memory_space<vmem>>, vector<32x10xf32>
    %cst_114 = arith.constant dense<0.000000e+00> : vector<1x10xf32>
    %354 = tpu.matmul %352, %353, %cst_114 {dimension_numbers = #tpu.dot_dimension_numbers<[1], [0], [0], [1], [0, 0, 1, 1], [], []>} : vector<1x32xf32>, vector<32x10xf32>, vector<1x10xf32> -> vector<1x10xf32>
    %c4 = arith.constant 4 : index
    %c0_115 = arith.constant 0 : index
    %355 = vector.load %arg10[%c4, %c0_115] : memref<8x96xf32, #tpu.memory_space<vmem>>, vector<1x10xf32>
    %356 = arith.addf %354, %355 : vector<1x10xf32>
    %cst_116 = arith.constant dense<0xFF800000> : vector<1xf32>
    %357 = vector.multi_reduction <maximumf>, %356, %cst_116 [1] : vector<1x10xf32> to vector<1xf32>
    %358 = vector.shape_cast %357 : vector<1xf32> to vector<1x1xf32>
    %359 = vector.broadcast %358 : vector<1x1xf32> to vector<1x10xf32>
    %360 = arith.subf %356, %359 : vector<1x10xf32>
    %361 = math.exp %360 : vector<1x10xf32>
    %cst_117 = arith.constant dense<0.000000e+00> : vector<1xf32>
    %362 = vector.multi_reduction <add>, %361, %cst_117 [1] : vector<1x10xf32> to vector<1xf32>
    %363 = vector.shape_cast %362 : vector<1xf32> to vector<1x1xf32>
    %364 = math.log %363 : vector<1x1xf32>
    %365 = tpu.iota {dimensions = array<i32: 1>} : vector<1x10xi32>
    %366 = arith.index_cast %arg0 : i32 to index
    %367 = memref.load %arg1[%366] : memref<2xi32, #tpu.memory_space<smem>>
    %368 = vector.broadcast %367 : i32 to vector<1x10xi32>
    %369 = arith.cmpi eq, %365, %368 : vector<1x10xi32>
    %cst_118 = arith.constant 0.000000e+00 : f32
    %370 = vector.broadcast %cst_118 : f32 to vector<1x10xf32>
    %371 = arith.select %369, %360, %370 : vector<1x10xi1>, vector<1x10xf32>
    %cst_119 = arith.constant dense<0.000000e+00> : vector<1xf32>
    %372 = vector.multi_reduction <add>, %371, %cst_119 [1] : vector<1x10xf32> to vector<1xf32>
    %373 = vector.shape_cast %372 : vector<1xf32> to vector<1x1xf32>
    %374 = arith.subf %364, %373 : vector<1x1xf32>
    %375 = tpu.concatenate %356, %374 in 1 : vector<1x10xf32>, vector<1x1xf32> -> vector<1x11xf32>
    %c0_120 = arith.constant 0 : index
    %c0_121 = arith.constant 0 : index
    %c0_122 = arith.constant 0 : index
    %376 = vector.load %arg11[%c0_120, %c0_121, %c0_122] : memref<1x1x11xf32, #tpu.memory_space<vmem>>, vector<1x1x11xf32>
    %377 = vector.shape_cast %376 : vector<1x1x11xf32> to vector<1x11xf32>
    %378 = vector.shape_cast %375 : vector<1x11xf32> to vector<1x1x11xf32>
    tpu.vector_store %arg11[%c0_120, %c0_121, %c0_122], %378 {strides = array<i32>} : memref<1x1x11xf32, #tpu.memory_space<vmem>>, vector<1x1x11xf32>,
    return
  }
  func.func @transform_0(%arg0: i32, %arg1: memref<2xi32, #tpu.memory_space<smem>>) -> (i32, i32) {
    %c0_i32 = arith.constant 0 : i32
    %c0_i32_0 = arith.constant 0 : i32
    return %arg0, %c0_i32 : i32, i32
  }
  func.func @transform_1(%arg0: i32, %arg1: memref<2xi32, #tpu.memory_space<smem>>) -> (i32, i32) {
    %c0_i32 = arith.constant 0 : i32
    %c0_i32_0 = arith.constant 0 : i32
    %c0_i32_1 = arith.constant 0 : i32
    return %c0_i32, %c0_i32_0 : i32, i32
  }
  func.func @transform_2(%arg0: i32, %arg1: memref<2xi32, #tpu.memory_space<smem>>) -> (i32, i32, i32) {
    %c0_i32 = arith.constant 0 : i32
    %c0_i32_0 = arith.constant 0 : i32
    %c0_i32_1 = arith.constant 0 : i32
    %c0_i32_2 = arith.constant 0 : i32
    return %c0_i32, %c0_i32_0, %c0_i32_1 : i32, i32, i32
  }
  func.func @transform_3(%arg0: i32, %arg1: memref<2xi32, #tpu.memory_space<smem>>) -> (i32, i32, i32) {
    %c0_i32 = arith.constant 0 : i32
    %c0_i32_0 = arith.constant 0 : i32
    %c0_i32_1 = arith.constant 0 : i32
    %c0_i32_2 = arith.constant 0 : i32
    return %c0_i32, %c0_i32_0, %c0_i32_1 : i32, i32, i32
  }
  func.func @transform_4(%arg0: i32, %arg1: memref<2xi32, #tpu.memory_space<smem>>) -> (i32, i32, i32) {
    %c0_i32 = arith.constant 0 : i32
    %c0_i32_0 = arith.constant 0 : i32
    %c0_i32_1 = arith.constant 0 : i32
    %c0_i32_2 = arith.constant 0 : i32
    return %c0_i32, %c0_i32_0, %c0_i32_1 : i32, i32, i32
  }
  func.func @transform_5(%arg0: i32, %arg1: memref<2xi32, #tpu.memory_space<smem>>) -> (i32, i32, i32) {
    %c0_i32 = arith.constant 0 : i32
    %c0_i32_0 = arith.constant 0 : i32
    %c0_i32_1 = arith.constant 0 : i32
    %c0_i32_2 = arith.constant 0 : i32
    return %c0_i32, %c0_i32_0, %c0_i32_1 : i32, i32, i32
  }
  func.func @transform_6(%arg0: i32, %arg1: memref<2xi32, #tpu.memory_space<smem>>) -> (i32, i32) {
    %c0_i32 = arith.constant 0 : i32
    %c0_i32_0 = arith.constant 0 : i32
    %c0_i32_1 = arith.constant 0 : i32
    return %c0_i32, %c0_i32_0 : i32, i32
  }
  func.func @transform_7(%arg0: i32, %arg1: memref<2xi32, #tpu.memory_space<smem>>) -> (i32, i32) {
    %c0_i32 = arith.constant 0 : i32
    %c0_i32_0 = arith.constant 0 : i32
    %c0_i32_1 = arith.constant 0 : i32
    return %c0_i32, %c0_i32_0 : i32, i32
  }
  func.func @transform_8(%arg0: i32, %arg1: memref<2xi32, #tpu.memory_space<smem>>) -> (i32, i32) {
    %c0_i32 = arith.constant 0 : i32
    %c0_i32_0 = arith.constant 0 : i32
    %c0_i32_1 = arith.constant 0 : i32
    return %c0_i32, %c0_i32_0 : i32, i32
  }
  func.func @transform_9(%arg0: i32, %arg1: memref<2xi32, #tpu.memory_space<smem>>) -> (i32, i32, i32) {
    %c0_i32 = arith.constant 0 : i32
    %c0_i32_0 = arith.constant 0 : i32
    %c0_i32_1 = arith.constant 0 : i32
    return %arg0, %c0_i32, %c0_i32_0 : i32, i32, i32
  }
}

</mosaic_0001>

<llo_original>
// kernel: vit_forward_loss.1
$region0: #{vit_forward_loss.1}
  #allocation0 [shape = 'u32[]', space=smem, size = 0x4, offset = 0x4, fixed_abs, tag = 'smem constant byte address 0x4 - core index']
  #allocation1 [shape = 'u32[144,128]{1,0:T(1,128)}', space=vmem, size = 0x12000, scoped, tag = 'internal scratch']
  #allocation2 [shape = 's32[1]{0}', space=sflag, size = 0x4, scoped, tag = 'scoped memory for vit_forward_loss.1']
  #allocation3 [shape = 'u8[512]{0}', space=smem, size = 0x200, scoped, tag = 'prefetched SMEM operand 0']
  %s0 = inlined_call_operand.vmem [shape: s32[2], index: 0, kind: input, shape index: {}]
  %s1 = inlined_call_operand.vmem [shape: f32[16,192], index: 1, kind: input, shape index: {}]
  %s2 = inlined_call_operand.vmem [shape: f32[192,32], index: 2, kind: input, shape index: {}]
  %s3 = inlined_call_operand.vmem [shape: f32[2,32,96], index: 3, kind: input, shape index: {}]
  %s4 = inlined_call_operand.vmem [shape: f32[2,32,32], index: 4, kind: input, shape index: {}]
  %s5 = inlined_call_operand.vmem [shape: f32[2,32,64], index: 5, kind: input, shape index: {}]
  %s6 = inlined_call_operand.vmem [shape: f32[2,64,32], index: 6, kind: input, shape index: {}]
  %s7 = inlined_call_operand.vmem [shape: f32[32,10], index: 7, kind: input, shape index: {}]
  %s8 = inlined_call_operand.vmem [shape: f32[32,32], index: 8, kind: input, shape index: {}]
  %s9 = inlined_call_operand.vmem [shape: f32[8,96], index: 9, kind: input, shape index: {}]
  %s10 = inlined_call_operand.vmem [shape: f32[2,1,11], index: 10, kind: output, shape index: {}]
  %s11 = sld [smem:[#allocation0]]
  $region69: #{vit_forward_loss.1} parent=0
    _
  %s13 = ssub.s32 1, %s11
  %s14 = scalar_select 0, %s13, %s11
  %s15 = sshll.u32 %s0, 4
  %s16 = int_to_ptr.vmem [resolvable:$true] %s15
  %18 = dma.vmem_to_smem %s16, 16, [#allocation3], [#allocation2]
  %19 = dma.done [#allocation2], 16
  %20 = sfence
  loop: start=0, step=1, limit=4
  $region2: #{vit_forward_loss.1} parent=0 // loop_pre_header
    _
  $region3: #{vit_forward_loss.1} parent=0 // loop_header
    %s22 = sphi 0, %s26
    %p23 = scmp.ge.s32.totalorder %s22, 4
    %s32 = sphi 0, %s34
    %s35 = sphi 0, %s32
    %s36 = sphi 0, %s35
    %s52 = sphi 0, %s36
    %s56 = sphi 0, %s56
    %s58 = sphi 0, %s56
    %s59 = sphi 0, %s58
    %s73 = sphi 0, %s59
    %s77 = sphi 0, %s77
    %s79 = sphi 0, %s77
    %s80 = sphi 0, %s79
    %s94 = sphi 0, %s80
    %s98 = sphi 0, %s98
    %s100 = sphi 0, %s98
    %s101 = sphi 0, %s100
    %s115 = sphi 0, %s101
    %s119 = sphi 0, %s119
    %s121 = sphi 0, %s119
    %s122 = sphi 0, %s121
    %s136 = sphi 0, %s122
    %s140 = sphi 0, %s140
    %s142 = sphi 0, %s140
    %s143 = sphi 0, %s142
    %s157 = sphi 0, %s143
    %s161 = sphi 0, %s161
    %s163 = sphi 0, %s161
    %s164 = sphi 0, %s163
    %s178 = sphi 0, %s164
    %s182 = sphi 0, %s182
    %s184 = sphi 0, %s182
    %s185 = sphi 0, %s184
    %s199 = sphi 0, %s185
    %s203 = sphi 0, %s203
    %s205 = sphi 0, %s203
    %s206 = sphi 0, %s205
    %s220 = sphi 0, %s206
    %s226 = sphi 0, %s228
    %s229 = sphi 0, %s226
    %s230 = sphi 0, %s229
    %s246 = sphi 0, %s230
  $region4: #{vit_forward_loss.1} parent=0 // loop_header_branch
    %25 = sbr.rel (%p23) target = $region8
  $region5: #{vit_forward_loss.1} parent=0 // loop_body
    %s27 = ssub.s32 %s22, 1
    %s28 = ssub.s32 %s22, 2
    %s29 = sadd.s32 %s22, 1
    %s30 = ssub.s32 %s22, %s29
    %p31 = scmp.eq.s32.totalorder %s30, 0
    %s33 = sadd.s32 %s32, 1
    %s34 = scalar_select %p31, %s32, %s33
    %p37 = pneg %p31
    %p38 = scmp.eq.s32.totalorder %s22, 1
    %p39 = por %p37, %p38
    %p40 = scmp.ne.s32.totalorder %s32, %s35
    %p41 = scmp.eq.s32.totalorder %s22, 0
    %p42 = por %p40, %p41
    %p43 = scmp.ne.s32.totalorder %s32, %s35
    %p44 = scmp.eq.s32.totalorder %s27, 1
    %p45 = por %p43, %p44
    %p46 = scmp.ne.s32.totalorder %s35, %s36
    %p47 = scmp.eq.s32.totalorder %s27, 0
    %p48 = por %p46, %p47
    %p49 = scmp.ne.s32.totalorder %s35, %s36
    %p50 = scmp.eq.s32.totalorder %s28, 1
    %p51 = por %p49, %p50
    %p53 = scmp.ne.s32.totalorder %s36, %s52
    %p54 = scmp.eq.s32.totalorder %s28, 0
    %p55 = por %p53, %p54
    %s57 = sadd.s32 %s56, 1
    %p60 = scmp.eq.s32.totalorder %s22, 1
    %p61 = scmp.ne.s32.totalorder %s56, %s58
    %p62 = scmp.eq.s32.totalorder %s22, 0
    %p63 = por %p61, %p62
    %p64 = scmp.ne.s32.totalorder %s56, %s58
    %p65 = scmp.eq.s32.totalorder %s27, 1
    %p66 = por %p64, %p65
    %p67 = scmp.ne.s32.totalorder %s58, %s59
    %p68 = scmp.eq.s32.totalorder %s27, 0
    %p69 = por %p67, %p68
    %p70 = scmp.ne.s32.totalorder %s58, %s59
    %p71 = scmp.eq.s32.totalorder %s28, 1
    %p72 = por %p70, %p71
    %p74 = scmp.ne.s32.totalorder %s59, %s73
    %p75 = scmp.eq.s32.totalorder %s28, 0
    %p76 = por %p74, %p75
    %s78 = sadd.s32 %s77, 1
    %p81 = scmp.eq.s32.totalorder %s22, 1
    %p82 = scmp.ne.s32.totalorder %s77, %s79
    %p83 = scmp.eq.s32.totalorder %s22, 0
    %p84 = por %p82, %p83
    %p85 = scmp.ne.s32.totalorder %s77, %s79
    %p86 = scmp.eq.s32.totalorder %s27, 1
    %p87 = por %p85, %p86
    %p88 = scmp.ne.s32.totalorder %s79, %s80
    %p89 = scmp.eq.s32.totalorder %s27, 0
    %p90 = por %p88, %p89
    %p91 = scmp.ne.s32.totalorder %s79, %s80
    %p92 = scmp.eq.s32.totalorder %s28, 1
    %p93 = por %p91, %p92
    %p95 = scmp.ne.s32.totalorder %s80, %s94
    %p96 = scmp.eq.s32.totalorder %s28, 0
    %p97 = por %p95, %p96
    %s99 = sadd.s32 %s98, 1
    %p102 = scmp.eq.s32.totalorder %s22, 1
    %p103 = scmp.ne.s32.totalorder %s98, %s100
    %p104 = scmp.eq.s32.totalorder %s22, 0
    %p105 = por %p103, %p104
    %p106 = scmp.ne.s32.totalorder %s98, %s100
    %p107 = scmp.eq.s32.totalorder %s27, 1
    %p108 = por %p106, %p107
    %p109 = scmp.ne.s32.totalorder %s100, %s101
    %p110 = scmp.eq.s32.totalorder %s27, 0
    %p111 = por %p109, %p110
    %p112 = scmp.ne.s32.totalorder %s100, %s101
    %p113 = scmp.eq.s32.totalorder %s28, 1
    %p114 = por %p112, %p113
    %p116 = scmp.ne.s32.totalorder %s101, %s115
    %p117 = scmp.eq.s32.totalorder %s28, 0
    %p118 = por %p116, %p117
    %s120 = sadd.s32 %s119, 1
    %p123 = scmp.eq.s32.totalorder %s22, 1
    %p124 = scmp.ne.s32.totalorder %s119, %s121
    %p125 = scmp.eq.s32.totalorder %s22, 0
    %p126 = por %p124, %p125
    %p127 = scmp.ne.s32.totalorder %s119, %s121
    %p128 = scmp.eq.s32.totalorder %s27, 1
    %p129 = por %p127, %p128
    %p130 = scmp.ne.s32.totalorder %s121, %s122
    %p131 = scmp.eq.s32.totalorder %s27, 0
    %p132 = por %p130, %p131
    %p133 = scmp.ne.s32.totalorder %s121, %s122
    %p134 = scmp.eq.s32.totalorder %s28, 1
    %p135 = por %p133, %p134
    %p137 = scmp.ne.s32.totalorder %s122, %s136
    %p138 = scmp.eq.s32.totalorder %s28, 0
    %p139 = por %p137, %p138
    %s141 = sadd.s32 %s140, 1
    %p144 = scmp.eq.s32.totalorder %s22, 1
    %p145 = scmp.ne.s32.totalorder %s140, %s142
    %p146 = scmp.eq.s32.totalorder %s22, 0
    %p147 = por %p145, %p146
    %p148 = scmp.ne.s32.totalorder %s140, %s142
    %p149 = scmp.eq.s32.totalorder %s27, 1
    %p150 = por %p148, %p149
    %p151 = scmp.ne.s32.totalorder %s142, %s143
    %p152 = scmp.eq.s32.totalorder %s27, 0
    %p153 = por %p151, %p152
    %p154 = scmp.ne.s32.totalorder %s142, %s143
    %p155 = scmp.eq.s32.totalorder %s28, 1
    %p156 = por %p154, %p155
    %p158 = scmp.ne.s32.totalorder %s143, %s157
    %p159 = scmp.eq.s32.totalorder %s28, 0
    %p160 = por %p158, %p159
    %s162 = sadd.s32 %s161, 1
    %p165 = scmp.eq.s32.totalorder %s22, 1
    %p166 = scmp.ne.s32.totalorder %s161, %s163
    %p167 = scmp.eq.s32.totalorder %s22, 0
    %p168 = por %p166, %p167
    %p169 = scmp.ne.s32.totalorder %s161, %s163
    %p170 = scmp.eq.s32.totalorder %s27, 1
    %p171 = por %p169, %p170
    %p172 = scmp.ne.s32.totalorder %s163, %s164
    %p173 = scmp.eq.s32.totalorder %s27, 0
    %p174 = por %p172, %p173
    %p175 = scmp.ne.s32.totalorder %s163, %s164
    %p176 = scmp.eq.s32.totalorder %s28, 1
    %p177 = por %p175, %p176
    %p179 = scmp.ne.s32.totalorder %s164, %s178
    %p180 = scmp.eq.s32.totalorder %s28, 0
    %p181 = por %p179, %p180
    %s183 = sadd.s32 %s182, 1
    %p186 = scmp.eq.s32.totalorder %s22, 1
    %p187 = scmp.ne.s32.totalorder %s182, %s184
    %p188 = scmp.eq.s32.totalorder %s22, 0
    %p189 = por %p187, %p188
    %p190 = scmp.ne.s32.totalorder %s182, %s184
    %p191 = scmp.eq.s32.totalorder %s27, 1
    %p192 = por %p190, %p191
    %p193 = scmp.ne.s32.totalorder %s184, %s185
    %p194 = scmp.eq.s32.totalorder %s27, 0
    %p195 = por %p193, %p194
    %p196 = scmp.ne.s32.totalorder %s184, %s185
    %p197 = scmp.eq.s32.totalorder %s28, 1
    %p198 = por %p196, %p197
    %p200 = scmp.ne.s32.totalorder %s185, %s199
    %p201 = scmp.eq.s32.totalorder %s28, 0
    %p202 = por %p200, %p201
    %s204 = sadd.s32 %s203, 1
    %p207 = scmp.eq.s32.totalorder %s22, 1
    %p208 = scmp.ne.s32.totalorder %s203, %s205
    %p209 = scmp.eq.s32.totalorder %s22, 0
    %p210 = por %p208, %p209
    %p211 = scmp.ne.s32.totalorder %s203, %s205
    %p212 = scmp.eq.s32.totalorder %s27, 1
    %p213 = por %p211, %p212
    %p214 = scmp.ne.s32.totalorder %s205, %s206
    %p215 = scmp.eq.s32.totalorder %s27, 0
    %p216 = por %p214, %p215
    %p217 = scmp.ne.s32.totalorder %s205, %s206
    %p218 = scmp.eq.s32.totalorder %s28, 1
    %p219 = por %p217, %p218
    %p221 = scmp.ne.s32.totalorder %s206, %s220
    %p222 = scmp.eq.s32.totalorder %s28, 0
    %p223 = por %p221, %p222
    %s224 = ssub.s32 %s22, %s29
    %p225 = scmp.eq.s32.totalorder %s224, 0
    %s227 = sadd.s32 %s226, 1
    %s228 = scalar_select %p225, %s226, %s227
    %p231 = pneg %p225
    %p232 = scmp.eq.s32.totalorder %s22, 1
    %p233 = por %p231, %p232
    %p234 = scmp.ne.s32.totalorder %s226, %s229
    %p235 = scmp.eq.s32.totalorder %s22, 0
    %p236 = por %p234, %p235
    %p237 = scmp.ne.s32.totalorder %s226, %s229
    %p238 = scmp.eq.s32.totalorder %s27, 1
    %p239 = por %p237, %p238
    %p240 = scmp.ne.s32.totalorder %s229, %s230
    %p241 = scmp.eq.s32.totalorder %s27, 0
    %p242 = por %p240, %p241
    %p243 = scmp.ne.s32.totalorder %s229, %s230
    %p244 = scmp.eq.s32.totalorder %s28, 1
    %p245 = por %p243, %p244
    %p247 = scmp.ne.s32.totalorder %s230, %s246
    %p248 = scmp.eq.s32.totalorder %s28, 0
    %p249 = por %p247, %p248
    %p250 = scmp.le.s32.totalorder 1, %s22
    %p251 = scmp.lt.s32.totalorder %s22, 3
    %p252 = pnand %p250, %p251
    %p253 = pneg %p252
    // Predicated region
    $region9: #{vit_forward_loss.1} parent=5 // pred_check
      _
    $region10: #{vit_forward_loss.1} parent=5 // pred_check_branch
      %255 = sbr.rel (%p252) target = $region12
    $region11: #{vit_forward_loss.1} parent=5 // pred_region
      %s256 = ssub.s32 %s22, 1
      // Predicated region
      $region13: #{vit_forward_loss.1} parent=11 // pred_check
        %p257 = pneg %p69
      $region14: #{vit_forward_loss.1} parent=11 // pred_check_branch
        %259 = sbr.rel (%p257) target = $region16
      $region15: #{vit_forward_loss.1} parent=11 // pred_region
        _
      $region16: #{vit_forward_loss.1} parent=11 // pred_fallthru
        _
      // Predicated region
      $region17: #{vit_forward_loss.1} parent=11 // pred_check
        %p260 = pneg %p90
      $region18: #{vit_forward_loss.1} parent=11 // pred_check_branch
        %262 = sbr.rel (%p260) target = $region20
      $region19: #{vit_forward_loss.1} parent=11 // pred_region
        _
      $region20: #{vit_forward_loss.1} parent=11 // pred_fallthru
        _
      // Predicated region
      $region21: #{vit_forward_loss.1} parent=11 // pred_check
        %p263 = pneg %p111
      $region22: #{vit_forward_loss.1} parent=11 // pred_check_branch
        %265 = sbr.rel (%p263) target = $region24
      $region23: #{vit_forward_loss.1} parent=11 // pred_region
        _
      $region24: #{vit_forward_loss.1} parent=11 // pred_fallthru
        _
      // Predicated region
      $region25: #{vit_forward_loss.1} parent=11 // pred_check
        %p266 = pneg %p132
      $region26: #{vit_forward_loss.1} parent=11 // pred_check_branch
        %268 = sbr.rel (%p266) target = $region28
      $region27: #{vit_forward_loss.1} parent=11 // pred_region
        _
      $region28: #{vit_forward_loss.1} parent=11 // pred_fallthru
        _
      // Predicated region
      $region29: #{vit_forward_loss.1} parent=11 // pred_check
        %p269 = pneg %p153
      $region30: #{vit_forward_loss.1} parent=11 // pred_check_branch
        %271 = sbr.rel (%p269) target = $region32
      $region31: #{vit_forward_loss.1} parent=11 // pred_region
        _
      $region32: #{vit_forward_loss.1} parent=11 // pred_fallthru
        _
      // Predicated region
      $region33: #{vit_forward_loss.1} parent=11 // pred_check
        %p272 = pneg %p174
      $region34: #{vit_forward_loss.1} parent=11 // pred_check_branch
        %274 = sbr.rel (%p272) target = $region36
      $region35: #{vit_forward_loss.1} parent=11 // pred_region
        _
      $region36: #{vit_forward_loss.1} parent=11 // pred_fallthru
        _
      // Predicated region
      $region37: #{vit_forward_loss.1} parent=11 // pred_check
        %p275 = pneg %p195
      $region38: #{vit_forward_loss.1} parent=11 // pred_check_branch
        %277 = sbr.rel (%p275) target = $region40
      $region39: #{vit_forward_loss.1} parent=11 // pred_region
        _
      $region40: #{vit_forward_loss.1} parent=11 // pred_fallthru
        _
      // Predicated region
      $region41: #{vit_forward_loss.1} parent=11 // pred_check
        %p278 = pneg %p216
      $region42: #{vit_forward_loss.1} parent=11 // pred_check_branch
        %280 = sbr.rel (%p278) target = $region44
      $region43: #{vit_forward_loss.1} parent=11 // pred_region
        _
      $region44: #{vit_forward_loss.1} parent=11 // pred_fallthru
        _
    $region12: #{vit_forward_loss.1} parent=5 // pred_fallthru
      _
    %p281 = scmp.lt.s32.totalorder %s22, 2
    // Predicated region
    $region45: #{vit_forward_loss.1} parent=5 // pred_check
      %p282 = pneg %p281
    $region46: #{vit_forward_loss.1} parent=5 // pred_check_branch
      %284 = sbr.rel (%p282) target = $region48
    $region47: #{vit_forward_loss.1} parent=5 // pred_region
      // Predicated region
      $region49: #{vit_forward_loss.1} parent=47 // pred_check
        %p285 = pneg %p42
      $region50: #{vit_forward_loss.1} parent=47 // pred_check_branch
        %287 = sbr.rel (%p285) target = $region52
      $region51: #{vit_forward_loss.1} parent=47 // pred_region
        %p288 = scmp.lt.s32.totalorder %s22, 1
        %s289 = scalar_select %p288, %s22, 1
        %s290 = smul.addr %s289, 2
        %s291 = smul.addr %s290, 8
        %s292 = scalar_lea.vmem %s1, %s291
      $region52: #{vit_forward_loss.1} parent=47 // pred_fallthru
        _
    $region48: #{vit_forward_loss.1} parent=5 // pred_fallthru
      _
    %p293 = scmp.le.s32.totalorder 1, %s22
    %p294 = scmp.lt.s32.totalorder %s22, 3
    %p295 = pnand %p293, %p294
    %p296 = pneg %p295
    // Predicated region
    $region53: #{vit_forward_loss.1} parent=5 // pred_check
      _
    $region54: #{vit_forward_loss.1} parent=5 // pred_check_branch
      %298 = sbr.rel (%p295) target = $region56
    $region55: #{vit_forward_loss.1} parent=5 // pred_region
      %s299 = ssub.s32 %s22, 1
      %p300 = scmp.lt.s32.totalorder %s27, 1
      %s301 = scalar_select %p300, %s27, 1
      %s302 = smul.addr %s301, 2
      %s303 = smul.addr %s302, 8
      %s304 = scalar_lea.vmem %s1, %s303
      %p305 = pneg %p48
      %p306 = pneg %p45
      %p307 = pneg %p69
      %p308 = pneg %p66
      %p309 = pneg %p90
      %p310 = pneg %p87
      %p311 = pneg %p111
      %p312 = pneg %p108
      %p313 = pneg %p132
      %p314 = pneg %p129
      %p315 = pneg %p153
      %p316 = pneg %p150
      %p317 = pneg %p174
      %p318 = pneg %p171
      %p319 = pneg %p195
      %p320 = pneg %p192
      %p321 = pneg %p216
      %p322 = pneg %p213
      %p323 = pneg %p242
      %p324 = pneg %p239
      %p325 = scmp.lt.s32.totalorder %s27, 1
      %s326 = scalar_select %p325, %s27, 1
      %s327 = scalar_lea.vmem %s10, %s326
      %p328 = scmp.lt.s32.totalorder %s27, 1
      %s329 = scalar_select %p328, %s27, 1
      %s330 = smul.addr %s329, 2
      %s331 = smul.addr %s330, 8
      %s332 = scalar_lea.vmem %s1, %s331
      %p333 = scmp.lt.s32.totalorder %s27, 1
      %s334 = scalar_select %p333, %s27, 1
      %s335 = scalar_lea.vmem %s10, %s334
      %v336 = vld [vmem:[%s332] sm:$0xff]
      %v337 = vld [vmem:[%s332 + $0x8] sm:$0xff]
      %v338 = vld [vmem:[%s2] sm:$0xff]
      %v339 = vld [vmem:[%s2 + $0x8] sm:$0xff]
      %v340 = vld [vmem:[%s2 + $0x10] sm:$0xff]
      %v341 = vld [vmem:[%s2 + $0x18] sm:$0xff]
      %v342 = vld [vmem:[%s2 + $0x20] sm:$0xff]
      %v343 = vld [vmem:[%s2 + $0x28] sm:$0xff]
      %v344 = vld [vmem:[%s2 + $0x30] sm:$0xff]
      %v345 = vld [vmem:[%s2 + $0x38] sm:$0xff]
      %v346 = vld [vmem:[%s2 + $0x40] sm:$0xff]
      %v347 = vld [vmem:[%s2 + $0x48] sm:$0xff]
      %v348 = vld [vmem:[%s2 + $0x50] sm:$0xff]
      %v349 = vld [vmem:[%s2 + $0x58] sm:$0xff]
      %v350 = vld [vmem:[%s2 + $0x60] sm:$0xff]
      %v351 = vld [vmem:[%s2 + $0x68] sm:$0xff]
      %v352 = vld [vmem:[%s2 + $0x70] sm:$0xff]
      %v353 = vld [vmem:[%s2 + $0x78] sm:$0xff]
      %v354 = vld [vmem:[%s2 + $0x80] sm:$0xff]
      %v355 = vld [vmem:[%s2 + $0x88] sm:$0xff]
      %v356 = vld [vmem:[%s2 + $0x90] sm:$0xff]
      %v357 = vld [vmem:[%s2 + $0x98] sm:$0xff]
      %v358 = vld [vmem:[%s2 + $0xa0] sm:$0xff]
      %v359 = vld [vmem:[%s2 + $0xa8] sm:$0xff]
      %v360 = vld [vmem:[%s2 + $0xb0] sm:$0xff]
      %v361 = vld [vmem:[%s2 + $0xb8] sm:$0xff]
      %v362 = vld [vmem:[%s8] sm:$0xff]
      %vm363 = vcmask 523264
      %v365 = vsel %vm363, %v337, 0
      %367 = vmatprep.subr.mxu0 0.0
      %368 = vmatpush1.msra.mxu0 %v338
      %369 = vmatprep.subr.mxu0 0.0
      %370 = vmatpush1.msra.mxu0 %v339
      %371 = vmatprep.subr.mxu0 0.0
      %372 = vmatpush1.msra.mxu0 %v340
      %373 = vmatprep.subr.mxu0 0.0
      %374 = vmatpush1.msra.mxu0 %v341
      %375 = vmatprep.subr.mxu0 0.0
      %376 = vmatpush1.msra.mxu0 %v342
      %377 = vmatprep.subr.mxu0 0.0
      %378 = vmatpush1.msra.mxu0 %v343
      %379 = vmatprep.subr.mxu0 0.0
      %380 = vmatpush1.msra.mxu0 %v344
      %381 = vmatprep.subr.mxu0 0.0
      %382 = vmatpush1.msra.mxu0 %v345
      %383 = vmatprep.subr.mxu0 0.0
      %384 = vmatpush1.msra.mxu0 %v346
      %385 = vmatprep.subr.mxu0 0.0
      %386 = vmatpush1.msra.mxu0 %v347
      %387 = vmatprep.subr.mxu0 0.0
      %388 = vmatpush1.msra.mxu0 %v348
      %389 = vmatprep.subr.mxu0 0.0
      %390 = vmatpush1.msra.mxu0 %v349
      %391 = vmatprep.subr.mxu0 0.0
      %392 = vmatpush1.msra.mxu0 %v350
      %393 = vmatprep.subr.mxu0 0.0
      %394 = vmatpush1.msra.mxu0 %v351
      %395 = vmatprep.subr.mxu0 0.0
      %396 = vmatpush1.msra.mxu0 %v352
      %397 = vmatprep.subr.mxu0 0.0
      %398 = vmatpush1.msra.mxu0 %v353
      %399 = vmatprep.subr.mxu0 0.0
      %400 = vmatpush1.msra.mxu0 %v354
      %401 = vmatprep.subr.mxu0 0.0
      %402 = vmatpush1.msra.mxu0 %v355
      %403 = vmatprep.subr.mxu0 0.0
      %404 = vmatpush1.msra.mxu0 %v356
      %405 = vmatprep.subr.mxu0 0.0
      %406 = vmatpush1.msra.mxu0 %v357
      %407 = vmatprep.subr.mxu0 0.0
      %408 = vmatpush1.msra.mxu0 %v358
      %409 = vmatprep.subr.mxu0 0.0
      %410 = vmatpush1.msra.mxu0 %v359
      %411 = vmatprep.subr.mxu0 0.0
      %412 = vmatpush1.msra.mxu0 %v360
      %413 = vmatprep.subr.mxu0 0.0
      %414 = vmatpush1.msra.mxu0 %v361
      %415 = vmatprep.subr.mxu0 0.0
      %416 = vmatpush1.msra.mxu0 0.0
      %417 = vmatprep.subr.mxu0 0.0
      %418 = vmatpush1.msra.mxu0 0.0
      %419 = vmatprep.subr.mxu0 0.0
      %420 = vmatpush1.msra.mxu0 0.0
      %421 = vmatprep.subr.mxu0 0.0
      %422 = vmatpush1.msra.mxu0 0.0
      %423 = vmatprep.subr.mxu0 0.0
      %424 = vmatpush1.msra.mxu0 0.0
      %425 = vmatprep.subr.mxu0 0.0
      %426 = vmatpush1.msra.mxu0 0.0
      %427 = vmatprep.subr.mxu0 0.0
      %428 = vmatpush1.msra.mxu0 0.0
      %429 = vmatprep.subr.mxu0 0.0
      %430 = vmatpush1.msra.mxu0 0.0
      %431 = vmatprep.mubr.f32.mxu0 %v365
      %432 = vmatmul.mubr.f32.gmra.mrb[0].mxu0 %v336
      %v433 = vpop.f32.mrb[0].mxu0
      %v434 = vadd.f32 %v362, %v433
      %v435 = vpop.f32.mrb[0].mxu0
      %436 = vdwg.mxu0
      %v437 = vlaneseq
      %v438 = vand.u32 %v437, 127
      %vm439 = vcmp.lt.s32.totalorder %v438, 5
      %v440 = vsel %vm439, 0.0, -1e+30
      %v441 = vld [vmem:[%s8 + $0x8] sm:$0xff]
      %vm442 = vcmask 261120
      %v443 = vsel %vm442, %v434, 0.0
      %444 = vadd.xlane.f32.xlu0 %v443
      %v445 = vpop.xlane.xlu0 %444
      %v446 = vrcp.pop 32.0
      %v447 = vmul.f32 %v445, %v446
      %v448 = vsub.f32 %v434, %v447
      %v449 = vmul.f32 %v448, %v448
      %v450 = vsel %vm442, %v449, 0.0
      %451 = vadd.xlane.f32.xlu0 %v450
      %v452 = vpop.xlane.xlu0 %451
      %v453 = vmul.f32 %v452, %v446
      %v454 = vadd.f32 %v453, 1e-05
      %v455 = vrsqrt.pop %v454
      %v456 = vmul.f32 %v448, %v455
      %v457 = vlaneseq
      %v458 = vshrl.u32 %v457, 7
      %v459 = vsub.s32 0, %v458
      %v460 = vrot.slane %v441, %v459
      %v461 = vmul.f32 %v456, %v460
      %v462 = vlaneseq
      %v463 = vshrl.u32 %v462, 7
      %v464 = vsub.s32 1, %v463
      %v465 = vrot.slane %v441, %v464
      %v466 = vadd.f32 %v461, %v465
      %v467 = vld [vmem:[%s3] sm:$0xff]
      %v468 = vld [vmem:[%s3 + $0x8] sm:$0xff]
      %v469 = vld [vmem:[%s3 + $0x10] sm:$0xff]
      %v470 = vld [vmem:[%s3 + $0x18] sm:$0xff]
      %v471 = vld [vmem:[%s9] sm:$0x1]
      %v472 = vlaneseq
      %v473 = vshrl.u32 %v472, 7
      %v474 = vsub.s32 0, %v473
      %v475 = vrot.slane %v471, %v474
      %v477 = vsel %vm442, %v466, 0
      %479 = vmatprep.subr.mxu0 0.0
      %480 = vmatpush1.msra.mxu0 %v467
      %481 = vmatprep.subr.mxu0 0.0
      %482 = vmatpush1.msra.mxu0 %v468
      %483 = vmatprep.subr.mxu0 0.0
      %484 = vmatpush1.msra.mxu0 %v469
      %485 = vmatprep.subr.mxu0 0.0
      %486 = vmatpush1.msra.mxu0 %v470
      %487 = vmatprep.subr.mxu0 0.0
      %488 = vmatpush1.msra.mxu0 0.0
      %489 = vmatprep.subr.mxu0 0.0
      %490 = vmatpush1.msra.mxu0 0.0
      %491 = vmatprep.subr.mxu0 0.0
      %492 = vmatpush1.msra.mxu0 0.0
      %493 = vmatprep.subr.mxu0 0.0
      %494 = vmatpush1.msra.mxu0 0.0
      %495 = vmatprep.subr.mxu0 0.0
      %496 = vmatpush1.msra.mxu0 0.0
      %497 = vmatprep.subr.mxu0 0.0
      %498 = vmatpush1.msra.mxu0 0.0
      %499 = vmatprep.subr.mxu0 0.0
      %500 = vmatpush1.msra.mxu0 0.0
      %501 = vmatprep.subr.mxu0 0.0
      %502 = vmatpush1.msra.mxu0 0.0
      %503 = vmatprep.subr.mxu0 0.0
      %504 = vmatpush1.msra.mxu0 0.0
      %505 = vmatprep.subr.mxu0 0.0
      %506 = vmatpush1.msra.mxu0 0.0
      %507 = vmatprep.subr.mxu0 0.0
      %508 = vmatpush1.msra.mxu0 0.0
      %509 = vmatprep.subr.mxu0 0.0
      %510 = vmatpush1.msra.mxu0 0.0
      %511 = vmatprep.subr.mxu0 0.0
      %512 = vmatpush1.msra.mxu0 0.0
      %513 = vmatprep.subr.mxu0 0.0
      %514 = vmatpush1.msra.mxu0 0.0
      %515 = vmatprep.subr.mxu0 0.0
      %516 = vmatpush1.msra.mxu0 0.0
      %517 = vmatprep.subr.mxu0 0.0
      %518 = vmatpush1.msra.mxu0 0.0
      %519 = vmatprep.subr.mxu0 0.0
      %520 = vmatpush1.msra.mxu0 0.0
      %521 = vmatprep.subr.mxu0 0.0
      %522 = vmatpush1.msra.mxu0 0.0
      %523 = vmatprep.subr.mxu0 0.0
      %524 = vmatpush1.msra.mxu0 0.0
      %525 = vmatprep.subr.mxu0 0.0
      %526 = vmatpush1.msra.mxu0 0.0
      %527 = vmatprep.subr.mxu0 0.0
      %528 = vmatpush1.msra.mxu0 0.0
      %529 = vmatprep.subr.mxu0 0.0
      %530 = vmatpush1.msra.mxu0 0.0
      %531 = vmatprep.subr.mxu0 0.0
      %532 = vmatpush1.msra.mxu0 0.0
      %533 = vmatprep.subr.mxu0 0.0
      %534 = vmatpush1.msra.mxu0 0.0
      %535 = vmatprep.subr.mxu0 0.0
      %536 = vmatpush1.msra.mxu0 0.0
      %537 = vmatprep.subr.mxu0 0.0
      %538 = vmatpush1.msra.mxu0 0.0
      %539 = vmatprep.subr.mxu0 0.0
      %540 = vmatpush1.msra.mxu0 0.0
      %541 = vmatprep.subr.mxu0 0.0
      %542 = vmatpush1.msra.mxu0 0.0
      %543 = vmatprep.mubr.f32.mxu0 0.0
      %544 = vmatmul.mubr.f32.gmra.mrb[0].mxu0 %v477
      %v545 = vpop.f32.mrb[0].mxu0
      %v546 = vadd.f32 %v475, %v545
      %v547 = vpop.f32.mrb[0].mxu0
      %548 = vdwg.mxu0
      %550 = vrot.lane.b32.xlu0 %v546, 96
      %v551 = vpop.permute.xlu0 %550
      %vm552 = vcmask 64512
      %v553 = vsel %vm552, %v546, 0
      %v555 = vsel %vm552, %v551, 0
      %557 = vmatprep.subr.mxu0 0.0
      %558 = vmatpush1.xpose.msra.mxu0 %v555
      %559 = vmatprep.subr.mxu0 0.0
      %560 = vmatpush1.xpose.msra.mxu0 0.0
      %561 = vmatprep.subr.mxu0 0.0
      %562 = vmatpush1.xpose.msra.mxu0 0.0
      %563 = vmatprep.subr.mxu0 0.0
      %564 = vmatpush1.xpose.msra.mxu0 0.0
      %565 = vmatprep.subr.mxu0 0.0
      %566 = vmatpush1.xpose.msra.mxu0 0.0
      %567 = vmatprep.subr.mxu0 0.0
      %568 = vmatpush1.xpose.msra.mxu0 0.0
      %569 = vmatprep.subr.mxu0 0.0
      %570 = vmatpush1.xpose.msra.mxu0 0.0
      %571 = vmatprep.subr.mxu0 0.0
      %572 = vmatpush1.xpose.msra.mxu0 0.0
      %573 = vmatprep.subr.mxu0 0.0
      %574 = vmatpush1.xpose.msra.mxu0 0.0
      %575 = vmatprep.subr.mxu0 0.0
      %576 = vmatpush1.xpose.msra.mxu0 0.0
      %577 = vmatprep.subr.mxu0 0.0
      %578 = vmatpush1.xpose.msra.mxu0 0.0
      %579 = vmatprep.subr.mxu0 0.0
      %580 = vmatpush1.xpose.msra.mxu0 0.0
      %581 = vmatprep.subr.mxu0 0.0
      %582 = vmatpush1.xpose.msra.mxu0 0.0
      %583 = vmatprep.subr.mxu0 0.0
      %584 = vmatpush1.xpose.msra.mxu0 0.0
      %585 = vmatprep.subr.mxu0 0.0
      %586 = vmatpush1.xpose.msra.mxu0 0.0
      %587 = vmatprep.subr.mxu0 0.0
      %588 = vmatpush1.xpose.msra.mxu0 0.0
      %589 = vmatprep.subr.mxu0 0.0
      %590 = vmatpush1.xpose.msra.mxu0 0.0
      %591 = vmatprep.subr.mxu0 0.0
      %592 = vmatpush1.xpose.msra.mxu0 0.0
      %593 = vmatprep.subr.mxu0 0.0
      %594 = vmatpush1.xpose.msra.mxu0 0.0
      %595 = vmatprep.subr.mxu0 0.0
      %596 = vmatpush1.xpose.msra.mxu0 0.0
      %597 = vmatprep.subr.mxu0 0.0
      %598 = vmatpush1.xpose.msra.mxu0 0.0
      %599 = vmatprep.subr.mxu0 0.0
      %600 = vmatpush1.xpose.msra.mxu0 0.0
      %601 = vmatprep.subr.mxu0 0.0
      %602 = vmatpush1.xpose.msra.mxu0 0.0
      %603 = vmatprep.subr.mxu0 0.0
      %604 = vmatpush1.xpose.msra.mxu0 0.0
      %605 = vmatprep.subr.mxu0 0.0
      %606 = vmatpush1.xpose.msra.mxu0 0.0
      %607 = vmatprep.subr.mxu0 0.0
      %608 = vmatpush1.xpose.msra.mxu0 0.0
      %609 = vmatprep.subr.mxu0 0.0
      %610 = vmatpush1.xpose.msra.mxu0 0.0
      %611 = vmatprep.subr.mxu0 0.0
      %612 = vmatpush1.xpose.msra.mxu0 0.0
      %613 = vmatprep.subr.mxu0 0.0
      %614 = vmatpush1.xpose.msra.mxu0 0.0
      %615 = vmatprep.subr.mxu0 0.0
      %616 = vmatpush1.xpose.msra.mxu0 0.0
      %617 = vmatprep.subr.mxu0 0.0
      %618 = vmatpush1.xpose.msra.mxu0 0.0
      %619 = vmatprep.subr.mxu0 0.0
      %620 = vmatpush1.xpose.msra.mxu0 0.0
      %621 = vmatprep.mubr.f32.mxu0 0.0
      %622 = vmatmul.mubr.f32.gmra.mrb[0].mxu0 %v553
      %v623 = vpop.f32.mrb[0].mxu0
      %v624 = vadd.f32 %v440, %v623
      %v625 = vpop.f32.mrb[0].mxu0
      %626 = vdwg.mxu0
      %v627 = vsel %vm552, %v624, -inf
      %628 = vmax.xlane.f32.xlu0 %v627
      %v629 = vpop.xlane.xlu0 %628
      %v630 = vsub.f32 %v624, %v629
      %v631 = vmul.f32 %v630, 1.442695
      %v632 = vpow.pop %v631
      %v633 = vsel %vm552, %v632, 0.0
      %634 = vadd.xlane.f32.xlu0 %v633
      %v635 = vpop.xlane.xlu0 %634
      %v636 = vrcp.pop %v635
      %v637 = vmul.f32 %v632, %v636
      %638 = vrot.lane.b32.xlu0 %v546, 64
      %v639 = vpop.permute.xlu0 %638
      %v642 = vsel %vm552, %v637, 0
      %644 = vmatprep.subr.mxu0 0.0
      %645 = vmatpush1.msra.mxu0 %v639
      %646 = vmatprep.subr.mxu0 0.0
      %647 = vmatpush1.msra.mxu0 0.0
      %648 = vmatprep.subr.mxu0 0.0
      %649 = vmatpush1.msra.mxu0 0.0
      %650 = vmatprep.subr.mxu0 0.0
      %651 = vmatpush1.msra.mxu0 0.0
      %652 = vmatprep.subr.mxu0 0.0
      %653 = vmatpush1.msra.mxu0 0.0
      %654 = vmatprep.subr.mxu0 0.0
      %655 = vmatpush1.msra.mxu0 0.0
      %656 = vmatprep.subr.mxu0 0.0
      %657 = vmatpush1.msra.mxu0 0.0
      %658 = vmatprep.subr.mxu0 0.0
      %659 = vmatpush1.msra.mxu0 0.0
      %660 = vmatprep.subr.mxu0 0.0
      %661 = vmatpush1.msra.mxu0 0.0
      %662 = vmatprep.subr.mxu0 0.0
      %663 = vmatpush1.msra.mxu0 0.0
      %664 = vmatprep.subr.mxu0 0.0
      %665 = vmatpush1.msra.mxu0 0.0
      %666 = vmatprep.subr.mxu0 0.0
      %667 = vmatpush1.msra.mxu0 0.0
      %668 = vmatprep.subr.mxu0 0.0
      %669 = vmatpush1.msra.mxu0 0.0
      %670 = vmatprep.subr.mxu0 0.0
      %671 = vmatpush1.msra.mxu0 0.0
      %672 = vmatprep.subr.mxu0 0.0
      %673 = vmatpush1.msra.mxu0 0.0
      %674 = vmatprep.subr.mxu0 0.0
      %675 = vmatpush1.msra.mxu0 0.0
      %676 = vmatprep.subr.mxu0 0.0
      %677 = vmatpush1.msra.mxu0 0.0
      %678 = vmatprep.subr.mxu0 0.0
      %679 = vmatpush1.msra.mxu0 0.0
      %680 = vmatprep.subr.mxu0 0.0
      %681 = vmatpush1.msra.mxu0 0.0
      %682 = vmatprep.subr.mxu0 0.0
      %683 = vmatpush1.msra.mxu0 0.0
      %684 = vmatprep.subr.mxu0 0.0
      %685 = vmatpush1.msra.mxu0 0.0
      %686 = vmatprep.subr.mxu0 0.0
      %687 = vmatpush1.msra.mxu0 0.0
      %688 = vmatprep.subr.mxu0 0.0
      %689 = vmatpush1.msra.mxu0 0.0
      %690 = vmatprep.subr.mxu0 0.0
      %691 = vmatpush1.msra.mxu0 0.0
      %692 = vmatprep.subr.mxu0 0.0
      %693 = vmatpush1.msra.mxu0 0.0
      %694 = vmatprep.subr.mxu0 0.0
      %695 = vmatpush1.msra.mxu0 0.0
      %696 = vmatprep.subr.mxu0 0.0
      %697 = vmatpush1.msra.mxu0 0.0
      %698 = vmatprep.subr.mxu0 0.0
      %699 = vmatpush1.msra.mxu0 0.0
      %700 = vmatprep.subr.mxu0 0.0
      %701 = vmatpush1.msra.mxu0 0.0
      %702 = vmatprep.subr.mxu0 0.0
      %703 = vmatpush1.msra.mxu0 0.0
      %704 = vmatprep.subr.mxu0 0.0
      %705 = vmatpush1.msra.mxu0 0.0
      %706 = vmatprep.subr.mxu0 0.0
      %707 = vmatpush1.msra.mxu0 0.0
      %708 = vmatprep.mubr.f32.mxu0 0.0
      %709 = vmatmul.mubr.f32.gmra.mrb[0].mxu0 %v642
      %v710 = vpop.f32.mrb[0].mxu0
      %v711 = vadd.f32 0.0, %v710
      %v712 = vpop.f32.mrb[0].mxu0
      %713 = vdwg.mxu0
      %714 = vrot.lane.b32.xlu0 %v546, 120
      %v715 = vpop.permute.xlu0 %714
      %716 = vrot.lane.b32.xlu0 %v546, 88
      %v717 = vpop.permute.xlu0 %716
      %v718 = vsel %vm552, %v715, 0
      %v720 = vsel %vm552, %v717, 0
      %722 = vmatprep.subr.mxu0 0.0
      %723 = vmatpush1.xpose.msra.mxu0 %v720
      %724 = vmatprep.subr.mxu0 0.0
      %725 = vmatpush1.xpose.msra.mxu0 0.0
      %726 = vmatprep.subr.mxu0 0.0
      %727 = vmatpush1.xpose.msra.mxu0 0.0
      %728 = vmatprep.subr.mxu0 0.0
      %729 = vmatpush1.xpose.msra.mxu0 0.0
      %730 = vmatprep.subr.mxu0 0.0
      %731 = vmatpush1.xpose.msra.mxu0 0.0
      %732 = vmatprep.subr.mxu0 0.0
      %733 = vmatpush1.xpose.msra.mxu0 0.0
      %734 = vmatprep.subr.mxu0 0.0
      %735 = vmatpush1.xpose.msra.mxu0 0.0
      %736 = vmatprep.subr.mxu0 0.0
      %737 = vmatpush1.xpose.msra.mxu0 0.0
      %738 = vmatprep.subr.mxu0 0.0
      %739 = vmatpush1.xpose.msra.mxu0 0.0
      %740 = vmatprep.subr.mxu0 0.0
      %741 = vmatpush1.xpose.msra.mxu0 0.0
      %742 = vmatprep.subr.mxu0 0.0
      %743 = vmatpush1.xpose.msra.mxu0 0.0
      %744 = vmatprep.subr.mxu0 0.0
      %745 = vmatpush1.xpose.msra.mxu0 0.0
      %746 = vmatprep.subr.mxu0 0.0
      %747 = vmatpush1.xpose.msra.mxu0 0.0
      %748 = vmatprep.subr.mxu0 0.0
      %749 = vmatpush1.xpose.msra.mxu0 0.0
      %750 = vmatprep.subr.mxu0 0.0
      %751 = vmatpush1.xpose.msra.mxu0 0.0
      %752 = vmatprep.subr.mxu0 0.0
      %753 = vmatpush1.xpose.msra.mxu0 0.0
      %754 = vmatprep.subr.mxu0 0.0
      %755 = vmatpush1.xpose.msra.mxu0 0.0
      %756 = vmatprep.subr.mxu0 0.0
      %757 = vmatpush1.xpose.msra.mxu0 0.0
      %758 = vmatprep.subr.mxu0 0.0
      %759 = vmatpush1.xpose.msra.mxu0 0.0
      %760 = vmatprep.subr.mxu0 0.0
      %761 = vmatpush1.xpose.msra.mxu0 0.0
      %762 = vmatprep.subr.mxu0 0.0
      %763 = vmatpush1.xpose.msra.mxu0 0.0
      %764 = vmatprep.subr.mxu0 0.0
      %765 = vmatpush1.xpose.msra.mxu0 0.0
      %766 = vmatprep.subr.mxu0 0.0
      %767 = vmatpush1.xpose.msra.mxu0 0.0
      %768 = vmatprep.subr.mxu0 0.0
      %769 = vmatpush1.xpose.msra.mxu0 0.0
      %770 = vmatprep.subr.mxu0 0.0
      %771 = vmatpush1.xpose.msra.mxu0 0.0
      %772 = vmatprep.subr.mxu0 0.0
      %773 = vmatpush1.xpose.msra.mxu0 0.0
      %774 = vmatprep.subr.mxu0 0.0
      %775 = vmatpush1.xpose.msra.mxu0 0.0
      %776 = vmatprep.subr.mxu0 0.0
      %777 = vmatpush1.xpose.msra.mxu0 0.0
      %778 = vmatprep.subr.mxu0 0.0
      %779 = vmatpush1.xpose.msra.mxu0 0.0
      %780 = vmatprep.subr.mxu0 0.0
      %781 = vmatpush1.xpose.msra.mxu0 0.0
      %782 = vmatprep.subr.mxu0 0.0
      %783 = vmatpush1.xpose.msra.mxu0 0.0
      %784 = vmatprep.subr.mxu0 0.0
      %785 = vmatpush1.xpose.msra.mxu0 0.0
      %786 = vmatprep.mubr.f32.mxu0 0.0
      %787 = vmatmul.mubr.f32.gmra.mrb[0].mxu0 %v718
      %v788 = vpop.f32.mrb[0].mxu0
      %v789 = vadd.f32 %v440, %v788
      %v790 = vpop.f32.mrb[0].mxu0
      %791 = vdwg.mxu0
      %v792 = vsel %vm552, %v789, -inf
      %793 = vmax.xlane.f32.xlu0 %v792
      %v794 = vpop.xlane.xlu0 %793
      %v795 = vsub.f32 %v789, %v794
      %v796 = vmul.f32 %v795, 1.442695
      %v797 = vpow.pop %v796
      %v798 = vsel %vm552, %v797, 0.0
      %799 = vadd.xlane.f32.xlu0 %v798
      %v800 = vpop.xlane.xlu0 %799
      %v801 = vrcp.pop %v800
      %v802 = vmul.f32 %v797, %v801
      %803 = vrot.lane.b32.xlu0 %v546, 56
      %v804 = vpop.permute.xlu0 %803
      %v807 = vsel %vm552, %v802, 0
      %809 = vmatprep.subr.mxu0 0.0
      %810 = vmatpush1.msra.mxu0 %v804
      %811 = vmatprep.subr.mxu0 0.0
      %812 = vmatpush1.msra.mxu0 0.0
      %813 = vmatprep.subr.mxu0 0.0
      %814 = vmatpush1.msra.mxu0 0.0
      %815 = vmatprep.subr.mxu0 0.0
      %816 = vmatpush1.msra.mxu0 0.0
      %817 = vmatprep.subr.mxu0 0.0
      %818 = vmatpush1.msra.mxu0 0.0
      %819 = vmatprep.subr.mxu0 0.0
      %820 = vmatpush1.msra.mxu0 0.0
      %821 = vmatprep.subr.mxu0 0.0
      %822 = vmatpush1.msra.mxu0 0.0
      %823 = vmatprep.subr.mxu0 0.0
      %824 = vmatpush1.msra.mxu0 0.0
      %825 = vmatprep.subr.mxu0 0.0
      %826 = vmatpush1.msra.mxu0 0.0
      %827 = vmatprep.subr.mxu0 0.0
      %828 = vmatpush1.msra.mxu0 0.0
      %829 = vmatprep.subr.mxu0 0.0
      %830 = vmatpush1.msra.mxu0 0.0
      %831 = vmatprep.subr.mxu0 0.0
      %832 = vmatpush1.msra.mxu0 0.0
      %833 = vmatprep.subr.mxu0 0.0
      %834 = vmatpush1.msra.mxu0 0.0
      %835 = vmatprep.subr.mxu0 0.0
      %836 = vmatpush1.msra.mxu0 0.0
      %837 = vmatprep.subr.mxu0 0.0
      %838 = vmatpush1.msra.mxu0 0.0
      %839 = vmatprep.subr.mxu0 0.0
      %840 = vmatpush1.msra.mxu0 0.0
      %841 = vmatprep.subr.mxu0 0.0
      %842 = vmatpush1.msra.mxu0 0.0
      %843 = vmatprep.subr.mxu0 0.0
      %844 = vmatpush1.msra.mxu0 0.0
      %845 = vmatprep.subr.mxu0 0.0
      %846 = vmatpush1.msra.mxu0 0.0
      %847 = vmatprep.subr.mxu0 0.0
      %848 = vmatpush1.msra.mxu0 0.0
      %849 = vmatprep.subr.mxu0 0.0
      %850 = vmatpush1.msra.mxu0 0.0
      %851 = vmatprep.subr.mxu0 0.0
      %852 = vmatpush1.msra.mxu0 0.0
      %853 = vmatprep.subr.mxu0 0.0
      %854 = vmatpush1.msra.mxu0 0.0
      %855 = vmatprep.subr.mxu0 0.0
      %856 = vmatpush1.msra.mxu0 0.0
      %857 = vmatprep.subr.mxu0 0.0
      %858 = vmatpush1.msra.mxu0 0.0
      %859 = vmatprep.subr.mxu0 0.0
      %860 = vmatpush1.msra.mxu0 0.0
      %861 = vmatprep.subr.mxu0 0.0
      %862 = vmatpush1.msra.mxu0 0.0
      %863 = vmatprep.subr.mxu0 0.0
      %864 = vmatpush1.msra.mxu0 0.0
      %865 = vmatprep.subr.mxu0 0.0
      %866 = vmatpush1.msra.mxu0 0.0
      %867 = vmatprep.subr.mxu0 0.0
      %868 = vmatpush1.msra.mxu0 0.0
      %869 = vmatprep.subr.mxu0 0.0
      %870 = vmatpush1.msra.mxu0 0.0
      %871 = vmatprep.subr.mxu0 0.0
      %872 = vmatpush1.msra.mxu0 0.0
      %873 = vmatprep.mubr.f32.mxu0 0.0
      %874 = vmatmul.mubr.f32.gmra.mrb[0].mxu0 %v807
      %v875 = vpop.f32.mrb[0].mxu0
      %v876 = vadd.f32 0.0, %v875
      %v877 = vpop.f32.mrb[0].mxu0
      %878 = vdwg.mxu0
      %879 = vrot.lane.b32.xlu0 %v546, 112
      %v880 = vpop.permute.xlu0 %879
      %881 = vrot.lane.b32.xlu0 %v546, 80
      %v882 = vpop.permute.xlu0 %881
      %v883 = vsel %vm552, %v880, 0
      %v885 = vsel %vm552, %v882, 0
      %887 = vmatprep.subr.mxu0 0.0
      %888 = vmatpush1.xpose.msra.mxu0 %v885
      %889 = vmatprep.subr.mxu0 0.0
      %890 = vmatpush1.xpose.msra.mxu0 0.0
      %891 = vmatprep.subr.mxu0 0.0
      %892 = vmatpush1.xpose.msra.mxu0 0.0
      %893 = vmatprep.subr.mxu0 0.0
      %894 = vmatpush1.xpose.msra.mxu0 0.0
      %895 = vmatprep.subr.mxu0 0.0
      %896 = vmatpush1.xpose.msra.mxu0 0.0
      %897 = vmatprep.subr.mxu0 0.0
      %898 = vmatpush1.xpose.msra.mxu0 0.0
      %899 = vmatprep.subr.mxu0 0.0
      %900 = vmatpush1.xpose.msra.mxu0 0.0
      %901 = vmatprep.subr.mxu0 0.0
      %902 = vmatpush1.xpose.msra.mxu0 0.0
      %903 = vmatprep.subr.mxu0 0.0
      %904 = vmatpush1.xpose.msra.mxu0 0.0
      %905 = vmatprep.subr.mxu0 0.0
      %906 = vmatpush1.xpose.msra.mxu0 0.0
      %907 = vmatprep.subr.mxu0 0.0
      %908 = vmatpush1.xpose.msra.mxu0 0.0
      %909 = vmatprep.subr.mxu0 0.0
      %910 = vmatpush1.xpose.msra.mxu0 0.0
      %911 = vmatprep.subr.mxu0 0.0
      %912 = vmatpush1.xpose.msra.mxu0 0.0
      %913 = vmatprep.subr.mxu0 0.0
      %914 = vmatpush1.xpose.msra.mxu0 0.0
      %915 = vmatprep.subr.mxu0 0.0
      %916 = vmatpush1.xpose.msra.mxu0 0.0
      %917 = vmatprep.subr.mxu0 0.0
      %918 = vmatpush1.xpose.msra.mxu0 0.0
      %919 = vmatprep.subr.mxu0 0.0
      %920 = vmatpush1.xpose.msra.mxu0 0.0
      %921 = vmatprep.subr.mxu0 0.0
      %922 = vmatpush1.xpose.msra.mxu0 0.0
      %923 = vmatprep.subr.mxu0 0.0
      %924 = vmatpush1.xpose.msra.mxu0 0.0
      %925 = vmatprep.subr.mxu0 0.0
      %926 = vmatpush1.xpose.msra.mxu0 0.0
      %927 = vmatprep.subr.mxu0 0.0
      %928 = vmatpush1.xpose.msra.mxu0 0.0
      %929 = vmatprep.subr.mxu0 0.0
      %930 = vmatpush1.xpose.msra.mxu0 0.0
      %931 = vmatprep.subr.mxu0 0.0
      %932 = vmatpush1.xpose.msra.mxu0 0.0
      %933 = vmatprep.subr.mxu0 0.0
      %934 = vmatpush1.xpose.msra.mxu0 0.0
      %935 = vmatprep.subr.mxu0 0.0
      %936 = vmatpush1.xpose.msra.mxu0 0.0
      %937 = vmatprep.subr.mxu0 0.0
      %938 = vmatpush1.xpose.msra.mxu0 0.0
      %939 = vmatprep.subr.mxu0 0.0
      %940 = vmatpush1.xpose.msra.mxu0 0.0
      %941 = vmatprep.subr.mxu0 0.0
      %942 = vmatpush1.xpose.msra.mxu0 0.0
      %943 = vmatprep.subr.mxu0 0.0
      %944 = vmatpush1.xpose.msra.mxu0 0.0
      %945 = vmatprep.subr.mxu0 0.0
      %946 = vmatpush1.xpose.msra.mxu0 0.0
      %947 = vmatprep.subr.mxu0 0.0
      %948 = vmatpush1.xpose.msra.mxu0 0.0
      %949 = vmatprep.subr.mxu0 0.0
      %950 = vmatpush1.xpose.msra.mxu0 0.0
      %951 = vmatprep.mubr.f32.mxu0 0.0
      %952 = vmatmul.mubr.f32.gmra.mrb[0].mxu0 %v883
      %v953 = vpop.f32.mrb[0].mxu0
      %v954 = vadd.f32 %v440, %v953
      %v955 = vpop.f32.mrb[0].mxu0
      %956 = vdwg.mxu0
      %v957 = vsel %vm552, %v954, -inf
      %958 = vmax.xlane.f32.xlu0 %v957
      %v959 = vpop.xlane.xlu0 %958
      %v960 = vsub.f32 %v954, %v959
      %v961 = vmul.f32 %v960, 1.442695
      %v962 = vpow.pop %v961
      %v963 = vsel %vm552, %v962, 0.0
      %964 = vadd.xlane.f32.xlu0 %v963
      %v965 = vpop.xlane.xlu0 %964
      %v966 = vrcp.pop %v965
      %v967 = vmul.f32 %v962, %v966
      %968 = vrot.lane.b32.xlu0 %v546, 48
      %v969 = vpop.permute.xlu0 %968
      %v972 = vsel %vm552, %v967, 0
      %974 = vmatprep.subr.mxu0 0.0
      %975 = vmatpush1.msra.mxu0 %v969
      %976 = vmatprep.subr.mxu0 0.0
      %977 = vmatpush1.msra.mxu0 0.0
      %978 = vmatprep.subr.mxu0 0.0
      %979 = vmatpush1.msra.mxu0 0.0
      %980 = vmatprep.subr.mxu0 0.0
      %981 = vmatpush1.msra.mxu0 0.0
      %982 = vmatprep.subr.mxu0 0.0
      %983 = vmatpush1.msra.mxu0 0.0
      %984 = vmatprep.subr.mxu0 0.0
      %985 = vmatpush1.msra.mxu0 0.0
      %986 = vmatprep.subr.mxu0 0.0
      %987 = vmatpush1.msra.mxu0 0.0
      %988 = vmatprep.subr.mxu0 0.0
      %989 = vmatpush1.msra.mxu0 0.0
      %990 = vmatprep.subr.mxu0 0.0
      %991 = vmatpush1.msra.mxu0 0.0
      %992 = vmatprep.subr.mxu0 0.0
      %993 = vmatpush1.msra.mxu0 0.0
      %994 = vmatprep.subr.mxu0 0.0
      %995 = vmatpush1.msra.mxu0 0.0
      %996 = vmatprep.subr.mxu0 0.0
      %997 = vmatpush1.msra.mxu0 0.0
      %998 = vmatprep.subr.mxu0 0.0
      %999 = vmatpush1.msra.mxu0 0.0
      %1000 = vmatprep.subr.mxu0 0.0
      %1001 = vmatpush1.msra.mxu0 0.0
      %1002 = vmatprep.subr.mxu0 0.0
      %1003 = vmatpush1.msra.mxu0 0.0
      %1004 = vmatprep.subr.mxu0 0.0
      %1005 = vmatpush1.msra.mxu0 0.0
      %1006 = vmatprep.subr.mxu0 0.0
      %1007 = vmatpush1.msra.mxu0 0.0
      %1008 = vmatprep.subr.mxu0 0.0
      %1009 = vmatpush1.msra.mxu0 0.0
      %1010 = vmatprep.subr.mxu0 0.0
      %1011 = vmatpush1.msra.mxu0 0.0
      %1012 = vmatprep.subr.mxu0 0.0
      %1013 = vmatpush1.msra.mxu0 0.0
      %1014 = vmatprep.subr.mxu0 0.0
      %1015 = vmatpush1.msra.mxu0 0.0
      %1016 = vmatprep.subr.mxu0 0.0
      %1017 = vmatpush1.msra.mxu0 0.0
      %1018 = vmatprep.subr.mxu0 0.0
      %1019 = vmatpush1.msra.mxu0 0.0
      %1020 = vmatprep.subr.mxu0 0.0
      %1021 = vmatpush1.msra.mxu0 0.0
      %1022 = vmatprep.subr.mxu0 0.0
      %1023 = vmatpush1.msra.mxu0 0.0
      %1024 = vmatprep.subr.mxu0 0.0
      %1025 = vmatpush1.msra.mxu0 0.0
      %1026 = vmatprep.subr.mxu0 0.0
      %1027 = vmatpush1.msra.mxu0 0.0
      %1028 = vmatprep.subr.mxu0 0.0
      %1029 = vmatpush1.msra.mxu0 0.0
      %1030 = vmatprep.subr.mxu0 0.0
      %1031 = vmatpush1.msra.mxu0 0.0
      %1032 = vmatprep.subr.mxu0 0.0
      %1033 = vmatpush1.msra.mxu0 0.0
      %1034 = vmatprep.subr.mxu0 0.0
      %1035 = vmatpush1.msra.mxu0 0.0
      %1036 = vmatprep.subr.mxu0 0.0
      %1037 = vmatpush1.msra.mxu0 0.0
      %1038 = vmatprep.mubr.f32.mxu0 0.0
      %1039 = vmatmul.mubr.f32.gmra.mrb[0].mxu0 %v972
      %v1040 = vpop.f32.mrb[0].mxu0
      %v1041 = vadd.f32 0.0, %v1040
      %v1042 = vpop.f32.mrb[0].mxu0
      %1043 = vdwg.mxu0
      %1044 = vrot.lane.b32.xlu0 %v546, 104
      %v1045 = vpop.permute.xlu0 %1044
      %1046 = vrot.lane.b32.xlu0 %v546, 72
      %v1047 = vpop.permute.xlu0 %1046
      %v1048 = vsel %vm552, %v1045, 0
      %v1050 = vsel %vm552, %v1047, 0
      %1052 = vmatprep.subr.mxu0 0.0
      %1053 = vmatpush1.xpose.msra.mxu0 %v1050
      %1054 = vmatprep.subr.mxu0 0.0
      %1055 = vmatpush1.xpose.msra.mxu0 0.0
      %1056 = vmatprep.subr.mxu0 0.0
      %1057 = vmatpush1.xpose.msra.mxu0 0.0
      %1058 = vmatprep.subr.mxu0 0.0
      %1059 = vmatpush1.xpose.msra.mxu0 0.0
      %1060 = vmatprep.subr.mxu0 0.0
      %1061 = vmatpush1.xpose.msra.mxu0 0.0
      %1062 = vmatprep.subr.mxu0 0.0
      %1063 = vmatpush1.xpose.msra.mxu0 0.0
      %1064 = vmatprep.subr.mxu0 0.0
      %1065 = vmatpush1.xpose.msra.mxu0 0.0
      %1066 = vmatprep.subr.mxu0 0.0
      %1067 = vmatpush1.xpose.msra.mxu0 0.0
      %1068 = vmatprep.subr.mxu0 0.0
      %1069 = vmatpush1.xpose.msra.mxu0 0.0
      %1070 = vmatprep.subr.mxu0 0.0
      %1071 = vmatpush1.xpose.msra.mxu0 0.0
      %1072 = vmatprep.subr.mxu0 0.0
      %1073 = vmatpush1.xpose.msra.mxu0 0.0
      %1074 = vmatprep.subr.mxu0 0.0
      %1075 = vmatpush1.xpose.msra.mxu0 0.0
      %1076 = vmatprep.subr.mxu0 0.0
      %1077 = vmatpush1.xpose.msra.mxu0 0.0
      %1078 = vmatprep.subr.mxu0 0.0
      %1079 = vmatpush1.xpose.msra.mxu0 0.0
      %1080 = vmatprep.subr.mxu0 0.0
      %1081 = vmatpush1.xpose.msra.mxu0 0.0
      %1082 = vmatprep.subr.mxu0 0.0
      %1083 = vmatpush1.xpose.msra.mxu0 0.0
      %1084 = vmatprep.subr.mxu0 0.0
      %1085 = vmatpush1.xpose.msra.mxu0 0.0
      %1086 = vmatprep.subr.mxu0 0.0
      %1087 = vmatpush1.xpose.msra.mxu0 0.0
      %1088 = vmatprep.subr.mxu0 0.0
      %1089 = vmatpush1.xpose.msra.mxu0 0.0
      %1090 = vmatprep.subr.mxu0 0.0
      %1091 = vmatpush1.xpose.msra.mxu0 0.0
      %1092 = vmatprep.subr.mxu0 0.0
      %1093 = vmatpush1.xpose.msra.mxu0 0.0
      %1094 = vmatprep.subr.mxu0 0.0
      %1095 = vmatpush1.xpose.msra.mxu0 0.0
      %1096 = vmatprep.subr.mxu0 0.0
      %1097 = vmatpush1.xpose.msra.mxu0 0.0
      %1098 = vmatprep.subr.mxu0 0.0
      %1099 = vmatpush1.xpose.msra.mxu0 0.0
      %1100 = vmatprep.subr.mxu0 0.0
      %1101 = vmatpush1.xpose.msra.mxu0 0.0
      %1102 = vmatprep.subr.mxu0 0.0
      %1103 = vmatpush1.xpose.msra.mxu0 0.0
      %1104 = vmatprep.subr.mxu0 0.0
      %1105 = vmatpush1.xpose.msra.mxu0 0.0
      %1106 = vmatprep.subr.mxu0 0.0
      %1107 = vmatpush1.xpose.msra.mxu0 0.0
      %1108 = vmatprep.subr.mxu0 0.0
      %1109 = vmatpush1.xpose.msra.mxu0 0.0
      %1110 = vmatprep.subr.mxu0 0.0
      %1111 = vmatpush1.xpose.msra.mxu0 0.0
      %1112 = vmatprep.subr.mxu0 0.0
      %1113 = vmatpush1.xpose.msra.mxu0 0.0
      %1114 = vmatprep.subr.mxu0 0.0
      %1115 = vmatpush1.xpose.msra.mxu0 0.0
      %1116 = vmatprep.mubr.f32.mxu0 0.0
      %1117 = vmatmul.mubr.f32.gmra.mrb[0].mxu0 %v1048
      %v1118 = vpop.f32.mrb[0].mxu0
      %v1119 = vadd.f32 %v440, %v1118
      %v1120 = vpop.f32.mrb[0].mxu0
      %1121 = vdwg.mxu0
      %v1122 = vsel %vm552, %v1119, -inf
      %1123 = vmax.xlane.f32.xlu0 %v1122
      %v1124 = vpop.xlane.xlu0 %1123
      %v1125 = vsub.f32 %v1119, %v1124
      %v1126 = vmul.f32 %v1125, 1.442695
      %v1127 = vpow.pop %v1126
      %v1128 = vsel %vm552, %v1127, 0.0
      %1129 = vadd.xlane.f32.xlu0 %v1128
      %v1130 = vpop.xlane.xlu0 %1129
      %v1131 = vrcp.pop %v1130
      %v1132 = vmul.f32 %v1127, %v1131
      %1133 = vrot.lane.b32.xlu0 %v546, 40
      %v1134 = vpop.permute.xlu0 %1133
      %v1137 = vsel %vm552, %v1132, 0
      %1139 = vmatprep.subr.mxu0 0.0
      %1140 = vmatpush1.msra.mxu0 %v1134
      %1141 = vmatprep.subr.mxu0 0.0
      %1142 = vmatpush1.msra.mxu0 0.0
      %1143 = vmatprep.subr.mxu0 0.0
      %1144 = vmatpush1.msra.mxu0 0.0
      %1145 = vmatprep.subr.mxu0 0.0
      %1146 = vmatpush1.msra.mxu0 0.0
      %1147 = vmatprep.subr.mxu0 0.0
      %1148 = vmatpush1.msra.mxu0 0.0
      %1149 = vmatprep.subr.mxu0 0.0
      %1150 = vmatpush1.msra.mxu0 0.0
      %1151 = vmatprep.subr.mxu0 0.0
      %1152 = vmatpush1.msra.mxu0 0.0
      %1153 = vmatprep.subr.mxu0 0.0
      %1154 = vmatpush1.msra.mxu0 0.0
      %1155 = vmatprep.subr.mxu0 0.0
      %1156 = vmatpush1.msra.mxu0 0.0
      %1157 = vmatprep.subr.mxu0 0.0
      %1158 = vmatpush1.msra.mxu0 0.0
      %1159 = vmatprep.subr.mxu0 0.0
      %1160 = vmatpush1.msra.mxu0 0.0
      %1161 = vmatprep.subr.mxu0 0.0
      %1162 = vmatpush1.msra.mxu0 0.0
      %1163 = vmatprep.subr.mxu0 0.0
      %1164 = vmatpush1.msra.mxu0 0.0
      %1165 = vmatprep.subr.mxu0 0.0
      %1166 = vmatpush1.msra.mxu0 0.0
      %1167 = vmatprep.subr.mxu0 0.0
      %1168 = vmatpush1.msra.mxu0 0.0
      %1169 = vmatprep.subr.mxu0 0.0
      %1170 = vmatpush1.msra.mxu0 0.0
      %1171 = vmatprep.subr.mxu0 0.0
      %1172 = vmatpush1.msra.mxu0 0.0
      %1173 = vmatprep.subr.mxu0 0.0
      %1174 = vmatpush1.msra.mxu0 0.0
      %1175 = vmatprep.subr.mxu0 0.0
      %1176 = vmatpush1.msra.mxu0 0.0
      %1177 = vmatprep.subr.mxu0 0.0
      %1178 = vmatpush1.msra.mxu0 0.0
      %1179 = vmatprep.subr.mxu0 0.0
      %1180 = vmatpush1.msra.mxu0 0.0
      %1181 = vmatprep.subr.mxu0 0.0
      %1182 = vmatpush1.msra.mxu0 0.0
      %1183 = vmatprep.subr.mxu0 0.0
      %1184 = vmatpush1.msra.mxu0 0.0
      %1185 = vmatprep.subr.mxu0 0.0
      %1186 = vmatpush1.msra.mxu0 0.0
      %1187 = vmatprep.subr.mxu0 0.0
      %1188 = vmatpush1.msra.mxu0 0.0
      %1189 = vmatprep.subr.mxu0 0.0
      %1190 = vmatpush1.msra.mxu0 0.0
      %1191 = vmatprep.subr.mxu0 0.0
      %1192 = vmatpush1.msra.mxu0 0.0
      %1193 = vmatprep.subr.mxu0 0.0
      %1194 = vmatpush1.msra.mxu0 0.0
      %1195 = vmatprep.subr.mxu0 0.0
      %1196 = vmatpush1.msra.mxu0 0.0
      %1197 = vmatprep.subr.mxu0 0.0
      %1198 = vmatpush1.msra.mxu0 0.0
      %1199 = vmatprep.subr.mxu0 0.0
      %1200 = vmatpush1.msra.mxu0 0.0
      %1201 = vmatprep.subr.mxu0 0.0
      %1202 = vmatpush1.msra.mxu0 0.0
      %1203 = vmatprep.mubr.f32.mxu0 0.0
      %1204 = vmatmul.mubr.f32.gmra.mrb[0].mxu0 %v1137
      %v1205 = vpop.f32.mrb[0].mxu0
      %v1206 = vadd.f32 0.0, %v1205
      %v1207 = vpop.f32.mrb[0].mxu0
      %1208 = vdwg.mxu0
      %1210 = vrot.lane.b32.xlu0 %v876, 8
      %v1211 = vpop.permute.xlu0 %1210
      %1214 = vrot.lane.b32.xlu0 %v1041, 16
      %v1215 = vpop.permute.xlu0 %1214
      %1218 = vrot.lane.b32.xlu0 %v1206, 24
      %v1219 = vpop.permute.xlu0 %1218
      %v1221 = vsel %vm552, %v711, %v1211
      %vm1222 = vcmask 130048
      %v1223 = vsel %vm1222, %v1221, %v1215
      %vm1224 = vcmask 195584
      %v1225 = vsel %vm1224, %v1223, %v1219
      %v1226 = vld [vmem:[%s4] sm:$0xff]
      %v1227 = vld [vmem:[%s4 + $0x8] sm:$0xff]
      %v1228 = vld [vmem:[%s4 + $0x10] sm:$0xff]
      %v1229 = vld [vmem:[%s4 + $0x18] sm:$0xff]
      %v1231 = vsel %vm442, %v1225, 0
      %1233 = vmatprep.subr.mxu0 0.0
      %1234 = vmatpush1.msra.mxu0 %v1226
      %1235 = vmatprep.subr.mxu0 0.0
      %1236 = vmatpush1.msra.mxu0 %v1227
      %1237 = vmatprep.subr.mxu0 0.0
      %1238 = vmatpush1.msra.mxu0 %v1228
      %1239 = vmatprep.subr.mxu0 0.0
      %1240 = vmatpush1.msra.mxu0 %v1229
      %1241 = vmatprep.subr.mxu0 0.0
      %1242 = vmatpush1.msra.mxu0 0.0
      %1243 = vmatprep.subr.mxu0 0.0
      %1244 = vmatpush1.msra.mxu0 0.0
      %1245 = vmatprep.subr.mxu0 0.0
      %1246 = vmatpush1.msra.mxu0 0.0
      %1247 = vmatprep.subr.mxu0 0.0
      %1248 = vmatpush1.msra.mxu0 0.0
      %1249 = vmatprep.subr.mxu0 0.0
      %1250 = vmatpush1.msra.mxu0 0.0
      %1251 = vmatprep.subr.mxu0 0.0
      %1252 = vmatpush1.msra.mxu0 0.0
      %1253 = vmatprep.subr.mxu0 0.0
      %1254 = vmatpush1.msra.mxu0 0.0
      %1255 = vmatprep.subr.mxu0 0.0
      %1256 = vmatpush1.msra.mxu0 0.0
      %1257 = vmatprep.subr.mxu0 0.0
      %1258 = vmatpush1.msra.mxu0 0.0
      %1259 = vmatprep.subr.mxu0 0.0
      %1260 = vmatpush1.msra.mxu0 0.0
      %1261 = vmatprep.subr.mxu0 0.0
      %1262 = vmatpush1.msra.mxu0 0.0
      %1263 = vmatprep.subr.mxu0 0.0
      %1264 = vmatpush1.msra.mxu0 0.0
      %1265 = vmatprep.subr.mxu0 0.0
      %1266 = vmatpush1.msra.mxu0 0.0
      %1267 = vmatprep.subr.mxu0 0.0
      %1268 = vmatpush1.msra.mxu0 0.0
      %1269 = vmatprep.subr.mxu0 0.0
      %1270 = vmatpush1.msra.mxu0 0.0
      %1271 = vmatprep.subr.mxu0 0.0
      %1272 = vmatpush1.msra.mxu0 0.0
      %1273 = vmatprep.subr.mxu0 0.0
      %1274 = vmatpush1.msra.mxu0 0.0
      %1275 = vmatprep.subr.mxu0 0.0
      %1276 = vmatpush1.msra.mxu0 0.0
      %1277 = vmatprep.subr.mxu0 0.0
      %1278 = vmatpush1.msra.mxu0 0.0
      %1279 = vmatprep.subr.mxu0 0.0
      %1280 = vmatpush1.msra.mxu0 0.0
      %1281 = vmatprep.subr.mxu0 0.0
      %1282 = vmatpush1.msra.mxu0 0.0
      %1283 = vmatprep.subr.mxu0 0.0
      %1284 = vmatpush1.msra.mxu0 0.0
      %1285 = vmatprep.subr.mxu0 0.0
      %1286 = vmatpush1.msra.mxu0 0.0
      %1287 = vmatprep.subr.mxu0 0.0
      %1288 = vmatpush1.msra.mxu0 0.0
      %1289 = vmatprep.subr.mxu0 0.0
      %1290 = vmatpush1.msra.mxu0 0.0
      %1291 = vmatprep.subr.mxu0 0.0
      %1292 = vmatpush1.msra.mxu0 0.0
      %1293 = vmatprep.subr.mxu0 0.0
      %1294 = vmatpush1.msra.mxu0 0.0
      %1295 = vmatprep.subr.mxu0 0.0
      %1296 = vmatpush1.msra.mxu0 0.0
      %1297 = vmatprep.mubr.f32.mxu0 0.0
      %1298 = vmatmul.mubr.f32.gmra.mrb[0].mxu0 %v1231
      %v1299 = vpop.f32.mrb[0].mxu0
      %v1300 = vadd.f32 0.0, %v1299
      %v1301 = vpop.f32.mrb[0].mxu0
      %1302 = vdwg.mxu0
      %v1303 = vadd.f32 %v434, %v1300
      %v1304 = vlaneseq
      %v1305 = vshrl.u32 %v1304, 7
      %v1306 = vsub.s32 4, %v1305
      %v1307 = vrot.slane %v441, %v1306
      %v1308 = vadd.f32 %v1303, %v1307
      %v1309 = vsel %vm442, %v1308, 0.0
      %1310 = vadd.xlane.f32.xlu0 %v1309
      %v1311 = vpop.xlane.xlu0 %1310
      %v1312 = vmul.f32 %v1311, %v446
      %v1313 = vsub.f32 %v1308, %v1312
      %v1314 = vmul.f32 %v1313, %v1313
      %v1315 = vsel %vm442, %v1314, 0.0
      %1316 = vadd.xlane.f32.xlu0 %v1315
      %v1317 = vpop.xlane.xlu0 %1316
      %v1318 = vmul.f32 %v1317, %v446
      %v1319 = vadd.f32 %v1318, 1e-05
      %v1320 = vrsqrt.pop %v1319
      %v1321 = vmul.f32 %v1313, %v1320
      %v1322 = vlaneseq
      %v1323 = vshrl.u32 %v1322, 7
      %v1324 = vsub.s32 2, %v1323
      %v1325 = vrot.slane %v441, %v1324
      %v1326 = vmul.f32 %v1321, %v1325
      %v1327 = vlaneseq
      %v1328 = vshrl.u32 %v1327, 7
      %v1329 = vsub.s32 3, %v1328
      %v1330 = vrot.slane %v441, %v1329
      %v1331 = vadd.f32 %v1326, %v1330
      %v1332 = vld [vmem:[%s5] sm:$0xff]
      %v1333 = vld [vmem:[%s5 + $0x8] sm:$0xff]
      %v1334 = vld [vmem:[%s5 + $0x10] sm:$0xff]
      %v1335 = vld [vmem:[%s5 + $0x18] sm:$0xff]
      %v1336 = vld [vmem:[%s9 + $0x2] sm:$0x1]
      %v1337 = vlaneseq
      %v1338 = vshrl.u32 %v1337, 7
      %v1339 = vsub.s32 0, %v1338
      %v1340 = vrot.slane %v1336, %v1339
      %v1342 = vsel %vm442, %v1331, 0
      %1344 = vmatprep.subr.mxu0 0.0
      %1345 = vmatpush1.msra.mxu0 %v1332
      %1346 = vmatprep.subr.mxu0 0.0
      %1347 = vmatpush1.msra.mxu0 %v1333
      %1348 = vmatprep.subr.mxu0 0.0
      %1349 = vmatpush1.msra.mxu0 %v1334
      %1350 = vmatprep.subr.mxu0 0.0
      %1351 = vmatpush1.msra.mxu0 %v1335
      %1352 = vmatprep.subr.mxu0 0.0
      %1353 = vmatpush1.msra.mxu0 0.0
      %1354 = vmatprep.subr.mxu0 0.0
      %1355 = vmatpush1.msra.mxu0 0.0
      %1356 = vmatprep.subr.mxu0 0.0
      %1357 = vmatpush1.msra.mxu0 0.0
      %1358 = vmatprep.subr.mxu0 0.0
      %1359 = vmatpush1.msra.mxu0 0.0
      %1360 = vmatprep.subr.mxu0 0.0
      %1361 = vmatpush1.msra.mxu0 0.0
      %1362 = vmatprep.subr.mxu0 0.0
      %1363 = vmatpush1.msra.mxu0 0.0
      %1364 = vmatprep.subr.mxu0 0.0
      %1365 = vmatpush1.msra.mxu0 0.0
      %1366 = vmatprep.subr.mxu0 0.0
      %1367 = vmatpush1.msra.mxu0 0.0
      %1368 = vmatprep.subr.mxu0 0.0
      %1369 = vmatpush1.msra.mxu0 0.0
      %1370 = vmatprep.subr.mxu0 0.0
      %1371 = vmatpush1.msra.mxu0 0.0
      %1372 = vmatprep.subr.mxu0 0.0
      %1373 = vmatpush1.msra.mxu0 0.0
      %1374 = vmatprep.subr.mxu0 0.0
      %1375 = vmatpush1.msra.mxu0 0.0
      %1376 = vmatprep.subr.mxu0 0.0
      %1377 = vmatpush1.msra.mxu0 0.0
      %1378 = vmatprep.subr.mxu0 0.0
      %1379 = vmatpush1.msra.mxu0 0.0
      %1380 = vmatprep.subr.mxu0 0.0
      %1381 = vmatpush1.msra.mxu0 0.0
      %1382 = vmatprep.subr.mxu0 0.0
      %1383 = vmatpush1.msra.mxu0 0.0
      %1384 = vmatprep.subr.mxu0 0.0
      %1385 = vmatpush1.msra.mxu0 0.0
      %1386 = vmatprep.subr.mxu0 0.0
      %1387 = vmatpush1.msra.mxu0 0.0
      %1388 = vmatprep.subr.mxu0 0.0
      %1389 = vmatpush1.msra.mxu0 0.0
      %1390 = vmatprep.subr.mxu0 0.0
      %1391 = vmatpush1.msra.mxu0 0.0
      %1392 = vmatprep.subr.mxu0 0.0
      %1393 = vmatpush1.msra.mxu0 0.0
      %1394 = vmatprep.subr.mxu0 0.0
      %1395 = vmatpush1.msra.mxu0 0.0
      %1396 = vmatprep.subr.mxu0 0.0
      %1397 = vmatpush1.msra.mxu0 0.0
      %1398 = vmatprep.subr.mxu0 0.0
      %1399 = vmatpush1.msra.mxu0 0.0
      %1400 = vmatprep.subr.mxu0 0.0
      %1401 = vmatpush1.msra.mxu0 0.0
      %1402 = vmatprep.subr.mxu0 0.0
      %1403 = vmatpush1.msra.mxu0 0.0
      %1404 = vmatprep.subr.mxu0 0.0
      %1405 = vmatpush1.msra.mxu0 0.0
      %1406 = vmatprep.subr.mxu0 0.0
      %1407 = vmatpush1.msra.mxu0 0.0
      %1408 = vmatprep.mubr.f32.mxu0 0.0
      %1409 = vmatmul.mubr.f32.gmra.mrb[0].mxu0 %v1342
      %v1410 = vpop.f32.mrb[0].mxu0
      %v1411 = vadd.f32 %v1340, %v1410
      %v1412 = vpop.f32.mrb[0].mxu0
      %1413 = vdwg.mxu0
      %v1414 = vmul.f32 %v1411, %v1411
      %v1415 = vmul.f32 %v1411, %v1414
      %v1416 = vmul.f32 %v1415, 0.044715
      %v1417 = vadd.f32 %v1411, %v1416
      %v1418 = vmul.f32 %v1417, 0.7978846
      %v1419 = vtanh.pop %v1418
      %v1420 = vadd.f32 %v1419, 1.0
      %v1421 = vmul.f32 %v1420, 0.5
      %v1422 = vmul.f32 %v1411, %v1421
      %v1423 = vld [vmem:[%s6] sm:$0xff]
      %v1424 = vld [vmem:[%s6 + $0x8] sm:$0xff]
      %v1425 = vld [vmem:[%s6 + $0x10] sm:$0xff]
      %v1426 = vld [vmem:[%s6 + $0x18] sm:$0xff]
      %v1427 = vld [vmem:[%s6 + $0x20] sm:$0xff]
      %v1428 = vld [vmem:[%s6 + $0x28] sm:$0xff]
      %v1429 = vld [vmem:[%s6 + $0x30] sm:$0xff]
      %v1430 = vld [vmem:[%s6 + $0x38] sm:$0xff]
      %v1432 = vsel %vm363, %v1422, 0
      %1434 = vmatprep.subr.mxu0 0.0
      %1435 = vmatpush1.msra.mxu0 %v1423
      %1436 = vmatprep.subr.mxu0 0.0
      %1437 = vmatpush1.msra.mxu0 %v1424
      %1438 = vmatprep.subr.mxu0 0.0
      %1439 = vmatpush1.msra.mxu0 %v1425
      %1440 = vmatprep.subr.mxu0 0.0
      %1441 = vmatpush1.msra.mxu0 %v1426
      %1442 = vmatprep.subr.mxu0 0.0
      %1443 = vmatpush1.msra.mxu0 %v1427
      %1444 = vmatprep.subr.mxu0 0.0
      %1445 = vmatpush1.msra.mxu0 %v1428
      %1446 = vmatprep.subr.mxu0 0.0
      %1447 = vmatpush1.msra.mxu0 %v1429
      %1448 = vmatprep.subr.mxu0 0.0
      %1449 = vmatpush1.msra.mxu0 %v1430
      %1450 = vmatprep.subr.mxu0 0.0
      %1451 = vmatpush1.msra.mxu0 0.0
      %1452 = vmatprep.subr.mxu0 0.0
      %1453 = vmatpush1.msra.mxu0 0.0
      %1454 = vmatprep.subr.mxu0 0.0
      %1455 = vmatpush1.msra.mxu0 0.0
      %1456 = vmatprep.subr.mxu0 0.0
      %1457 = vmatpush1.msra.mxu0 0.0
      %1458 = vmatprep.subr.mxu0 0.0
      %1459 = vmatpush1.msra.mxu0 0.0
      %1460 = vmatprep.subr.mxu0 0.0
      %1461 = vmatpush1.msra.mxu0 0.0
      %1462 = vmatprep.subr.mxu0 0.0
      %1463 = vmatpush1.msra.mxu0 0.0
      %1464 = vmatprep.subr.mxu0 0.0
      %1465 = vmatpush1.msra.mxu0 0.0
      %1466 = vmatprep.subr.mxu0 0.0
      %1467 = vmatpush1.msra.mxu0 0.0
      %1468 = vmatprep.subr.mxu0 0.0
      %1469 = vmatpush1.msra.mxu0 0.0
      %1470 = vmatprep.subr.mxu0 0.0
      %1471 = vmatpush1.msra.mxu0 0.0
      %1472 = vmatprep.subr.mxu0 0.0
      %1473 = vmatpush1.msra.mxu0 0.0
      %1474 = vmatprep.subr.mxu0 0.0
      %1475 = vmatpush1.msra.mxu0 0.0
      %1476 = vmatprep.subr.mxu0 0.0
      %1477 = vmatpush1.msra.mxu0 0.0
      %1478 = vmatprep.subr.mxu0 0.0
      %1479 = vmatpush1.msra.mxu0 0.0
      %1480 = vmatprep.subr.mxu0 0.0
      %1481 = vmatpush1.msra.mxu0 0.0
      %1482 = vmatprep.subr.mxu0 0.0
      %1483 = vmatpush1.msra.mxu0 0.0
      %1484 = vmatprep.subr.mxu0 0.0
      %1485 = vmatpush1.msra.mxu0 0.0
      %1486 = vmatprep.subr.mxu0 0.0
      %1487 = vmatpush1.msra.mxu0 0.0
      %1488 = vmatprep.subr.mxu0 0.0
      %1489 = vmatpush1.msra.mxu0 0.0
      %1490 = vmatprep.subr.mxu0 0.0
      %1491 = vmatpush1.msra.mxu0 0.0
      %1492 = vmatprep.subr.mxu0 0.0
      %1493 = vmatpush1.msra.mxu0 0.0
      %1494 = vmatprep.subr.mxu0 0.0
      %1495 = vmatpush1.msra.mxu0 0.0
      %1496 = vmatprep.subr.mxu0 0.0
      %1497 = vmatpush1.msra.mxu0 0.0
      %1498 = vmatprep.mubr.f32.mxu0 0.0
      %1499 = vmatmul.mubr.f32.gmra.mrb[0].mxu0 %v1432
      %v1500 = vpop.f32.mrb[0].mxu0
      %v1501 = vadd.f32 0.0, %v1500
      %v1502 = vpop.f32.mrb[0].mxu0
      %1503 = vdwg.mxu0
      %v1504 = vadd.f32 %v1308, %v1501
      %v1505 = vlaneseq
      %v1506 = vshrl.u32 %v1505, 7
      %v1507 = vsub.s32 5, %v1506
      %v1508 = vrot.slane %v441, %v1507
      %v1509 = vadd.f32 %v1504, %v1508
      %v1510 = vld [vmem:[%s8 + $0x10] sm:$0xff]
      %v1511 = vsel %vm442, %v1509, 0.0
      %1512 = vadd.xlane.f32.xlu0 %v1511
      %v1513 = vpop.xlane.xlu0 %1512
      %v1514 = vmul.f32 %v1513, %v446
      %v1515 = vsub.f32 %v1509, %v1514
      %v1516 = vmul.f32 %v1515, %v1515
      %v1517 = vsel %vm442, %v1516, 0.0
      %1518 = vadd.xlane.f32.xlu0 %v1517
      %v1519 = vpop.xlane.xlu0 %1518
      %v1520 = vmul.f32 %v1519, %v446
      %v1521 = vadd.f32 %v1520, 1e-05
      %v1522 = vrsqrt.pop %v1521
      %v1523 = vmul.f32 %v1515, %v1522
      %v1524 = vlaneseq
      %v1525 = vshrl.u32 %v1524, 7
      %v1526 = vsub.s32 0, %v1525
      %v1527 = vrot.slane %v1510, %v1526
      %v1528 = vmul.f32 %v1523, %v1527
      %v1529 = vlaneseq
      %v1530 = vshrl.u32 %v1529, 7
      %v1531 = vsub.s32 1, %v1530
      %v1532 = vrot.slane %v1510, %v1531
      %v1533 = vadd.f32 %v1528, %v1532
      %s1534 = scalar_lea.vmem %s3, 32
      %v1535 = vld [vmem:[%s1534] sm:$0xff]
      %v1536 = vld [vmem:[%s1534 + $0x8] sm:$0xff]
      %v1537 = vld [vmem:[%s1534 + $0x10] sm:$0xff]
      %v1538 = vld [vmem:[%s1534 + $0x18] sm:$0xff]
      %v1539 = vld [vmem:[%s9 + $0x1] sm:$0x1]
      %v1540 = vlaneseq
      %v1541 = vshrl.u32 %v1540, 7
      %v1542 = vsub.s32 0, %v1541
      %v1543 = vrot.slane %v1539, %v1542
      %v1545 = vsel %vm442, %v1533, 0
      %1547 = vmatprep.subr.mxu0 0.0
      %1548 = vmatpush1.msra.mxu0 %v1535
      %1549 = vmatprep.subr.mxu0 0.0
      %1550 = vmatpush1.msra.mxu0 %v1536
      %1551 = vmatprep.subr.mxu0 0.0
      %1552 = vmatpush1.msra.mxu0 %v1537
      %1553 = vmatprep.subr.mxu0 0.0
      %1554 = vmatpush1.msra.mxu0 %v1538
      %1555 = vmatprep.subr.mxu0 0.0
      %1556 = vmatpush1.msra.mxu0 0.0
      %1557 = vmatprep.subr.mxu0 0.0
      %1558 = vmatpush1.msra.mxu0 0.0
      %1559 = vmatprep.subr.mxu0 0.0
      %1560 = vmatpush1.msra.mxu0 0.0
      %1561 = vmatprep.subr.mxu0 0.0
      %1562 = vmatpush1.msra.mxu0 0.0
      %1563 = vmatprep.subr.mxu0 0.0
      %1564 = vmatpush1.msra.mxu0 0.0
      %1565 = vmatprep.subr.mxu0 0.0
      %1566 = vmatpush1.msra.mxu0 0.0
      %1567 = vmatprep.subr.mxu0 0.0
      %1568 = vmatpush1.msra.mxu0 0.0
      %1569 = vmatprep.subr.mxu0 0.0
      %1570 = vmatpush1.msra.mxu0 0.0
      %1571 = vmatprep.subr.mxu0 0.0
      %1572 = vmatpush1.msra.mxu0 0.0
      %1573 = vmatprep.subr.mxu0 0.0
      %1574 = vmatpush1.msra.mxu0 0.0
      %1575 = vmatprep.subr.mxu0 0.0
      %1576 = vmatpush1.msra.mxu0 0.0
      %1577 = vmatprep.subr.mxu0 0.0
      %1578 = vmatpush1.msra.mxu0 0.0
      %1579 = vmatprep.subr.mxu0 0.0
      %1580 = vmatpush1.msra.mxu0 0.0
      %1581 = vmatprep.subr.mxu0 0.0
      %1582 = vmatpush1.msra.mxu0 0.0
      %1583 = vmatprep.subr.mxu0 0.0
      %1584 = vmatpush1.msra.mxu0 0.0
      %1585 = vmatprep.subr.mxu0 0.0
      %1586 = vmatpush1.msra.mxu0 0.0
      %1587 = vmatprep.subr.mxu0 0.0
      %1588 = vmatpush1.msra.mxu0 0.0
      %1589 = vmatprep.subr.mxu0 0.0
      %1590 = vmatpush1.msra.mxu0 0.0
      %1591 = vmatprep.subr.mxu0 0.0
      %1592 = vmatpush1.msra.mxu0 0.0
      %1593 = vmatprep.subr.mxu0 0.0
      %1594 = vmatpush1.msra.mxu0 0.0
      %1595 = vmatprep.subr.mxu0 0.0
      %1596 = vmatpush1.msra.mxu0 0.0
      %1597 = vmatprep.subr.mxu0 0.0
      %1598 = vmatpush1.msra.mxu0 0.0
      %1599 = vmatprep.subr.mxu0 0.0
      %1600 = vmatpush1.msra.mxu0 0.0
      %1601 = vmatprep.subr.mxu0 0.0
      %1602 = vmatpush1.msra.mxu0 0.0
      %1603 = vmatprep.subr.mxu0 0.0
      %1604 = vmatpush1.msra.mxu0 0.0
      %1605 = vmatprep.subr.mxu0 0.0
      %1606 = vmatpush1.msra.mxu0 0.0
      %1607 = vmatprep.subr.mxu0 0.0
      %1608 = vmatpush1.msra.mxu0 0.0
      %1609 = vmatprep.subr.mxu0 0.0
      %1610 = vmatpush1.msra.mxu0 0.0
      %1611 = vmatprep.mubr.f32.mxu0 0.0
      %1612 = vmatmul.mubr.f32.gmra.mrb[0].mxu0 %v1545
      %v1613 = vpop.f32.mrb[0].mxu0
      %v1614 = vadd.f32 %v1543, %v1613
      %v1615 = vpop.f32.mrb[0].mxu0
      %1616 = vdwg.mxu0
      %1618 = vrot.lane.b32.xlu0 %v1614, 96
      %v1619 = vpop.permute.xlu0 %1618
      %v1620 = vsel %vm552, %v1614, 0
      %v1622 = vsel %vm552, %v1619, 0
      %1624 = vmatprep.subr.mxu0 0.0
      %1625 = vmatpush1.xpose.msra.mxu0 %v1622
      %1626 = vmatprep.subr.mxu0 0.0
      %1627 = vmatpush1.xpose.msra.mxu0 0.0
      %1628 = vmatprep.subr.mxu0 0.0
      %1629 = vmatpush1.xpose.msra.mxu0 0.0
      %1630 = vmatprep.subr.mxu0 0.0
      %1631 = vmatpush1.xpose.msra.mxu0 0.0
      %1632 = vmatprep.subr.mxu0 0.0
      %1633 = vmatpush1.xpose.msra.mxu0 0.0
      %1634 = vmatprep.subr.mxu0 0.0
      %1635 = vmatpush1.xpose.msra.mxu0 0.0
      %1636 = vmatprep.subr.mxu0 0.0
      %1637 = vmatpush1.xpose.msra.mxu0 0.0
      %1638 = vmatprep.subr.mxu0 0.0
      %1639 = vmatpush1.xpose.msra.mxu0 0.0
      %1640 = vmatprep.subr.mxu0 0.0
      %1641 = vmatpush1.xpose.msra.mxu0 0.0
      %1642 = vmatprep.subr.mxu0 0.0
      %1643 = vmatpush1.xpose.msra.mxu0 0.0
      %1644 = vmatprep.subr.mxu0 0.0
      %1645 = vmatpush1.xpose.msra.mxu0 0.0
      %1646 = vmatprep.subr.mxu0 0.0
      %1647 = vmatpush1.xpose.msra.mxu0 0.0
      %1648 = vmatprep.subr.mxu0 0.0
      %1649 = vmatpush1.xpose.msra.mxu0 0.0
      %1650 = vmatprep.subr.mxu0 0.0
      %1651 = vmatpush1.xpose.msra.mxu0 0.0
      %1652 = vmatprep.subr.mxu0 0.0
      %1653 = vmatpush1.xpose.msra.mxu0 0.0
      %1654 = vmatprep.subr.mxu0 0.0
      %1655 = vmatpush1.xpose.msra.mxu0 0.0
      %1656 = vmatprep.subr.mxu0 0.0
      %1657 = vmatpush1.xpose.msra.mxu0 0.0
      %1658 = vmatprep.subr.mxu0 0.0
      %1659 = vmatpush1.xpose.msra.mxu0 0.0
      %1660 = vmatprep.subr.mxu0 0.0
      %1661 = vmatpush1.xpose.msra.mxu0 0.0
      %1662 = vmatprep.subr.mxu0 0.0
      %1663 = vmatpush1.xpose.msra.mxu0 0.0
      %1664 = vmatprep.subr.mxu0 0.0
      %1665 = vmatpush1.xpose.msra.mxu0 0.0
      %1666 = vmatprep.subr.mxu0 0.0
      %1667 = vmatpush1.xpose.msra.mxu0 0.0
      %1668 = vmatprep.subr.mxu0 0.0
      %1669 = vmatpush1.xpose.msra.mxu0 0.0
      %1670 = vmatprep.subr.mxu0 0.0
      %1671 = vmatpush1.xpose.msra.mxu0 0.0
      %1672 = vmatprep.subr.mxu0 0.0
      %1673 = vmatpush1.xpose.msra.mxu0 0.0
      %1674 = vmatprep.subr.mxu0 0.0
      %1675 = vmatpush1.xpose.msra.mxu0 0.0
      %1676 = vmatprep.subr.mxu0 0.0
      %1677 = vmatpush1.xpose.msra.mxu0 0.0
      %1678 = vmatprep.subr.mxu0 0.0
      %1679 = vmatpush1.xpose.msra.mxu0 0.0
      %1680 = vmatprep.subr.mxu0 0.0
      %1681 = vmatpush1.xpose.msra.mxu0 0.0
      %1682 = vmatprep.subr.mxu0 0.0
      %1683 = vmatpush1.xpose.msra.mxu0 0.0
      %1684 = vmatprep.subr.mxu0 0.0
      %1685 = vmatpush1.xpose.msra.mxu0 0.0
      %1686 = vmatprep.subr.mxu0 0.0
      %1687 = vmatpush1.xpose.msra.mxu0 0.0
      %1688 = vmatprep.mubr.f32.mxu0 0.0
      %1689 = vmatmul.mubr.f32.gmra.mrb[0].mxu0 %v1620
      %v1690 = vpop.f32.mrb[0].mxu0
      %v1691 = vadd.f32 %v440, %v1690
      %v1692 = vpop.f32.mrb[0].mxu0
      %1693 = vdwg.mxu0
      %v1694 = vsel %vm552, %v1691, -inf
      %1695 = vmax.xlane.f32.xlu0 %v1694
      %v1696 = vpop.xlane.xlu0 %1695
      %v1697 = vsub.f32 %v1691, %v1696
      %v1698 = vmul.f32 %v1697, 1.442695
      %v1699 = vpow.pop %v1698
      %v1700 = vsel %vm552, %v1699, 0.0
      %1701 = vadd.xlane.f32.xlu0 %v1700
      %v1702 = vpop.xlane.xlu0 %1701
      %v1703 = vrcp.pop %v1702
      %v1704 = vmul.f32 %v1699, %v1703
      %1705 = vrot.lane.b32.xlu0 %v1614, 64
      %v1706 = vpop.permute.xlu0 %1705
      %v1709 = vsel %vm552, %v1704, 0
      %1711 = vmatprep.subr.mxu0 0.0
      %1712 = vmatpush1.msra.mxu0 %v1706
      %1713 = vmatprep.subr.mxu0 0.0
      %1714 = vmatpush1.msra.mxu0 0.0
      %1715 = vmatprep.subr.mxu0 0.0
      %1716 = vmatpush1.msra.mxu0 0.0
      %1717 = vmatprep.subr.mxu0 0.0
      %1718 = vmatpush1.msra.mxu0 0.0
      %1719 = vmatprep.subr.mxu0 0.0
      %1720 = vmatpush1.msra.mxu0 0.0
      %1721 = vmatprep.subr.mxu0 0.0
      %1722 = vmatpush1.msra.mxu0 0.0
      %1723 = vmatprep.subr.mxu0 0.0
      %1724 = vmatpush1.msra.mxu0 0.0
      %1725 = vmatprep.subr.mxu0 0.0
      %1726 = vmatpush1.msra.mxu0 0.0
      %1727 = vmatprep.subr.mxu0 0.0
      %1728 = vmatpush1.msra.mxu0 0.0
      %1729 = vmatprep.subr.mxu0 0.0
      %1730 = vmatpush1.msra.mxu0 0.0
      %1731 = vmatprep.subr.mxu0 0.0
      %1732 = vmatpush1.msra.mxu0 0.0
      %1733 = vmatprep.subr.mxu0 0.0
      %1734 = vmatpush1.msra.mxu0 0.0
      %1735 = vmatprep.subr.mxu0 0.0
      %1736 = vmatpush1.msra.mxu0 0.0
      %1737 = vmatprep.subr.mxu0 0.0
      %1738 = vmatpush1.msra.mxu0 0.0
      %1739 = vmatprep.subr.mxu0 0.0
      %1740 = vmatpush1.msra.mxu0 0.0
      %1741 = vmatprep.subr.mxu0 0.0
      %1742 = vmatpush1.msra.mxu0 0.0
      %1743 = vmatprep.subr.mxu0 0.0
      %1744 = vmatpush1.msra.mxu0 0.0
      %1745 = vmatprep.subr.mxu0 0.0
      %1746 = vmatpush1.msra.mxu0 0.0
      %1747 = vmatprep.subr.mxu0 0.0
      %1748 = vmatpush1.msra.mxu0 0.0
      %1749 = vmatprep.subr.mxu0 0.0
      %1750 = vmatpush1.msra.mxu0 0.0
      %1751 = vmatprep.subr.mxu0 0.0
      %1752 = vmatpush1.msra.mxu0 0.0
      %1753 = vmatprep.subr.mxu0 0.0
      %1754 = vmatpush1.msra.mxu0 0.0
      %1755 = vmatprep.subr.mxu0 0.0
      %1756 = vmatpush1.msra.mxu0 0.0
      %1757 = vmatprep.subr.mxu0 0.0
      %1758 = vmatpush1.msra.mxu0 0.0
      %1759 = vmatprep.subr.mxu0 0.0
      %1760 = vmatpush1.msra.mxu0 0.0
      %1761 = vmatprep.subr.mxu0 0.0
      %1762 = vmatpush1.msra.mxu0 0.0
      %1763 = vmatprep.subr.mxu0 0.0
      %1764 = vmatpush1.msra.mxu0 0.0
      %1765 = vmatprep.subr.mxu0 0.0
      %1766 = vmatpush1.msra.mxu0 0.0
      %1767 = vmatprep.subr.mxu0 0.0
      %1768 = vmatpush1.msra.mxu0 0.0
      %1769 = vmatprep.subr.mxu0 0.0
      %1770 = vmatpush1.msra.mxu0 0.0
      %1771 = vmatprep.subr.mxu0 0.0
      %1772 = vmatpush1.msra.mxu0 0.0
      %1773 = vmatprep.subr.mxu0 0.0
      %1774 = vmatpush1.msra.mxu0 0.0
      %1775 = vmatprep.mubr.f32.mxu0 0.0
      %1776 = vmatmul.mubr.f32.gmra.mrb[0].mxu0 %v1709
      %v1777 = vpop.f32.mrb[0].mxu0
      %v1778 = vadd.f32 0.0, %v1777
      %v1779 = vpop.f32.mrb[0].mxu0
      %1780 = vdwg.mxu0
      %1781 = vrot.lane.b32.xlu0 %v1614, 120
      %v1782 = vpop.permute.xlu0 %1781
      %1783 = vrot.lane.b32.xlu0 %v1614, 88
      %v1784 = vpop.permute.xlu0 %1783
      %v1785 = vsel %vm552, %v1782, 0
      %v1787 = vsel %vm552, %v1784, 0
      %1789 = vmatprep.subr.mxu0 0.0
      %1790 = vmatpush1.xpose.msra.mxu0 %v1787
      %1791 = vmatprep.subr.mxu0 0.0
      %1792 = vmatpush1.xpose.msra.mxu0 0.0
      %1793 = vmatprep.subr.mxu0 0.0
      %1794 = vmatpush1.xpose.msra.mxu0 0.0
      %1795 = vmatprep.subr.mxu0 0.0
      %1796 = vmatpush1.xpose.msra.mxu0 0.0
      %1797 = vmatprep.subr.mxu0 0.0
      %1798 = vmatpush1.xpose.msra.mxu0 0.0
      %1799 = vmatprep.subr.mxu0 0.0
      %1800 = vmatpush1.xpose.msra.mxu0 0.0
      %1801 = vmatprep.subr.mxu0 0.0
      %1802 = vmatpush1.xpose.msra.mxu0 0.0
      %1803 = vmatprep.subr.mxu0 0.0
      %1804 = vmatpush1.xpose.msra.mxu0 0.0
      %1805 = vmatprep.subr.mxu0 0.0
      %1806 = vmatpush1.xpose.msra.mxu0 0.0
      %1807 = vmatprep.subr.mxu0 0.0
      %1808 = vmatpush1.xpose.msra.mxu0 0.0
      %1809 = vmatprep.subr.mxu0 0.0
      %1810 = vmatpush1.xpose.msra.mxu0 0.0
      %1811 = vmatprep.subr.mxu0 0.0
      %1812 = vmatpush1.xpose.msra.mxu0 0.0
      %1813 = vmatprep.subr.mxu0 0.0
      %1814 = vmatpush1.xpose.msra.mxu0 0.0
      %1815 = vmatprep.subr.mxu0 0.0
      %1816 = vmatpush1.xpose.msra.mxu0 0.0
      %1817 = vmatprep.subr.mxu0 0.0
      %1818 = vmatpush1.xpose.msra.mxu0 0.0
      %1819 = vmatprep.subr.mxu0 0.0
      %1820 = vmatpush1.xpose.msra.mxu0 0.0
      %1821 = vmatprep.subr.mxu0 0.0
      %1822 = vmatpush1.xpose.msra.mxu0 0.0
      %1823 = vmatprep.subr.mxu0 0.0
      %1824 = vmatpush1.xpose.msra.mxu0 0.0
      %1825 = vmatprep.subr.mxu0 0.0
      %1826 = vmatpush1.xpose.msra.mxu0 0.0
      %1827 = vmatprep.subr.mxu0 0.0
      %1828 = vmatpush1.xpose.msra.mxu0 0.0
      %1829 = vmatprep.subr.mxu0 0.0
      %1830 = vmatpush1.xpose.msra.mxu0 0.0
      %1831 = vmatprep.subr.mxu0 0.0
      %1832 = vmatpush1.xpose.msra.mxu0 0.0
      %1833 = vmatprep.subr.mxu0 0.0
      %1834 = vmatpush1.xpose.msra.mxu0 0.0
      %1835 = vmatprep.subr.mxu0 0.0
      %1836 = vmatpush1.xpose.msra.mxu0 0.0
      %1837 = vmatprep.subr.mxu0 0.0
      %1838 = vmatpush1.xpose.msra.mxu0 0.0
      %1839 = vmatprep.subr.mxu0 0.0
      %1840 = vmatpush1.xpose.msra.mxu0 0.0
      %1841 = vmatprep.subr.mxu0 0.0
      %1842 = vmatpush1.xpose.msra.mxu0 0.0
      %1843 = vmatprep.subr.mxu0 0.0
      %1844 = vmatpush1.xpose.msra.mxu0 0.0
      %1845 = vmatprep.subr.mxu0 0.0
      %1846 = vmatpush1.xpose.msra.mxu0 0.0
      %1847 = vmatprep.subr.mxu0 0.0
      %1848 = vmatpush1.xpose.msra.mxu0 0.0
      %1849 = vmatprep.subr.mxu0 0.0
      %1850 = vmatpush1.xpose.msra.mxu0 0.0
      %1851 = vmatprep.subr.mxu0 0.0
      %1852 = vmatpush1.xpose.msra.mxu0 0.0
      %1853 = vmatprep.mubr.f32.mxu0 0.0
      %1854 = vmatmul.mubr.f32.gmra.mrb[0].mxu0 %v1785
      %v1855 = vpop.f32.mrb[0].mxu0
      %v1856 = vadd.f32 %v440, %v1855
      %v1857 = vpop.f32.mrb[0].mxu0
      %1858 = vdwg.mxu0
      %v1859 = vsel %vm552, %v1856, -inf
      %1860 = vmax.xlane.f32.xlu0 %v1859
      %v1861 = vpop.xlane.xlu0 %1860
      %v1862 = vsub.f32 %v1856, %v1861
      %v1863 = vmul.f32 %v1862, 1.442695
      %v1864 = vpow.pop %v1863
      %v1865 = vsel %vm552, %v1864, 0.0
      %1866 = vadd.xlane.f32.xlu0 %v1865
      %v1867 = vpop.xlane.xlu0 %1866
      %v1868 = vrcp.pop %v1867
      %v1869 = vmul.f32 %v1864, %v1868
      %1870 = vrot.lane.b32.xlu0 %v1614, 56
      %v1871 = vpop.permute.xlu0 %1870
      %v1874 = vsel %vm552, %v1869, 0
      %1876 = vmatprep.subr.mxu0 0.0
      %1877 = vmatpush1.msra.mxu0 %v1871
      %1878 = vmatprep.subr.mxu0 0.0
      %1879 = vmatpush1.msra.mxu0 0.0
      %1880 = vmatprep.subr.mxu0 0.0
      %1881 = vmatpush1.msra.mxu0 0.0
      %1882 = vmatprep.subr.mxu0 0.0
      %1883 = vmatpush1.msra.mxu0 0.0
      %1884 = vmatprep.subr.mxu0 0.0
      %1885 = vmatpush1.msra.mxu0 0.0
      %1886 = vmatprep.subr.mxu0 0.0
      %1887 = vmatpush1.msra.mxu0 0.0
      %1888 = vmatprep.subr.mxu0 0.0
      %1889 = vmatpush1.msra.mxu0 0.0
      %1890 = vmatprep.subr.mxu0 0.0
      %1891 = vmatpush1.msra.mxu0 0.0
      %1892 = vmatprep.subr.mxu0 0.0
      %1893 = vmatpush1.msra.mxu0 0.0
      %1894 = vmatprep.subr.mxu0 0.0
      %1895 = vmatpush1.msra.mxu0 0.0
      %1896 = vmatprep.subr.mxu0 0.0
      %1897 = vmatpush1.msra.mxu0 0.0
      %1898 = vmatprep.subr.mxu0 0.0
      %1899 = vmatpush1.msra.mxu0 0.0
      %1900 = vmatprep.subr.mxu0 0.0
      %1901 = vmatpush1.msra.mxu0 0.0
      %1902 = vmatprep.subr.mxu0 0.0
      %1903 = vmatpush1.msra.mxu0 0.0
      %1904 = vmatprep.subr.mxu0 0.0
      %1905 = vmatpush1.msra.mxu0 0.0
      %1906 = vmatprep.subr.mxu0 0.0
      %1907 = vmatpush1.msra.mxu0 0.0
      %1908 = vmatprep.subr.mxu0 0.0
      %1909 = vmatpush1.msra.mxu0 0.0
      %1910 = vmatprep.subr.mxu0 0.0
      %1911 = vmatpush1.msra.mxu0 0.0
      %1912 = vmatprep.subr.mxu0 0.0
      %1913 = vmatpush1.msra.mxu0 0.0
      %1914 = vmatprep.subr.mxu0 0.0
      %1915 = vmatpush1.msra.mxu0 0.0
      %1916 = vmatprep.subr.mxu0 0.0
      %1917 = vmatpush1.msra.mxu0 0.0
      %1918 = vmatprep.subr.mxu0 0.0
      %1919 = vmatpush1.msra.mxu0 0.0
      %1920 = vmatprep.subr.mxu0 0.0
      %1921 = vmatpush1.msra.mxu0 0.0
      %1922 = vmatprep.subr.mxu0 0.0
      %1923 = vmatpush1.msra.mxu0 0.0
      %1924 = vmatprep.subr.mxu0 0.0
      %1925 = vmatpush1.msra.mxu0 0.0
      %1926 = vmatprep.subr.mxu0 0.0
      %1927 = vmatpush1.msra.mxu0 0.0
      %1928 = vmatprep.subr.mxu0 0.0
      %1929 = vmatpush1.msra.mxu0 0.0
      %1930 = vmatprep.subr.mxu0 0.0
      %1931 = vmatpush1.msra.mxu0 0.0
      %1932 = vmatprep.subr.mxu0 0.0
      %1933 = vmatpush1.msra.mxu0 0.0
      %1934 = vmatprep.subr.mxu0 0.0
      %1935 = vmatpush1.msra.mxu0 0.0
      %1936 = vmatprep.subr.mxu0 0.0
      %1937 = vmatpush1.msra.mxu0 0.0
      %1938 = vmatprep.subr.mxu0 0.0
      %1939 = vmatpush1.msra.mxu0 0.0
      %1940 = vmatprep.mubr.f32.mxu0 0.0
      %1941 = vmatmul.mubr.f32.gmra.mrb[0].mxu0 %v1874
      %v1942 = vpop.f32.mrb[0].mxu0
      %v1943 = vadd.f32 0.0, %v1942
      %v1944 = vpop.f32.mrb[0].mxu0
      %1945 = vdwg.mxu0
      %1946 = vrot.lane.b32.xlu0 %v1614, 112
      %v1947 = vpop.permute.xlu0 %1946
      %1948 = vrot.lane.b32.xlu0 %v1614, 80
      %v1949 = vpop.permute.xlu0 %1948
      %v1950 = vsel %vm552, %v1947, 0
      %v1952 = vsel %vm552, %v1949, 0
      %1954 = vmatprep.subr.mxu0 0.0
      %1955 = vmatpush1.xpose.msra.mxu0 %v1952
      %1956 = vmatprep.subr.mxu0 0.0
      %1957 = vmatpush1.xpose.msra.mxu0 0.0
      %1958 = vmatprep.subr.mxu0 0.0
      %1959 = vmatpush1.xpose.msra.mxu0 0.0
      %1960 = vmatprep.subr.mxu0 0.0
      %1961 = vmatpush1.xpose.msra.mxu0 0.0
      %1962 = vmatprep.subr.mxu0 0.0
      %1963 = vmatpush1.xpose.msra.mxu0 0.0
      %1964 = vmatprep.subr.mxu0 0.0
      %1965 = vmatpush1.xpose.msra.mxu0 0.0
      %1966 = vmatprep.subr.mxu0 0.0
      %1967 = vmatpush1.xpose.msra.mxu0 0.0
      %1968 = vmatprep.subr.mxu0 0.0
      %1969 = vmatpush1.xpose.msra.mxu0 0.0
      %1970 = vmatprep.subr.mxu0 0.0
      %1971 = vmatpush1.xpose.msra.mxu0 0.0
      %1972 = vmatprep.subr.mxu0 0.0
      %1973 = vmatpush1.xpose.msra.mxu0 0.0
      %1974 = vmatprep.subr.mxu0 0.0
      %1975 = vmatpush1.xpose.msra.mxu0 0.0
      %1976 = vmatprep.subr.mxu0 0.0
      %1977 = vmatpush1.xpose.msra.mxu0 0.0
      %1978 = vmatprep.subr.mxu0 0.0
      %1979 = vmatpush1.xpose.msra.mxu0 0.0
      %1980 = vmatprep.subr.mxu0 0.0
      %1981 = vmatpush1.xpose.msra.mxu0 0.0
      %1982 = vmatprep.subr.mxu0 0.0
      %1983 = vmatpush1.xpose.msra.mxu0 0.0
      %1984 = vmatprep.subr.mxu0 0.0
      %1985 = vmatpush1.xpose.msra.mxu0 0.0
      %1986 = vmatprep.subr.mxu0 0.0
      %1987 = vmatpush1.xpose.msra.mxu0 0.0
      %1988 = vmatprep.subr.mxu0 0.0
      %1989 = vmatpush1.xpose.msra.mxu0 0.0
      %1990 = vmatprep.subr.mxu0 0.0
      %1991 = vmatpush1.xpose.msra.mxu0 0.0
      %1992 = vmatprep.subr.mxu0 0.0
      %1993 = vmatpush1.xpose.msra.mxu0 0.0
      %1994 = vmatprep.subr.mxu0 0.0
      %1995 = vmatpush1.xpose.msra.mxu0 0.0
      %1996 = vmatprep.subr.mxu0 0.0
      %1997 = vmatpush1.xpose.msra.mxu0 0.0
      %1998 = vmatprep.subr.mxu0 0.0
      %1999 = vmatpush1.xpose.msra.mxu0 0.0
      %2000 = vmatprep.subr.mxu0 0.0
      %2001 = vmatpush1.xpose.msra.mxu0 0.0
      %2002 = vmatprep.subr.mxu0 0.0
      %2003 = vmatpush1.xpose.msra.mxu0 0.0
      %2004 = vmatprep.subr.mxu0 0.0
      %2005 = vmatpush1.xpose.msra.mxu0 0.0
      %2006 = vmatprep.subr.mxu0 0.0
      %2007 = vmatpush1.xpose.msra.mxu0 0.0
      %2008 = vmatprep.subr.mxu0 0.0
      %2009 = vmatpush1.xpose.msra.mxu0 0.0
      %2010 = vmatprep.subr.mxu0 0.0
      %2011 = vmatpush1.xpose.msra.mxu0 0.0
      %2012 = vmatprep.subr.mxu0 0.0
      %2013 = vmatpush1.xpose.msra.mxu0 0.0
      %2014 = vmatprep.subr.mxu0 0.0
      %2015 = vmatpush1.xpose.msra.mxu0 0.0
      %2016 = vmatprep.subr.mxu0 0.0
      %2017 = vmatpush1.xpose.msra.mxu0 0.0
      %2018 = vmatprep.mubr.f32.mxu0 0.0
      %2019 = vmatmul.mubr.f32.gmra.mrb[0].mxu0 %v1950
      %v2020 = vpop.f32.mrb[0].mxu0
      %v2021 = vadd.f32 %v440, %v2020
      %v2022 = vpop.f32.mrb[0].mxu0
      %2023 = vdwg.mxu0
      %v2024 = vsel %vm552, %v2021, -inf
      %2025 = vmax.xlane.f32.xlu0 %v2024
      %v2026 = vpop.xlane.xlu0 %2025
      %v2027 = vsub.f32 %v2021, %v2026
      %v2028 = vmul.f32 %v2027, 1.442695
      %v2029 = vpow.pop %v2028
      %v2030 = vsel %vm552, %v2029, 0.0
      %2031 = vadd.xlane.f32.xlu0 %v2030
      %v2032 = vpop.xlane.xlu0 %2031
      %v2033 = vrcp.pop %v2032
      %v2034 = vmul.f32 %v2029, %v2033
      %2035 = vrot.lane.b32.xlu0 %v1614, 48
      %v2036 = vpop.permute.xlu0 %2035
      %v2039 = vsel %vm552, %v2034, 0
      %2041 = vmatprep.subr.mxu0 0.0
      %2042 = vmatpush1.msra.mxu0 %v2036
      %2043 = vmatprep.subr.mxu0 0.0
      %2044 = vmatpush1.msra.mxu0 0.0
      %2045 = vmatprep.subr.mxu0 0.0
      %2046 = vmatpush1.msra.mxu0 0.0
      %2047 = vmatprep.subr.mxu0 0.0
      %2048 = vmatpush1.msra.mxu0 0.0
      %2049 = vmatprep.subr.mxu0 0.0
      %2050 = vmatpush1.msra.mxu0 0.0
      %2051 = vmatprep.subr.mxu0 0.0
      %2052 = vmatpush1.msra.mxu0 0.0
      %2053 = vmatprep.subr.mxu0 0.0
      %2054 = vmatpush1.msra.mxu0 0.0
      %2055 = vmatprep.subr.mxu0 0.0
      %2056 = vmatpush1.msra.mxu0 0.0
      %2057 = vmatprep.subr.mxu0 0.0
      %2058 = vmatpush1.msra.mxu0 0.0
      %2059 = vmatprep.subr.mxu0 0.0
      %2060 = vmatpush1.msra.mxu0 0.0
      %2061 = vmatprep.subr.mxu0 0.0
      %2062 = vmatpush1.msra.mxu0 0.0
      %2063 = vmatprep.subr.mxu0 0.0
      %2064 = vmatpush1.msra.mxu0 0.0
      %2065 = vmatprep.subr.mxu0 0.0
      %2066 = vmatpush1.msra.mxu0 0.0
      %2067 = vmatprep.subr.mxu0 0.0
      %2068 = vmatpush1.msra.mxu0 0.0
      %2069 = vmatprep.subr.mxu0 0.0
      %2070 = vmatpush1.msra.mxu0 0.0
      %2071 = vmatprep.subr.mxu0 0.0
      %2072 = vmatpush1.msra.mxu0 0.0
      %2073 = vmatprep.subr.mxu0 0.0
      %2074 = vmatpush1.msra.mxu0 0.0
      %2075 = vmatprep.subr.mxu0 0.0
      %2076 = vmatpush1.msra.mxu0 0.0
      %2077 = vmatprep.subr.mxu0 0.0
      %2078 = vmatpush1.msra.mxu0 0.0
      %2079 = vmatprep.subr.mxu0 0.0
      %2080 = vmatpush1.msra.mxu0 0.0
      %2081 = vmatprep.subr.mxu0 0.0
      %2082 = vmatpush1.msra.mxu0 0.0
      %2083 = vmatprep.subr.mxu0 0.0
      %2084 = vmatpush1.msra.mxu0 0.0
      %2085 = vmatprep.subr.mxu0 0.0
      %2086 = vmatpush1.msra.mxu0 0.0
      %2087 = vmatprep.subr.mxu0 0.0
      %2088 = vmatpush1.msra.mxu0 0.0
      %2089 = vmatprep.subr.mxu0 0.0
      %2090 = vmatpush1.msra.mxu0 0.0
      %2091 = vmatprep.subr.mxu0 0.0
      %2092 = vmatpush1.msra.mxu0 0.0
      %2093 = vmatprep.subr.mxu0 0.0
      %2094 = vmatpush1.msra.mxu0 0.0
      %2095 = vmatprep.subr.mxu0 0.0
      %2096 = vmatpush1.msra.mxu0 0.0
      %2097 = vmatprep.subr.mxu0 0.0
      %2098 = vmatpush1.msra.mxu0 0.0
      %2099 = vmatprep.subr.mxu0 0.0
      %2100 = vmatpush1.msra.mxu0 0.0
      %2101 = vmatprep.subr.mxu0 0.0
      %2102 = vmatpush1.msra.mxu0 0.0
      %2103 = vmatprep.subr.mxu0 0.0
      %2104 = vmatpush1.msra.mxu0 0.0
      %2105 = vmatprep.mubr.f32.mxu0 0.0
      %2106 = vmatmul.mubr.f32.gmra.mrb[0].mxu0 %v2039
      %v2107 = vpop.f32.mrb[0].mxu0
      %v2108 = vadd.f32 0.0, %v2107
      %v2109 = vpop.f32.mrb[0].mxu0
      %2110 = vdwg.mxu0
      %2111 = vrot.lane.b32.xlu0 %v1614, 104
      %v2112 = vpop.permute.xlu0 %2111
      %2113 = vrot.lane.b32.xlu0 %v1614, 72
      %v2114 = vpop.permute.xlu0 %2113
      %v2115 = vsel %vm552, %v2112, 0
      %v2117 = vsel %vm552, %v2114, 0
      %2119 = vmatprep.subr.mxu0 0.0
      %2120 = vmatpush1.xpose.msra.mxu0 %v2117
      %2121 = vmatprep.subr.mxu0 0.0
      %2122 = vmatpush1.xpose.msra.mxu0 0.0
      %2123 = vmatprep.subr.mxu0 0.0
      %2124 = vmatpush1.xpose.msra.mxu0 0.0
      %2125 = vmatprep.subr.mxu0 0.0
      %2126 = vmatpush1.xpose.msra.mxu0 0.0
      %2127 = vmatprep.subr.mxu0 0.0
      %2128 = vmatpush1.xpose.msra.mxu0 0.0
      %2129 = vmatprep.subr.mxu0 0.0
      %2130 = vmatpush1.xpose.msra.mxu0 0.0
      %2131 = vmatprep.subr.mxu0 0.0
      %2132 = vmatpush1.xpose.msra.mxu0 0.0
      %2133 = vmatprep.subr.mxu0 0.0
      %2134 = vmatpush1.xpose.msra.mxu0 0.0
      %2135 = vmatprep.subr.mxu0 0.0
      %2136 = vmatpush1.xpose.msra.mxu0 0.0
      %2137 = vmatprep.subr.mxu0 0.0
      %2138 = vmatpush1.xpose.msra.mxu0 0.0
      %2139 = vmatprep.subr.mxu0 0.0
      %2140 = vmatpush1.xpose.msra.mxu0 0.0
      %2141 = vmatprep.subr.mxu0 0.0
      %2142 = vmatpush1.xpose.msra.mxu0 0.0
      %2143 = vmatprep.subr.mxu0 0.0
      %2144 = vmatpush1.xpose.msra.mxu0 0.0
      %2145 = vmatprep.subr.mxu0 0.0
      %2146 = vmatpush1.xpose.msra.mxu0 0.0
      %2147 = vmatprep.subr.mxu0 0.0
      %2148 = vmatpush1.xpose.msra.mxu0 0.0
      %2149 = vmatprep.subr.mxu0 0.0
      %2150 = vmatpush1.xpose.msra.mxu0 0.0
      %2151 = vmatprep.subr.mxu0 0.0
      %2152 = vmatpush1.xpose.msra.mxu0 0.0
      %2153 = vmatprep.subr.mxu0 0.0
      %2154 = vmatpush1.xpose.msra.mxu0 0.0
      %2155 = vmatprep.subr.mxu0 0.0
      %2156 = vmatpush1.xpose.msra.mxu0 0.0
      %2157 = vmatprep.subr.mxu0 0.0
      %2158 = vmatpush1.xpose.msra.mxu0 0.0
      %2159 = vmatprep.subr.mxu0 0.0
      %2160 = vmatpush1.xpose.msra.mxu0 0.0
      %2161 = vmatprep.subr.mxu0 0.0
      %2162 = vmatpush1.xpose.msra.mxu0 0.0
      %2163 = vmatprep.subr.mxu0 0.0
      %2164 = vmatpush1.xpose.msra.mxu0 0.0
      %2165 = vmatprep.subr.mxu0 0.0
      %2166 = vmatpush1.xpose.msra.mxu0 0.0
      %2167 = vmatprep.subr.mxu0 0.0
      %2168 = vmatpush1.xpose.msra.mxu0 0.0
      %2169 = vmatprep.subr.mxu0 0.0
      %2170 = vmatpush1.xpose.msra.mxu0 0.0
      %2171 = vmatprep.subr.mxu0 0.0
      %2172 = vmatpush1.xpose.msra.mxu0 0.0
      %2173 = vmatprep.subr.mxu0 0.0
      %2174 = vmatpush1.xpose.msra.mxu0 0.0
      %2175 = vmatprep.subr.mxu0 0.0
      %2176 = vmatpush1.xpose.msra.mxu0 0.0
      %2177 = vmatprep.subr.mxu0 0.0
      %2178 = vmatpush1.xpose.msra.mxu0 0.0
      %2179 = vmatprep.subr.mxu0 0.0
      %2180 = vmatpush1.xpose.msra.mxu0 0.0
      %2181 = vmatprep.subr.mxu0 0.0
      %2182 = vmatpush1.xpose.msra.mxu0 0.0
      %2183 = vmatprep.mubr.f32.mxu0 0.0
      %2184 = vmatmul.mubr.f32.gmra.mrb[0].mxu0 %v2115
      %v2185 = vpop.f32.mrb[0].mxu0
      %v2186 = vadd.f32 %v440, %v2185
      %v2187 = vpop.f32.mrb[0].mxu0
      %2188 = vdwg.mxu0
      %v2189 = vsel %vm552, %v2186, -inf
      %2190 = vmax.xlane.f32.xlu0 %v2189
      %v2191 = vpop.xlane.xlu0 %2190
      %v2192 = vsub.f32 %v2186, %v2191
      %v2193 = vmul.f32 %v2192, 1.442695
      %v2194 = vpow.pop %v2193
      %v2195 = vsel %vm552, %v2194, 0.0
      %2196 = vadd.xlane.f32.xlu0 %v2195
      %v2197 = vpop.xlane.xlu0 %2196
      %v2198 = vrcp.pop %v2197
      %v2199 = vmul.f32 %v2194, %v2198
      %2200 = vrot.lane.b32.xlu0 %v1614, 40
      %v2201 = vpop.permute.xlu0 %2200
      %v2204 = vsel %vm552, %v2199, 0
      %2206 = vmatprep.subr.mxu0 0.0
      %2207 = vmatpush1.msra.mxu0 %v2201
      %2208 = vmatprep.subr.mxu0 0.0
      %2209 = vmatpush1.msra.mxu0 0.0
      %2210 = vmatprep.subr.mxu0 0.0
      %2211 = vmatpush1.msra.mxu0 0.0
      %2212 = vmatprep.subr.mxu0 0.0
      %2213 = vmatpush1.msra.mxu0 0.0
      %2214 = vmatprep.subr.mxu0 0.0
      %2215 = vmatpush1.msra.mxu0 0.0
      %2216 = vmatprep.subr.mxu0 0.0
      %2217 = vmatpush1.msra.mxu0 0.0
      %2218 = vmatprep.subr.mxu0 0.0
      %2219 = vmatpush1.msra.mxu0 0.0
      %2220 = vmatprep.subr.mxu0 0.0
      %2221 = vmatpush1.msra.mxu0 0.0
      %2222 = vmatprep.subr.mxu0 0.0
      %2223 = vmatpush1.msra.mxu0 0.0
      %2224 = vmatprep.subr.mxu0 0.0
      %2225 = vmatpush1.msra.mxu0 0.0
      %2226 = vmatprep.subr.mxu0 0.0
      %2227 = vmatpush1.msra.mxu0 0.0
      %2228 = vmatprep.subr.mxu0 0.0
      %2229 = vmatpush1.msra.mxu0 0.0
      %2230 = vmatprep.subr.mxu0 0.0
      %2231 = vmatpush1.msra.mxu0 0.0
      %2232 = vmatprep.subr.mxu0 0.0
      %2233 = vmatpush1.msra.mxu0 0.0
      %2234 = vmatprep.subr.mxu0 0.0
      %2235 = vmatpush1.msra.mxu0 0.0
      %2236 = vmatprep.subr.mxu0 0.0
      %2237 = vmatpush1.msra.mxu0 0.0
      %2238 = vmatprep.subr.mxu0 0.0
      %2239 = vmatpush1.msra.mxu0 0.0
      %2240 = vmatprep.subr.mxu0 0.0
      %2241 = vmatpush1.msra.mxu0 0.0
      %2242 = vmatprep.subr.mxu0 0.0
      %2243 = vmatpush1.msra.mxu0 0.0
      %2244 = vmatprep.subr.mxu0 0.0
      %2245 = vmatpush1.msra.mxu0 0.0
      %2246 = vmatprep.subr.mxu0 0.0
      %2247 = vmatpush1.msra.mxu0 0.0
      %2248 = vmatprep.subr.mxu0 0.0
      %2249 = vmatpush1.msra.mxu0 0.0
      %2250 = vmatprep.subr.mxu0 0.0
      %2251 = vmatpush1.msra.mxu0 0.0
      %2252 = vmatprep.subr.mxu0 0.0
      %2253 = vmatpush1.msra.mxu0 0.0
      %2254 = vmatprep.subr.mxu0 0.0
      %2255 = vmatpush1.msra.mxu0 0.0
      %2256 = vmatprep.subr.mxu0 0.0
      %2257 = vmatpush1.msra.mxu0 0.0
      %2258 = vmatprep.subr.mxu0 0.0
      %2259 = vmatpush1.msra.mxu0 0.0
      %2260 = vmatprep.subr.mxu0 0.0
      %2261 = vmatpush1.msra.mxu0 0.0
      %2262 = vmatprep.subr.mxu0 0.0
      %2263 = vmatpush1.msra.mxu0 0.0
      %2264 = vmatprep.subr.mxu0 0.0
      %2265 = vmatpush1.msra.mxu0 0.0
      %2266 = vmatprep.subr.mxu0 0.0
      %2267 = vmatpush1.msra.mxu0 0.0
      %2268 = vmatprep.subr.mxu0 0.0
      %2269 = vmatpush1.msra.mxu0 0.0
      %2270 = vmatprep.mubr.f32.mxu0 0.0
      %2271 = vmatmul.mubr.f32.gmra.mrb[0].mxu0 %v2204
      %v2272 = vpop.f32.mrb[0].mxu0
      %v2273 = vadd.f32 0.0, %v2272
      %v2274 = vpop.f32.mrb[0].mxu0
      %2275 = vdwg.mxu0
      %2277 = vrot.lane.b32.xlu0 %v1943, 8
      %v2278 = vpop.permute.xlu0 %2277
      %2281 = vrot.lane.b32.xlu0 %v2108, 16
      %v2282 = vpop.permute.xlu0 %2281
      %2285 = vrot.lane.b32.xlu0 %v2273, 24
      %v2286 = vpop.permute.xlu0 %2285
      %v2288 = vsel %vm552, %v1778, %v2278
      %v2289 = vsel %vm1222, %v2288, %v2282
      %v2290 = vsel %vm1224, %v2289, %v2286
      %s2291 = scalar_lea.vmem %s4, 32
      %v2292 = vld [vmem:[%s2291] sm:$0xff]
      %v2293 = vld [vmem:[%s2291 + $0x8] sm:$0xff]
      %v2294 = vld [vmem:[%s2291 + $0x10] sm:$0xff]
      %v2295 = vld [vmem:[%s2291 + $0x18] sm:$0xff]
      %v2297 = vsel %vm442, %v2290, 0
      %2299 = vmatprep.subr.mxu0 0.0
      %2300 = vmatpush1.msra.mxu0 %v2292
      %2301 = vmatprep.subr.mxu0 0.0
      %2302 = vmatpush1.msra.mxu0 %v2293
      %2303 = vmatprep.subr.mxu0 0.0
      %2304 = vmatpush1.msra.mxu0 %v2294
      %2305 = vmatprep.subr.mxu0 0.0
      %2306 = vmatpush1.msra.mxu0 %v2295
      %2307 = vmatprep.subr.mxu0 0.0
      %2308 = vmatpush1.msra.mxu0 0.0
      %2309 = vmatprep.subr.mxu0 0.0
      %2310 = vmatpush1.msra.mxu0 0.0
      %2311 = vmatprep.subr.mxu0 0.0
      %2312 = vmatpush1.msra.mxu0 0.0
      %2313 = vmatprep.subr.mxu0 0.0
      %2314 = vmatpush1.msra.mxu0 0.0
      %2315 = vmatprep.subr.mxu0 0.0
      %2316 = vmatpush1.msra.mxu0 0.0
      %2317 = vmatprep.subr.mxu0 0.0
      %2318 = vmatpush1.msra.mxu0 0.0
      %2319 = vmatprep.subr.mxu0 0.0
      %2320 = vmatpush1.msra.mxu0 0.0
      %2321 = vmatprep.subr.mxu0 0.0
      %2322 = vmatpush1.msra.mxu0 0.0
      %2323 = vmatprep.subr.mxu0 0.0
      %2324 = vmatpush1.msra.mxu0 0.0
      %2325 = vmatprep.subr.mxu0 0.0
      %2326 = vmatpush1.msra.mxu0 0.0
      %2327 = vmatprep.subr.mxu0 0.0
      %2328 = vmatpush1.msra.mxu0 0.0
      %2329 = vmatprep.subr.mxu0 0.0
      %2330 = vmatpush1.msra.mxu0 0.0
      %2331 = vmatprep.subr.mxu0 0.0
      %2332 = vmatpush1.msra.mxu0 0.0
      %2333 = vmatprep.subr.mxu0 0.0
      %2334 = vmatpush1.msra.mxu0 0.0
      %2335 = vmatprep.subr.mxu0 0.0
      %2336 = vmatpush1.msra.mxu0 0.0
      %2337 = vmatprep.subr.mxu0 0.0
      %2338 = vmatpush1.msra.mxu0 0.0
      %2339 = vmatprep.subr.mxu0 0.0
      %2340 = vmatpush1.msra.mxu0 0.0
      %2341 = vmatprep.subr.mxu0 0.0
      %2342 = vmatpush1.msra.mxu0 0.0
      %2343 = vmatprep.subr.mxu0 0.0
      %2344 = vmatpush1.msra.mxu0 0.0
      %2345 = vmatprep.subr.mxu0 0.0
      %2346 = vmatpush1.msra.mxu0 0.0
      %2347 = vmatprep.subr.mxu0 0.0
      %2348 = vmatpush1.msra.mxu0 0.0
      %2349 = vmatprep.subr.mxu0 0.0
      %2350 = vmatpush1.msra.mxu0 0.0
      %2351 = vmatprep.subr.mxu0 0.0
      %2352 = vmatpush1.msra.mxu0 0.0
      %2353 = vmatprep.subr.mxu0 0.0
      %2354 = vmatpush1.msra.mxu0 0.0
      %2355 = vmatprep.subr.mxu0 0.0
      %2356 = vmatpush1.msra.mxu0 0.0
      %2357 = vmatprep.subr.mxu0 0.0
      %2358 = vmatpush1.msra.mxu0 0.0
      %2359 = vmatprep.subr.mxu0 0.0
      %2360 = vmatpush1.msra.mxu0 0.0
      %2361 = vmatprep.subr.mxu0 0.0
      %2362 = vmatpush1.msra.mxu0 0.0
      %2363 = vmatprep.mubr.f32.mxu0 0.0
      %2364 = vmatmul.mubr.f32.gmra.mrb[0].mxu0 %v2297
      %v2365 = vpop.f32.mrb[0].mxu0
      %v2366 = vadd.f32 0.0, %v2365
      %v2367 = vpop.f32.mrb[0].mxu0
      %2368 = vdwg.mxu0
      %v2369 = vadd.f32 %v1509, %v2366
      %v2370 = vlaneseq
      %v2371 = vshrl.u32 %v2370, 7
      %v2372 = vsub.s32 4, %v2371
      %v2373 = vrot.slane %v1510, %v2372
      %v2374 = vadd.f32 %v2369, %v2373
      %v2375 = vsel %vm442, %v2374, 0.0
      %2376 = vadd.xlane.f32.xlu0 %v2375
      %v2377 = vpop.xlane.xlu0 %2376
      %v2378 = vmul.f32 %v2377, %v446
      %v2379 = vsub.f32 %v2374, %v2378
      %v2380 = vmul.f32 %v2379, %v2379
      %v2381 = vsel %vm442, %v2380, 0.0
      %2382 = vadd.xlane.f32.xlu0 %v2381
      %v2383 = vpop.xlane.xlu0 %2382
      %v2384 = vmul.f32 %v2383, %v446
      %v2385 = vadd.f32 %v2384, 1e-05
      %v2386 = vrsqrt.pop %v2385
      %v2387 = vmul.f32 %v2379, %v2386
      %v2388 = vlaneseq
      %v2389 = vshrl.u32 %v2388, 7
      %v2390 = vsub.s32 2, %v2389
      %v2391 = vrot.slane %v1510, %v2390
      %v2392 = vmul.f32 %v2387, %v2391
      %v2393 = vlaneseq
      %v2394 = vshrl.u32 %v2393, 7
      %v2395 = vsub.s32 3, %v2394
      %v2396 = vrot.slane %v1510, %v2395
      %v2397 = vadd.f32 %v2392, %v2396
      %s2398 = scalar_lea.vmem %s5, 32
      %v2399 = vld [vmem:[%s2398] sm:$0xff]
      %v2400 = vld [vmem:[%s2398 + $0x8] sm:$0xff]
      %v2401 = vld [vmem:[%s2398 + $0x10] sm:$0xff]
      %v2402 = vld [vmem:[%s2398 + $0x18] sm:$0xff]
      %v2403 = vld [vmem:[%s9 + $0x3] sm:$0x1]
      %v2404 = vlaneseq
      %v2405 = vshrl.u32 %v2404, 7
      %v2406 = vsub.s32 0, %v2405
      %v2407 = vrot.slane %v2403, %v2406
      %v2409 = vsel %vm442, %v2397, 0
      %2411 = vmatprep.subr.mxu0 0.0
      %2412 = vmatpush1.msra.mxu0 %v2399
      %2413 = vmatprep.subr.mxu0 0.0
      %2414 = vmatpush1.msra.mxu0 %v2400
      %2415 = vmatprep.subr.mxu0 0.0
      %2416 = vmatpush1.msra.mxu0 %v2401
      %2417 = vmatprep.subr.mxu0 0.0
      %2418 = vmatpush1.msra.mxu0 %v2402
      %2419 = vmatprep.subr.mxu0 0.0
      %2420 = vmatpush1.msra.mxu0 0.0
      %2421 = vmatprep.subr.mxu0 0.0
      %2422 = vmatpush1.msra.mxu0 0.0
      %2423 = vmatprep.subr.mxu0 0.0
      %2424 = vmatpush1.msra.mxu0 0.0
      %2425 = vmatprep.subr.mxu0 0.0
      %2426 = vmatpush1.msra.mxu0 0.0
      %2427 = vmatprep.subr.mxu0 0.0
      %2428 = vmatpush1.msra.mxu0 0.0
      %2429 = vmatprep.subr.mxu0 0.0
      %2430 = vmatpush1.msra.mxu0 0.0
      %2431 = vmatprep.subr.mxu0 0.0
      %2432 = vmatpush1.msra.mxu0 0.0
      %2433 = vmatprep.subr.mxu0 0.0
      %2434 = vmatpush1.msra.mxu0 0.0
      %2435 = vmatprep.subr.mxu0 0.0
      %2436 = vmatpush1.msra.mxu0 0.0
      %2437 = vmatprep.subr.mxu0 0.0
      %2438 = vmatpush1.msra.mxu0 0.0
      %2439 = vmatprep.subr.mxu0 0.0
      %2440 = vmatpush1.msra.mxu0 0.0
      %2441 = vmatprep.subr.mxu0 0.0
      %2442 = vmatpush1.msra.mxu0 0.0
      %2443 = vmatprep.subr.mxu0 0.0
      %2444 = vmatpush1.msra.mxu0 0.0
      %2445 = vmatprep.subr.mxu0 0.0
      %2446 = vmatpush1.msra.mxu0 0.0
      %2447 = vmatprep.subr.mxu0 0.0
      %2448 = vmatpush1.msra.mxu0 0.0
      %2449 = vmatprep.subr.mxu0 0.0
      %2450 = vmatpush1.msra.mxu0 0.0
      %2451 = vmatprep.subr.mxu0 0.0
      %2452 = vmatpush1.msra.mxu0 0.0
      %2453 = vmatprep.subr.mxu0 0.0
      %2454 = vmatpush1.msra.mxu0 0.0
      %2455 = vmatprep.subr.mxu0 0.0
      %2456 = vmatpush1.msra.mxu0 0.0
      %2457 = vmatprep.subr.mxu0 0.0
      %2458 = vmatpush1.msra.mxu0 0.0
      %2459 = vmatprep.subr.mxu0 0.0
      %2460 = vmatpush1.msra.mxu0 0.0
      %2461 = vmatprep.subr.mxu0 0.0
      %2462 = vmatpush1.msra.mxu0 0.0
      %2463 = vmatprep.subr.mxu0 0.0
      %2464 = vmatpush1.msra.mxu0 0.0
      %2465 = vmatprep.subr.mxu0 0.0
      %2466 = vmatpush1.msra.mxu0 0.0
      %2467 = vmatprep.subr.mxu0 0.0
      %2468 = vmatpush1.msra.mxu0 0.0
      %2469 = vmatprep.subr.mxu0 0.0
      %2470 = vmatpush1.msra.mxu0 0.0
      %2471 = vmatprep.subr.mxu0 0.0
      %2472 = vmatpush1.msra.mxu0 0.0
      %2473 = vmatprep.subr.mxu0 0.0
      %2474 = vmatpush1.msra.mxu0 0.0
      %2475 = vmatprep.mubr.f32.mxu0 0.0
      %2476 = vmatmul.mubr.f32.gmra.mrb[0].mxu0 %v2409
      %v2477 = vpop.f32.mrb[0].mxu0
      %v2478 = vadd.f32 %v2407, %v2477
      %v2479 = vpop.f32.mrb[0].mxu0
      %2480 = vdwg.mxu0
      %v2481 = vmul.f32 %v2478, %v2478
      %v2482 = vmul.f32 %v2478, %v2481
      %v2483 = vmul.f32 %v2482, 0.044715
      %v2484 = vadd.f32 %v2478, %v2483
      %v2485 = vmul.f32 %v2484, 0.7978846
      %v2486 = vtanh.pop %v2485
      %v2487 = vadd.f32 %v2486, 1.0
      %v2488 = vmul.f32 %v2487, 0.5
      %v2489 = vmul.f32 %v2478, %v2488
      %s2490 = scalar_lea.vmem %s6, 64
      %v2491 = vld [vmem:[%s2490] sm:$0xff]
      %v2492 = vld [vmem:[%s2490 + $0x8] sm:$0xff]
      %v2493 = vld [vmem:[%s2490 + $0x10] sm:$0xff]
      %v2494 = vld [vmem:[%s2490 + $0x18] sm:$0xff]
      %v2495 = vld [vmem:[%s2490 + $0x20] sm:$0xff]
      %v2496 = vld [vmem:[%s2490 + $0x28] sm:$0xff]
      %v2497 = vld [vmem:[%s2490 + $0x30] sm:$0xff]
      %v2498 = vld [vmem:[%s2490 + $0x38] sm:$0xff]
      %v2500 = vsel %vm363, %v2489, 0
      %2502 = vmatprep.subr.mxu0 0.0
      %2503 = vmatpush1.msra.mxu0 %v2491
      %2504 = vmatprep.subr.mxu0 0.0
      %2505 = vmatpush1.msra.mxu0 %v2492
      %2506 = vmatprep.subr.mxu0 0.0
      %2507 = vmatpush1.msra.mxu0 %v2493
      %2508 = vmatprep.subr.mxu0 0.0
      %2509 = vmatpush1.msra.mxu0 %v2494
      %2510 = vmatprep.subr.mxu0 0.0
      %2511 = vmatpush1.msra.mxu0 %v2495
      %2512 = vmatprep.subr.mxu0 0.0
      %2513 = vmatpush1.msra.mxu0 %v2496
      %2514 = vmatprep.subr.mxu0 0.0
      %2515 = vmatpush1.msra.mxu0 %v2497
      %2516 = vmatprep.subr.mxu0 0.0
      %2517 = vmatpush1.msra.mxu0 %v2498
      %2518 = vmatprep.subr.mxu0 0.0
      %2519 = vmatpush1.msra.mxu0 0.0
      %2520 = vmatprep.subr.mxu0 0.0
      %2521 = vmatpush1.msra.mxu0 0.0
      %2522 = vmatprep.subr.mxu0 0.0
      %2523 = vmatpush1.msra.mxu0 0.0
      %2524 = vmatprep.subr.mxu0 0.0
      %2525 = vmatpush1.msra.mxu0 0.0
      %2526 = vmatprep.subr.mxu0 0.0
      %2527 = vmatpush1.msra.mxu0 0.0
      %2528 = vmatprep.subr.mxu0 0.0
      %2529 = vmatpush1.msra.mxu0 0.0
      %2530 = vmatprep.subr.mxu0 0.0
      %2531 = vmatpush1.msra.mxu0 0.0
      %2532 = vmatprep.subr.mxu0 0.0
      %2533 = vmatpush1.msra.mxu0 0.0
      %2534 = vmatprep.subr.mxu0 0.0
      %2535 = vmatpush1.msra.mxu0 0.0
      %2536 = vmatprep.subr.mxu0 0.0
      %2537 = vmatpush1.msra.mxu0 0.0
      %2538 = vmatprep.subr.mxu0 0.0
      %2539 = vmatpush1.msra.mxu0 0.0
      %2540 = vmatprep.subr.mxu0 0.0
      %2541 = vmatpush1.msra.mxu0 0.0
      %2542 = vmatprep.subr.mxu0 0.0
      %2543 = vmatpush1.msra.mxu0 0.0
      %2544 = vmatprep.subr.mxu0 0.0
      %2545 = vmatpush1.msra.mxu0 0.0
      %2546 = vmatprep.subr.mxu0 0.0
      %2547 = vmatpush1.msra.mxu0 0.0
      %2548 = vmatprep.subr.mxu0 0.0
      %2549 = vmatpush1.msra.mxu0 0.0
      %2550 = vmatprep.subr.mxu0 0.0
      %2551 = vmatpush1.msra.mxu0 0.0
      %2552 = vmatprep.subr.mxu0 0.0
      %2553 = vmatpush1.msra.mxu0 0.0
      %2554 = vmatprep.subr.mxu0 0.0
      %2555 = vmatpush1.msra.mxu0 0.0
      %2556 = vmatprep.subr.mxu0 0.0
      %2557 = vmatpush1.msra.mxu0 0.0
      %2558 = vmatprep.subr.mxu0 0.0
      %2559 = vmatpush1.msra.mxu0 0.0
      %2560 = vmatprep.subr.mxu0 0.0
      %2561 = vmatpush1.msra.mxu0 0.0
      %2562 = vmatprep.subr.mxu0 0.0
      %2563 = vmatpush1.msra.mxu0 0.0
      %2564 = vmatprep.subr.mxu0 0.0
      %2565 = vmatpush1.msra.mxu0 0.0
      %2566 = vmatprep.mubr.f32.mxu0 0.0
      %2567 = vmatmul.mubr.f32.gmra.mrb[0].mxu0 %v2500
      %v2568 = vpop.f32.mrb[0].mxu0
      %v2569 = vadd.f32 0.0, %v2568
      %v2570 = vpop.f32.mrb[0].mxu0
      %2571 = vdwg.mxu0
      %v2572 = vadd.f32 %v2374, %v2569
      %v2573 = vlaneseq
      %v2574 = vshrl.u32 %v2573, 7
      %v2575 = vsub.s32 5, %v2574
      %v2576 = vrot.slane %v1510, %v2575
      %v2577 = vadd.f32 %v2572, %v2576
      %v2578 = vld [vmem:[%s8 + $0x18] sm:$0xff]
      %vm2579 = vcmask 253952
      %v2580 = vsel %vm2579, %v2577, 0.0
      %2581 = vadd.xlane.f32.xlu0 %v2580
      %v2582 = vpop.xlane.xlu0 %2581
      %v2583 = vmul.f32 %v2582, %v446
      %v2584 = vsub.f32 %v2577, %v2583
      %v2585 = vmul.f32 %v2584, %v2584
      %v2586 = vsel %vm2579, %v2585, 0.0
      %2587 = vadd.xlane.f32.xlu0 %v2586
      %v2588 = vpop.xlane.xlu0 %2587
      %v2589 = vmul.f32 %v2588, %v446
      %v2590 = vadd.f32 %v2589, 1e-05
      %v2591 = vrsqrt.pop %v2590
      %v2592 = vmul.f32 %v2584, %v2591
      %v2593 = vmul.f32 %v2592, %v2578
      %v2595 = vrot.slane %v2578, 1
      %v2597 = vadd.f32 %v2593, %v2595
      %v2598 = vld [vmem:[%s7] sm:$0xff]
      %v2599 = vld [vmem:[%s7 + $0x8] sm:$0xff]
      %v2600 = vld [vmem:[%s7 + $0x10] sm:$0xff]
      %v2601 = vld [vmem:[%s7 + $0x18] sm:$0xff]
      %v2602 = vld [vmem:[%s9 + $0x4] sm:$0x1]
      %v2604 = vsel %vm442, %v2597, 0
      %2606 = vmatprep.subr.mxu0 0.0
      %2607 = vmatpush1.msra.mxu0 %v2598
      %2608 = vmatprep.subr.mxu0 0.0
      %2609 = vmatpush1.msra.mxu0 %v2599
      %2610 = vmatprep.subr.mxu0 0.0
      %2611 = vmatpush1.msra.mxu0 %v2600
      %2612 = vmatprep.subr.mxu0 0.0
      %2613 = vmatpush1.msra.mxu0 %v2601
      %2614 = vmatprep.subr.mxu0 0.0
      %2615 = vmatpush1.msra.mxu0 0.0
      %2616 = vmatprep.subr.mxu0 0.0
      %2617 = vmatpush1.msra.mxu0 0.0
      %2618 = vmatprep.subr.mxu0 0.0
      %2619 = vmatpush1.msra.mxu0 0.0
      %2620 = vmatprep.subr.mxu0 0.0
      %2621 = vmatpush1.msra.mxu0 0.0
      %2622 = vmatprep.subr.mxu0 0.0
      %2623 = vmatpush1.msra.mxu0 0.0
      %2624 = vmatprep.subr.mxu0 0.0
      %2625 = vmatpush1.msra.mxu0 0.0
      %2626 = vmatprep.subr.mxu0 0.0
      %2627 = vmatpush1.msra.mxu0 0.0
      %2628 = vmatprep.subr.mxu0 0.0
      %2629 = vmatpush1.msra.mxu0 0.0
      %2630 = vmatprep.subr.mxu0 0.0
      %2631 = vmatpush1.msra.mxu0 0.0
      %2632 = vmatprep.subr.mxu0 0.0
      %2633 = vmatpush1.msra.mxu0 0.0
      %2634 = vmatprep.subr.mxu0 0.0
      %2635 = vmatpush1.msra.mxu0 0.0
      %2636 = vmatprep.subr.mxu0 0.0
      %2637 = vmatpush1.msra.mxu0 0.0
      %2638 = vmatprep.subr.mxu0 0.0
      %2639 = vmatpush1.msra.mxu0 0.0
      %2640 = vmatprep.subr.mxu0 0.0
      %2641 = vmatpush1.msra.mxu0 0.0
      %2642 = vmatprep.subr.mxu0 0.0
      %2643 = vmatpush1.msra.mxu0 0.0
      %2644 = vmatprep.subr.mxu0 0.0
      %2645 = vmatpush1.msra.mxu0 0.0
      %2646 = vmatprep.subr.mxu0 0.0
      %2647 = vmatpush1.msra.mxu0 0.0
      %2648 = vmatprep.subr.mxu0 0.0
      %2649 = vmatpush1.msra.mxu0 0.0
      %2650 = vmatprep.subr.mxu0 0.0
      %2651 = vmatpush1.msra.mxu0 0.0
      %2652 = vmatprep.subr.mxu0 0.0
      %2653 = vmatpush1.msra.mxu0 0.0
      %2654 = vmatprep.subr.mxu0 0.0
      %2655 = vmatpush1.msra.mxu0 0.0
      %2656 = vmatprep.subr.mxu0 0.0
      %2657 = vmatpush1.msra.mxu0 0.0
      %2658 = vmatprep.subr.mxu0 0.0
      %2659 = vmatpush1.msra.mxu0 0.0
      %2660 = vmatprep.subr.mxu0 0.0
      %2661 = vmatpush1.msra.mxu0 0.0
      %2662 = vmatprep.subr.mxu0 0.0
      %2663 = vmatpush1.msra.mxu0 0.0
      %2664 = vmatprep.subr.mxu0 0.0
      %2665 = vmatpush1.msra.mxu0 0.0
      %2666 = vmatprep.subr.mxu0 0.0
      %2667 = vmatpush1.msra.mxu0 0.0
      %2668 = vmatprep.subr.mxu0 0.0
      %2669 = vmatpush1.msra.mxu0 0.0
      %2670 = vmatprep.mubr.f32.mxu0 0.0
      %2671 = vmatmul.mubr.f32.gmra.mrb[0].mxu0 %v2604
      %v2672 = vpop.f32.mrb[0].mxu0
      %v2673 = vadd.f32 %v2602, %v2672
      %v2674 = vpop.f32.mrb[0].mxu0
      %2675 = vdwg.mxu0
      %vm2676 = vcmask 73728
      %v2677 = vsel %vm2676, %v2673, -inf
      %2678 = vmax.xlane.f32.xlu0 %v2677
      %v2679 = vpop.xlane.xlu0 %2678
      %v2680 = vsub.f32 %v2673, %v2679
      %v2681 = vmul.f32 %v2680, 1.442695
      %v2682 = vpow.pop %v2681
      %v2683 = vsel %vm2676, %v2682, 0.0
      %2684 = vadd.xlane.f32.xlu0 %v2683
      %v2685 = vpop.xlane.xlu0 %2684
      %v2686 = vlog2.pop %v2685
      %v2687 = vmul.f32 %v2686, 0.6931472
      %s2688 = sld [smem:[#allocation3 + %s27]]
      %v2689 = vstv %s2688
      %vm2690 = vcmp.eq.s32.totalorder %v438, %v2689
      %v2691 = vsel %vm2690, %v2680, 0.0
      %v2692 = vsel %vm2676, %v2691, 0.0
      %2693 = vadd.xlane.f32.xlu0 %v2692
      %v2694 = vpop.xlane.xlu0 %2693
      %v2695 = vsub.f32 %v2687, %v2694
      %vm2696 = vcmask 80896
      %v2697 = vsel %vm2696, %v2673, %v2695
      %vm2698 = vcmask 81920
      %2699 = vst.msk [vmem:[%s335] sm:$0x1] %vm2698, %v2697
      %p2700 = scmp.lt.s32.totalorder %s27, 1
      %s2701 = scalar_select %p2700, %s27, 1
      %s2702 = scalar_lea.vmem %s10, %s2701
      // Predicated region
      $region57: #{vit_forward_loss.1} parent=55 // pred_check
        %p2703 = pneg %p239
      $region58: #{vit_forward_loss.1} parent=55 // pred_check_branch
        %2705 = sbr.rel (%p2703) target = $region60
      $region59: #{vit_forward_loss.1} parent=55 // pred_region
        _
      $region60: #{vit_forward_loss.1} parent=55 // pred_fallthru
        _
    $region56: #{vit_forward_loss.1} parent=5 // pred_fallthru
      _
    %p2706 = scmp.le.s32.totalorder 2, %s22
    // Predicated region
    $region61: #{vit_forward_loss.1} parent=5 // pred_check
      %p2707 = pneg %p2706
    $region62: #{vit_forward_loss.1} parent=5 // pred_check_branch
      %2709 = sbr.rel (%p2707) target = $region64
    $region63: #{vit_forward_loss.1} parent=5 // pred_region
      %s2710 = ssub.s32 %s22, 2
      // Predicated region
      $region65: #{vit_forward_loss.1} parent=63 // pred_check
        %p2711 = pneg %p245
      $region66: #{vit_forward_loss.1} parent=63 // pred_check_branch
        %2713 = sbr.rel (%p2711) target = $region68
      $region67: #{vit_forward_loss.1} parent=63 // pred_region
        %p2714 = scmp.lt.s32.totalorder %s28, 1
        %s2715 = scalar_select %p2714, %s28, 1
        %s2716 = scalar_lea.vmem %s10, %s2715
      $region68: #{vit_forward_loss.1} parent=63 // pred_fallthru
        _
    $region64: #{vit_forward_loss.1} parent=5 // pred_fallthru
      _
  $region6: #{vit_forward_loss.1} parent=0 // loop_footer
    %s26 = sadd.s32 1, %s22
  $region7: #{vit_forward_loss.1} parent=0 // loop_footer_branch
    %21 = sbr.rel target = $region3
  $region8: #{vit_forward_loss.1} parent=0 // loop_exit
    _

</llo_original>
